<compile_context>
chip_gen: v7x
topology: tpu7x:2x2x1
jax: 0.10.0
libtpu: 0.0.40
codegen_flags: <defaults>
</compile_context>

<pallas_src>
import math
import numpy as np
import jax
import jax.numpy as jnp
from jax.experimental import pallas as pl
from jax.experimental.pallas import tpu as pltpu

EPS = 1e-6


def _rms(x, w):
    # x * rsqrt(mean(x^2, -1) + eps) * w   (all float32)
    return x * jax.lax.rsqrt(jnp.mean(x * x, axis=-1, keepdims=True) + EPS) * w


# ------------------------- fused transformer-block kernel --------------------

def block_kernel(x_ref, anw_ref, wqkv_ref, wo_ref, qnw_ref, knw_ref,
                 cos_ref, sin_ref, fnw_ref, w13_ref, w2_ref, o_ref):
    """One batch element per grid step.

    out = h + w2(silu(w1(rms(h))) * w3(rms(h))),
      h = x + wo(SDPA(rope(norm(qkv(rms(x))))))

    q/k are produced and rotated in a permuted (rotate-half) layout; attention
    scores are invariant to that permutation, v / wo use the original layout.
    All MXU operands are bf16; accumulation and all normalization / softmax
    math are f32.
    """
    x = x_ref[0]                                                     # (S, D) f32
    S = x.shape[0]
    HD = wo_ref.shape[0]
    F = w2_ref.shape[0]

    # ---------------- attention ----------------
    xn = _rms(x, anw_ref[...])                                       # attention_norm (f32)

    # fused QKV projection: (S, 3*HD), bf16 operands, f32 accumulate
    qkv = jnp.dot(xn.astype(jnp.bfloat16), wqkv_ref[...],
                  preferred_element_type=jnp.float32)
    q = _rms(qkv[:, :HD], qnw_ref[...])                              # q_norm (permuted layout)
    k = _rms(qkv[:, HD:2 * HD], knw_ref[...])                        # k_norm (permuted layout)
    v = qkv[:, 2 * HD:].astype(jnp.bfloat16)                         # original layout

    # rotate-half RoPE (equivalent to interleaved RoPE in the permuted layout):
    # lane roll goes to the XLU slot; cos/sin tables precomputed at pack time.
    cos = cos_ref[...]
    sin = sin_ref[...]
    q = q * cos + pltpu.roll(q, shift=HD // 2, axis=1) * sin
    k = k * cos + pltpu.roll(k, shift=HD // 2, axis=1) * sin

    scale = 1.0 / math.sqrt(HD)
    scores = jax.lax.dot_general(q.astype(jnp.bfloat16), k.astype(jnp.bfloat16),
                                 (((1,), (1,)), ((), ())),
                                 preferred_element_type=jnp.float32) * scale

    # in-kernel causal mask (two iota compares; no HBM-resident (S,S) input)
    row = jax.lax.broadcasted_iota(jnp.int32, (S, S), 0)
    col = jax.lax.broadcasted_iota(jnp.int32, (S, S), 1)
    scores = jnp.where(col <= row, scores, -1e30)

    # softmax in f32; EUP reciprocal instead of a VALU divide
    m = jnp.max(scores, axis=-1, keepdims=True)
    p = jnp.exp(scores - m)
    p = p * pl.reciprocal(jnp.sum(p, axis=-1, keepdims=True), approx=True)

    out = jnp.dot(p.astype(jnp.bfloat16), v,
                  preferred_element_type=jnp.float32)                # (S, HD)
    h = x + jnp.dot(out.astype(jnp.bfloat16), wo_ref[...],
                    preferred_element_type=jnp.float32)              # (S, D)

    # ---------------- SwiGLU FFN on the VMEM-resident h (no HBM round-trip) ---
    hn = _rms(h, fnw_ref[...])
    g2 = jnp.dot(hn.astype(jnp.bfloat16), w13_ref[...],
                 preferred_element_type=jnp.float32)                 # (S, 2F)
    a = g2[:, :F]
    b = g2[:, F:]
    g = a * jax.nn.sigmoid(a) * b                                    # SiLU gate (f32)
    o_ref[0] = h + jnp.dot(g.astype(jnp.bfloat16), w2_ref[...],
                           preferred_element_type=jnp.float32)


# --------------------------- one-time weight packing --------------------------

def prepare_block(params, freqs_cos, freqs_sin):
    """Model-load-time packing (hoisted out of the per-call jitted path).

    * wq/wk rows and q_norm/k_norm weights are permuted interleaved->split-half
      so RoPE becomes a rotate-half lane roll in the kernel (scores invariant).
    * qkv and w1/w3 are fused and all matmul weights pre-transposed + cast bf16.
    * rotate-half cos / signed-sin tables precomputed in f32.
    """
    D = params["attention_norm"].shape[0]
    HD = params["wq"].shape[0]                    # n_heads * head_dim (n_heads == 1)

    wq_p = jnp.concatenate([params["wq"][0::2], params["wq"][1::2]], axis=0)
    wk_p = jnp.concatenate([params["wk"][0::2], params["wk"][1::2]], axis=0)

    packed = {
        "anw": params["attention_norm"].reshape(1, D).astype(jnp.float32),
        "fnw": params["ffn_norm"].reshape(1, D).astype(jnp.float32),
        "qnw": jnp.concatenate([params["q_norm"][0::2],
                                params["q_norm"][1::2]]).reshape(1, HD).astype(jnp.float32),
        "knw": jnp.concatenate([params["k_norm"][0::2],
                                params["k_norm"][1::2]]).reshape(1, HD).astype(jnp.float32),
        "wqkv": jnp.concatenate([wq_p, wk_p, params["wv"]], axis=0).T.astype(jnp.bfloat16),
        "wo": params["wo"].T.astype(jnp.bfloat16),
        "w13": jnp.concatenate([params["w1"], params["w3"]], axis=0).T.astype(jnp.bfloat16),
        "w2": params["w2"].T.astype(jnp.bfloat16),
        "cos": jnp.concatenate([freqs_cos, freqs_cos], axis=-1).astype(jnp.float32),
        "sin": jnp.concatenate([-freqs_sin, freqs_sin], axis=-1).astype(jnp.float32),
    }
    return jax.tree_util.tree_map(jax.block_until_ready, packed)


# ------------------------------- jitted forward --------------------------------

@jax.jit
def transformer_block(x, packed):
    B, S, D = x.shape

    def rep(a):  # whole 2-D array, same block every grid step (not re-fetched)
        return pl.BlockSpec(a.shape, lambda b: (0,) * a.ndim)

    out = pl.pallas_call(
        block_kernel,
        out_shape=jax.ShapeDtypeStruct((B, S, D), jnp.float32),
        grid=(B,),
        in_specs=[
            pl.BlockSpec((1, S, D), lambda b: (b, 0, 0)),   # x
            rep(packed["anw"]),                             # attention_norm weight
            rep(packed["wqkv"]),                            # fused qkv weight (bf16, transposed)
            rep(packed["wo"]),                              # wo (bf16, transposed)
            rep(packed["qnw"]),                             # q_norm weight (permuted)
            rep(packed["knw"]),                             # k_norm weight (permuted)
            rep(packed["cos"]),                             # rotate-half cos table
            rep(packed["sin"]),                             # signed sin table
            rep(packed["fnw"]),                             # ffn_norm weight
            rep(packed["w13"]),                             # fused w1/w3 (bf16, transposed)
            rep(packed["w2"]),                              # w2 (bf16, transposed)
        ],
        out_specs=pl.BlockSpec((1, S, D), lambda b: (b, 0, 0)),
        compiler_params=pltpu.CompilerParams(
            dimension_semantics=("parallel",),
            vmem_limit_bytes=64 * 1024 * 1024),
    )(x, packed["anw"], packed["wqkv"], packed["wo"], packed["qnw"],
      packed["knw"], packed["cos"], packed["sin"], packed["fnw"],
      packed["w13"], packed["w2"])
    return out


# ----------------------------- pure-JAX f32 reference --------------------------

def reference_block(x, p, cos, sin):
    def rms(v, w):
        return v * jax.lax.rsqrt(jnp.mean(v * v, -1, keepdims=True) + EPS) * w

    B, S, D = x.shape
    xn = rms(x, p["attention_norm"])
    q = xn @ p["wq"].T
    k = xn @ p["wk"].T
    v = xn @ p["wv"].T
    q = rms(q, p["q_norm"])
    k = rms(k, p["k_norm"])
    HD = q.shape[-1]
    qr, qi = q[..., 0::2], q[..., 1::2]
    kr, ki = k[..., 0::2], k[..., 1::2]
    c, s = cos[None], sin[None]
    q = jnp.stack([qr * c - qi * s, qr * s + qi * c], axis=-1).reshape(B, S, HD)
    k = jnp.stack([kr * c - ki * s, kr * s + ki * c], axis=-1).reshape(B, S, HD)
    scores = jnp.einsum("bqd,bkd->bqk", q, k) / math.sqrt(HD)
    mask = jnp.tril(jnp.ones((S, S), bool))
    scores = jnp.where(mask[None], scores, -jnp.inf)
    pattn = jax.nn.softmax(scores, axis=-1)
    out = jnp.einsum("bqk,bkd->bqd", pattn, v)
    h = x + out @ p["wo"].T
    hn = rms(h, p["ffn_norm"])
    ffn = (jax.nn.silu(hn @ p["w1"].T) * (hn @ p["w3"].T)) @ p["w2"].T
    return h + ffn


# ---------------------------------- main --------------------------------------

if __name__ == "__main__":
    # Small, lane-dense shapes consistent with the module: head_dim is hardcoded
    # to 128; n_heads = n_kv_heads = 1 (see fidelity note), dim = 128, hidden = 256.
    # S = 128 so each grid step feeds 128 rows to the MXU and every tile is
    # a full-lane (8,128)-aligned block.
    B, S, D = 2, 128, 128
    H, HD = 1, 128
    F = 256

    key = jax.random.PRNGKey(0)
    ks = jax.random.split(key, 12)
    params = {
        "attention_norm": 1.0 + 0.1 * jax.random.normal(ks[0], (D,), jnp.float32),
        "ffn_norm":       1.0 + 0.1 * jax.random.normal(ks[1], (D,), jnp.float32),
        "q_norm":         1.0 + 0.1 * jax.random.normal(ks[2], (HD,), jnp.float32),
        "k_norm":         1.0 + 0.1 * jax.random.normal(ks[3], (HD,), jnp.float32),
        "wq": 0.05 * jax.random.normal(ks[4], (H * HD, D), jnp.float32),
        "wk": 0.05 * jax.random.normal(ks[5], (H * HD, D), jnp.float32),
        "wv": 0.05 * jax.random.normal(ks[6], (H * HD, D), jnp.float32),
        "wo": 0.05 * jax.random.normal(ks[7], (D, H * HD), jnp.float32),
        "w1": 0.05 * jax.random.normal(ks[8], (F, D), jnp.float32),
        "w3": 0.05 * jax.random.normal(ks[9], (F, D), jnp.float32),
        "w2": 0.05 * jax.random.normal(ks[10], (D, F), jnp.float32),
    }
    x = jax.random.normal(ks[11], (B, S, D), jnp.float32)

    # rotary tables (seq, head_dim // 2), Llama/Qwen style
    inv_freq = 1.0 / (10000.0 ** (jnp.arange(0, HD, 2, dtype=jnp.float32) / HD))
    t = jnp.arange(S, dtype=jnp.float32)
    ang = jnp.outer(t, inv_freq)
    freqs_cos, freqs_sin = jnp.cos(ang), jnp.sin(ang)

    # one-time pack (model-load time), then the jitted forward
    packed = prepare_block(params, freqs_cos, freqs_sin)
    out = jax.block_until_ready(transformer_block(x, packed))
    ref = jax.block_until_ready(reference_block(x, params, freqs_cos, freqs_sin))

    # tolerance accounts for bf16 MXU operands (f32 accumulate) vs the all-f32
    # reference; layout / mask / permutation bugs would produce O(1) errors.
    err = float(np.max(np.abs(np.asarray(out) - np.asarray(ref))))
    assert np.allclose(np.asarray(out), np.asarray(ref), atol=1e-1, rtol=5e-2), err
    print("KERNEL_OK")
</pallas_src>

<mosaic_0001>
module attributes {stable_mosaic.version = 11 : i64} {
  func.func @block_kernel(%arg0: i32, %arg1: memref<1x128x128xf32, #tpu.memory_space<vmem>>, %arg2: memref<1x128xf32, #tpu.memory_space<vmem>>, %arg3: memref<128x384xbf16, #tpu.memory_space<vmem>>, %arg4: memref<128x128xbf16, #tpu.memory_space<vmem>>, %arg5: memref<1x128xf32, #tpu.memory_space<vmem>>, %arg6: memref<1x128xf32, #tpu.memory_space<vmem>>, %arg7: memref<128x128xf32, #tpu.memory_space<vmem>>, %arg8: memref<128x128xf32, #tpu.memory_space<vmem>>, %arg9: memref<1x128xf32, #tpu.memory_space<vmem>>, %arg10: memref<128x512xbf16, #tpu.memory_space<vmem>>, %arg11: memref<256x128xbf16, #tpu.memory_space<vmem>>, %arg12: memref<1x128x128xf32, #tpu.memory_space<vmem>>) attributes {dimension_semantics = [#tpu.dimension_semantics<parallel>], iteration_bounds = array<i64: 2>, scalar_prefetch = 0 : i64, scratch_operands = 0 : i64, tpu.core_type = #tpu.core_type<tc>, window_params = [{transform_indices = @transform_0, window_bounds = array<i64: 1, 128, 128>}, {pipeline_mode = #tpu.pipeline_mode<synchronous>, transform_indices = @transform_1, window_bounds = array<i64: 1, 128>}, {pipeline_mode = #tpu.pipeline_mode<synchronous>, transform_indices = @transform_2, window_bounds = array<i64: 128, 384>}, {pipeline_mode = #tpu.pipeline_mode<synchronous>, transform_indices = @transform_3, window_bounds = array<i64: 128, 128>}, {pipeline_mode = #tpu.pipeline_mode<synchronous>, transform_indices = @transform_4, window_bounds = array<i64: 1, 128>}, {pipeline_mode = #tpu.pipeline_mode<synchronous>, transform_indices = @transform_5, window_bounds = array<i64: 1, 128>}, {pipeline_mode = #tpu.pipeline_mode<synchronous>, transform_indices = @transform_6, window_bounds = array<i64: 128, 128>}, {pipeline_mode = #tpu.pipeline_mode<synchronous>, transform_indices = @transform_7, window_bounds = array<i64: 128, 128>}, {pipeline_mode = #tpu.pipeline_mode<synchronous>, transform_indices = @transform_8, window_bounds = array<i64: 1, 128>}, {pipeline_mode = #tpu.pipeline_mode<synchronous>, transform_indices = @transform_9, window_bounds = array<i64: 128, 512>}, {pipeline_mode = #tpu.pipeline_mode<synchronous>, transform_indices = @transform_10, window_bounds = array<i64: 256, 128>}, {transform_indices = @transform_11, window_bounds = array<i64: 1, 128, 128>}]} {
    %c0 = arith.constant 0 : index
    %c0_0 = arith.constant 0 : index
    %c0_1 = arith.constant 0 : index
    %0 = vector.load %arg1[%c0, %c0_0, %c0_1] : memref<1x128x128xf32, #tpu.memory_space<vmem>>, vector<1x128x128xf32>
    %1 = vector.shape_cast %0 : vector<1x128x128xf32> to vector<128x128xf32>
    %c0_2 = arith.constant 0 : index
    %c0_3 = arith.constant 0 : index
    %2 = vector.load %arg2[%c0_2, %c0_3] : memref<1x128xf32, #tpu.memory_space<vmem>>, vector<1x128xf32>
    %3 = arith.mulf %1, %1 : vector<128x128xf32>
    %cst = arith.constant dense<0.000000e+00> : vector<128xf32>
    %4 = vector.multi_reduction <add>, %3, %cst [1] : vector<128x128xf32> to vector<128xf32>
    %5 = vector.shape_cast %4 : vector<128xf32> to vector<128x1xf32>
    %cst_4 = arith.constant 1.280000e+02 : f32
    %6 = vector.broadcast %cst_4 : f32 to vector<128x1xf32>
    %7 = arith.divf %5, %6 : vector<128x1xf32>
    %cst_5 = arith.constant 9.99999997E-7 : f32
    %8 = vector.broadcast %cst_5 : f32 to vector<128x1xf32>
    %9 = arith.addf %7, %8 : vector<128x1xf32>
    %10 = math.rsqrt %9 : vector<128x1xf32>
    %11 = vector.broadcast %10 : vector<128x1xf32> to vector<128x128xf32>
    %12 = arith.mulf %1, %11 : vector<128x128xf32>
    %13 = vector.broadcast %2 : vector<1x128xf32> to vector<128x128xf32>
    %14 = arith.mulf %12, %13 : vector<128x128xf32>
    %15 = arith.truncf %14 : vector<128x128xf32> to vector<128x128xbf16>
    %c0_6 = arith.constant 0 : index
    %c0_7 = arith.constant 0 : index
    %16 = vector.load %arg3[%c0_6, %c0_7] : memref<128x384xbf16, #tpu.memory_space<vmem>>, vector<128x384xbf16>
    %cst_8 = arith.constant dense<0.000000e+00> : vector<128x384xf32>
    %17 = tpu.matmul %15, %16, %cst_8 {dimension_numbers = #tpu.dot_dimension_numbers<[1], [0], [0], [1], [0, 0, 1, 1], [], []>} : vector<128x128xbf16>, vector<128x384xbf16>, vector<128x384xf32> -> vector<128x384xf32>
    %18 = vector.extract_strided_slice %17 {offsets = [0, 0], sizes = [128, 128], strides = [1, 1]} : vector<128x384xf32> to vector<128x128xf32>
    %c0_9 = arith.constant 0 : index
    %c0_10 = arith.constant 0 : index
    %19 = vector.load %arg5[%c0_9, %c0_10] : memref<1x128xf32, #tpu.memory_space<vmem>>, vector<1x128xf32>
    %20 = arith.mulf %18, %18 : vector<128x128xf32>
    %cst_11 = arith.constant dense<0.000000e+00> : vector<128xf32>
    %21 = vector.multi_reduction <add>, %20, %cst_11 [1] : vector<128x128xf32> to vector<128xf32>
    %22 = vector.shape_cast %21 : vector<128xf32> to vector<128x1xf32>
    %cst_12 = arith.constant 1.280000e+02 : f32
    %23 = vector.broadcast %cst_12 : f32 to vector<128x1xf32>
    %24 = arith.divf %22, %23 : vector<128x1xf32>
    %cst_13 = arith.constant 9.99999997E-7 : f32
    %25 = vector.broadcast %cst_13 : f32 to vector<128x1xf32>
    %26 = arith.addf %24, %25 : vector<128x1xf32>
    %27 = math.rsqrt %26 : vector<128x1xf32>
    %28 = vector.broadcast %27 : vector<128x1xf32> to vector<128x128xf32>
    %29 = arith.mulf %18, %28 : vector<128x128xf32>
    %30 = vector.broadcast %19 : vector<1x128xf32> to vector<128x128xf32>
    %31 = arith.mulf %29, %30 : vector<128x128xf32>
    %32 = vector.extract_strided_slice %17 {offsets = [0, 128], sizes = [128, 128], strides = [1, 1]} : vector<128x384xf32> to vector<128x128xf32>
    %c0_14 = arith.constant 0 : index
    %c0_15 = arith.constant 0 : index
    %33 = vector.load %arg6[%c0_14, %c0_15] : memref<1x128xf32, #tpu.memory_space<vmem>>, vector<1x128xf32>
    %34 = arith.mulf %32, %32 : vector<128x128xf32>
    %cst_16 = arith.constant dense<0.000000e+00> : vector<128xf32>
    %35 = vector.multi_reduction <add>, %34, %cst_16 [1] : vector<128x128xf32> to vector<128xf32>
    %36 = vector.shape_cast %35 : vector<128xf32> to vector<128x1xf32>
    %cst_17 = arith.constant 1.280000e+02 : f32
    %37 = vector.broadcast %cst_17 : f32 to vector<128x1xf32>
    %38 = arith.divf %36, %37 : vector<128x1xf32>
    %cst_18 = arith.constant 9.99999997E-7 : f32
    %39 = vector.broadcast %cst_18 : f32 to vector<128x1xf32>
    %40 = arith.addf %38, %39 : vector<128x1xf32>
    %41 = math.rsqrt %40 : vector<128x1xf32>
    %42 = vector.broadcast %41 : vector<128x1xf32> to vector<128x128xf32>
    %43 = arith.mulf %32, %42 : vector<128x128xf32>
    %44 = vector.broadcast %33 : vector<1x128xf32> to vector<128x128xf32>
    %45 = arith.mulf %43, %44 : vector<128x128xf32>
    %46 = vector.extract_strided_slice %17 {offsets = [0, 256], sizes = [128, 128], strides = [1, 1]} : vector<128x384xf32> to vector<128x128xf32>
    %47 = arith.truncf %46 : vector<128x128xf32> to vector<128x128xbf16>
    %c0_19 = arith.constant 0 : index
    %c0_20 = arith.constant 0 : index
    %48 = vector.load %arg7[%c0_19, %c0_20] : memref<128x128xf32, #tpu.memory_space<vmem>>, vector<128x128xf32>
    %c0_21 = arith.constant 0 : index
    %c0_22 = arith.constant 0 : index
    %49 = vector.load %arg8[%c0_21, %c0_22] : memref<128x128xf32, #tpu.memory_space<vmem>>, vector<128x128xf32>
    %50 = arith.mulf %31, %48 : vector<128x128xf32>
    %c64_i32 = arith.constant 64 : i32
    %51 = tpu.dynamic_rotate %31 by %c64_i32 dim 1 : vector<128x128xf32>, i32 -> vector<128x128xf32>
    %52 = arith.mulf %51, %49 : vector<128x128xf32>
    %53 = arith.addf %50, %52 : vector<128x128xf32>
    %54 = arith.mulf %45, %48 : vector<128x128xf32>
    %c64_i32_23 = arith.constant 64 : i32
    %55 = tpu.dynamic_rotate %45 by %c64_i32_23 dim 1 : vector<128x128xf32>, i32 -> vector<128x128xf32>
    %56 = arith.mulf %55, %49 : vector<128x128xf32>
    %57 = arith.addf %54, %56 : vector<128x128xf32>
    %58 = arith.truncf %53 : vector<128x128xf32> to vector<128x128xbf16>
    %59 = arith.truncf %57 : vector<128x128xf32> to vector<128x128xbf16>
    %cst_24 = arith.constant dense<0.000000e+00> : vector<128x128xf32>
    %60 = tpu.matmul %58, %59, %cst_24 {dimension_numbers = #tpu.dot_dimension_numbers<[1], [1], [0], [0], [0, 0, 1, 0], [], []>} : vector<128x128xbf16>, vector<128x128xbf16>, vector<128x128xf32> -> vector<128x128xf32>
    %cst_25 = arith.constant 0.0883883461 : f32
    %61 = vector.broadcast %cst_25 : f32 to vector<128x128xf32>
    %62 = arith.mulf %60, %61 : vector<128x128xf32>
    %63 = tpu.iota {dimensions = array<i32: 0>} : vector<128x128xi32>
    %64 = tpu.iota {dimensions = array<i32: 1>} : vector<128x128xi32>
    %65 = arith.cmpi sle, %64, %63 : vector<128x128xi32>
    %cst_26 = arith.constant -1.000000e+30 : f32
    %66 = vector.broadcast %cst_26 : f32 to vector<128x128xf32>
    %67 = arith.select %65, %62, %66 : vector<128x128xi1>, vector<128x128xf32>
    %cst_27 = arith.constant dense<0xFF800000> : vector<128xf32>
    %68 = vector.multi_reduction <maximumf>, %67, %cst_27 [1] : vector<128x128xf32> to vector<128xf32>
    %69 = vector.shape_cast %68 : vector<128xf32> to vector<128x1xf32>
    %70 = vector.broadcast %69 : vector<128x1xf32> to vector<128x128xf32>
    %71 = arith.subf %67, %70 : vector<128x128xf32>
    %72 = math.exp %71 : vector<128x128xf32>
    %cst_28 = arith.constant dense<0.000000e+00> : vector<128xf32>
    %73 = vector.multi_reduction <add>, %72, %cst_28 [1] : vector<128x128xf32> to vector<128xf32>
    %74 = vector.shape_cast %73 : vector<128xf32> to vector<128x1xf32>
    %75 = tpu.reciprocal %74 {approx = true} : vector<128x1xf32> -> vector<128x1xf32>
    %76 = vector.broadcast %75 : vector<128x1xf32> to vector<128x128xf32>
    %77 = arith.mulf %72, %76 : vector<128x128xf32>
    %78 = arith.truncf %77 : vector<128x128xf32> to vector<128x128xbf16>
    %cst_29 = arith.constant dense<0.000000e+00> : vector<128x128xf32>
    %79 = tpu.matmul %78, %47, %cst_29 {dimension_numbers = #tpu.dot_dimension_numbers<[1], [0], [0], [1], [0, 0, 1, 1], [], []>} : vector<128x128xbf16>, vector<128x128xbf16>, vector<128x128xf32> -> vector<128x128xf32>
    %80 = arith.truncf %79 : vector<128x128xf32> to vector<128x128xbf16>
    %c0_30 = arith.constant 0 : index
    %c0_31 = arith.constant 0 : index
    %81 = vector.load %arg4[%c0_30, %c0_31] : memref<128x128xbf16, #tpu.memory_space<vmem>>, vector<128x128xbf16>
    %cst_32 = arith.constant dense<0.000000e+00> : vector<128x128xf32>
    %82 = tpu.matmul %80, %81, %cst_32 {dimension_numbers = #tpu.dot_dimension_numbers<[1], [0], [0], [1], [0, 0, 1, 1], [], []>} : vector<128x128xbf16>, vector<128x128xbf16>, vector<128x128xf32> -> vector<128x128xf32>
    %83 = arith.addf %1, %82 : vector<128x128xf32>
    %c0_33 = arith.constant 0 : index
    %c0_34 = arith.constant 0 : index
    %84 = vector.load %arg9[%c0_33, %c0_34] : memref<1x128xf32, #tpu.memory_space<vmem>>, vector<1x128xf32>
    %85 = arith.mulf %83, %83 : vector<128x128xf32>
    %cst_35 = arith.constant dense<0.000000e+00> : vector<128xf32>
    %86 = vector.multi_reduction <add>, %85, %cst_35 [1] : vector<128x128xf32> to vector<128xf32>
    %87 = vector.shape_cast %86 : vector<128xf32> to vector<128x1xf32>
    %cst_36 = arith.constant 1.280000e+02 : f32
    %88 = vector.broadcast %cst_36 : f32 to vector<128x1xf32>
    %89 = arith.divf %87, %88 : vector<128x1xf32>
    %cst_37 = arith.constant 9.99999997E-7 : f32
    %90 = vector.broadcast %cst_37 : f32 to vector<128x1xf32>
    %91 = arith.addf %89, %90 : vector<128x1xf32>
    %92 = math.rsqrt %91 : vector<128x1xf32>
    %93 = vector.broadcast %92 : vector<128x1xf32> to vector<128x128xf32>
    %94 = arith.mulf %83, %93 : vector<128x128xf32>
    %95 = vector.broadcast %84 : vector<1x128xf32> to vector<128x128xf32>
    %96 = arith.mulf %94, %95 : vector<128x128xf32>
    %97 = arith.truncf %96 : vector<128x128xf32> to vector<128x128xbf16>
    %c0_38 = arith.constant 0 : index
    %c0_39 = arith.constant 0 : index
    %98 = vector.load %arg10[%c0_38, %c0_39] : memref<128x512xbf16, #tpu.memory_space<vmem>>, vector<128x512xbf16>
    %cst_40 = arith.constant dense<0.000000e+00> : vector<128x512xf32>
    %99 = tpu.matmul %97, %98, %cst_40 {dimension_numbers = #tpu.dot_dimension_numbers<[1], [0], [0], [1], [0, 0, 1, 1], [], []>} : vector<128x128xbf16>, vector<128x512xbf16>, vector<128x512xf32> -> vector<128x512xf32>
    %100 = vector.extract_strided_slice %99 {offsets = [0, 0], sizes = [128, 256], strides = [1, 1]} : vector<128x512xf32> to vector<128x256xf32>
    %101 = vector.extract_strided_slice %99 {offsets = [0, 256], sizes = [128, 256], strides = [1, 1]} : vector<128x512xf32> to vector<128x256xf32>
    %102 = arith.negf %100 : vector<128x256xf32>
    %103 = math.exp %102 : vector<128x256xf32>
    %cst_41 = arith.constant 1.000000e+00 : f32
    %104 = vector.broadcast %cst_41 : f32 to vector<128x256xf32>
    %105 = arith.addf %104, %103 : vector<128x256xf32>
    %106 = arith.divf %104, %105 : vector<128x256xf32>
    %107 = arith.mulf %100, %106 : vector<128x256xf32>
    %108 = arith.mulf %107, %101 : vector<128x256xf32>
    %109 = arith.truncf %108 : vector<128x256xf32> to vector<128x256xbf16>
    %c0_42 = arith.constant 0 : index
    %c0_43 = arith.constant 0 : index
    %110 = vector.load %arg11[%c0_42, %c0_43] : memref<256x128xbf16, #tpu.memory_space<vmem>>, vector<256x128xbf16>
    %cst_44 = arith.constant dense<0.000000e+00> : vector<128x128xf32>
    %111 = tpu.matmul %109, %110, %cst_44 {dimension_numbers = #tpu.dot_dimension_numbers<[1], [0], [0], [1], [0, 0, 1, 1], [], []>} : vector<128x256xbf16>, vector<256x128xbf16>, vector<128x128xf32> -> vector<128x128xf32>
    %112 = arith.addf %83, %111 : vector<128x128xf32>
    %c0_45 = arith.constant 0 : index
    %c0_46 = arith.constant 0 : index
    %c0_47 = arith.constant 0 : index
    %113 = vector.load %arg12[%c0_45, %c0_46, %c0_47] : memref<1x128x128xf32, #tpu.memory_space<vmem>>, vector<1x128x128xf32>
    %114 = vector.shape_cast %113 : vector<1x128x128xf32> to vector<128x128xf32>
    %115 = vector.shape_cast %112 : vector<128x128xf32> to vector<1x128x128xf32>
    tpu.vector_store %arg12[%c0_45, %c0_46, %c0_47], %115 {strides = array<i32>} : memref<1x128x128xf32, #tpu.memory_space<vmem>>, vector<1x128x128xf32>,
    return
  }
  func.func @transform_0(%arg0: i32) -> (i32, i32, i32) {
    %c0_i32 = arith.constant 0 : i32
    %c0_i32_0 = arith.constant 0 : i32
    %c0_i32_1 = arith.constant 0 : i32
    return %arg0, %c0_i32, %c0_i32_0 : i32, i32, i32
  }
  func.func @transform_1(%arg0: i32) -> (i32, i32) {
    %c0_i32 = arith.constant 0 : i32
    %c0_i32_0 = arith.constant 0 : i32
    %c0_i32_1 = arith.constant 0 : i32
    return %c0_i32, %c0_i32_0 : i32, i32
  }
  func.func @transform_2(%arg0: i32) -> (i32, i32) {
    %c0_i32 = arith.constant 0 : i32
    %c0_i32_0 = arith.constant 0 : i32
    %c0_i32_1 = arith.constant 0 : i32
    return %c0_i32, %c0_i32_0 : i32, i32
  }
  func.func @transform_3(%arg0: i32) -> (i32, i32) {
    %c0_i32 = arith.constant 0 : i32
    %c0_i32_0 = arith.constant 0 : i32
    %c0_i32_1 = arith.constant 0 : i32
    return %c0_i32, %c0_i32_0 : i32, i32
  }
  func.func @transform_4(%arg0: i32) -> (i32, i32) {
    %c0_i32 = arith.constant 0 : i32
    %c0_i32_0 = arith.constant 0 : i32
    %c0_i32_1 = arith.constant 0 : i32
    return %c0_i32, %c0_i32_0 : i32, i32
  }
  func.func @transform_5(%arg0: i32) -> (i32, i32) {
    %c0_i32 = arith.constant 0 : i32
    %c0_i32_0 = arith.constant 0 : i32
    %c0_i32_1 = arith.constant 0 : i32
    return %c0_i32, %c0_i32_0 : i32, i32
  }
  func.func @transform_6(%arg0: i32) -> (i32, i32) {
    %c0_i32 = arith.constant 0 : i32
    %c0_i32_0 = arith.constant 0 : i32
    %c0_i32_1 = arith.constant 0 : i32
    return %c0_i32, %c0_i32_0 : i32, i32
  }
  func.func @transform_7(%arg0: i32) -> (i32, i32) {
    %c0_i32 = arith.constant 0 : i32
    %c0_i32_0 = arith.constant 0 : i32
    %c0_i32_1 = arith.constant 0 : i32
    return %c0_i32, %c0_i32_0 : i32, i32
  }
  func.func @transform_8(%arg0: i32) -> (i32, i32) {
    %c0_i32 = arith.constant 0 : i32
    %c0_i32_0 = arith.constant 0 : i32
    %c0_i32_1 = arith.constant 0 : i32
    return %c0_i32, %c0_i32_0 : i32, i32
  }
  func.func @transform_9(%arg0: i32) -> (i32, i32) {
    %c0_i32 = arith.constant 0 : i32
    %c0_i32_0 = arith.constant 0 : i32
    %c0_i32_1 = arith.constant 0 : i32
    return %c0_i32, %c0_i32_0 : i32, i32
  }
  func.func @transform_10(%arg0: i32) -> (i32, i32) {
    %c0_i32 = arith.constant 0 : i32
    %c0_i32_0 = arith.constant 0 : i32
    %c0_i32_1 = arith.constant 0 : i32
    return %c0_i32, %c0_i32_0 : i32, i32
  }
  func.func @transform_11(%arg0: i32) -> (i32, i32, i32) {
    %c0_i32 = arith.constant 0 : i32
    %c0_i32_0 = arith.constant 0 : i32
    %c0_i32_1 = arith.constant 0 : i32
    return %arg0, %c0_i32, %c0_i32_0 : i32, i32, i32
  }
}

</mosaic_0001>

<llo_original>
// kernel: transformer_block.1
$region0: #{transformer_block.1}
  #allocation0 [shape = 'u32[]', space=smem, size = 0x4, offset = 0x4, fixed_abs, tag = 'smem constant byte address 0x4 - core index']
  #allocation1 [shape = 'u32[144,128]{1,0:T(1,128)}', space=vmem, size = 0x12000, scoped, tag = 'internal scratch']
  %s0 = inlined_call_operand.hbm [shape: f32[2,128,128], index: 0, kind: input, shape index: {}]
  %s1 = inlined_call_operand.hbm [shape: f32[1,128], index: 1, kind: input, shape index: {}]
  %s2 = inlined_call_operand.hbm [shape: bf16[128,384], index: 2, kind: input, shape index: {}]
  %s3 = inlined_call_operand.hbm [shape: bf16[128,128], index: 3, kind: input, shape index: {}]
  %s4 = inlined_call_operand.hbm [shape: f32[1,128], index: 4, kind: input, shape index: {}]
  %s5 = inlined_call_operand.hbm [shape: f32[1,128], index: 5, kind: input, shape index: {}]
  %s6 = inlined_call_operand.hbm [shape: f32[128,128], index: 6, kind: input, shape index: {}]
  %s7 = inlined_call_operand.hbm [shape: f32[128,128], index: 7, kind: input, shape index: {}]
  %s8 = inlined_call_operand.hbm [shape: f32[1,128], index: 8, kind: input, shape index: {}]
  %s9 = inlined_call_operand.hbm [shape: bf16[128,512], index: 9, kind: input, shape index: {}]
  %s10 = inlined_call_operand.hbm [shape: bf16[256,128], index: 10, kind: input, shape index: {}]
  %s11 = inlined_call_operand.hbm [shape: f32[2,128,128], index: 11, kind: output, shape index: {}]
  %s12 = sld [smem:[#allocation0]]
  $region121: #{transformer_block.1} parent=0
    _
  %s14 = ssub.s32 1, %s12
  %s15 = scalar_select 0, %s14, %s12
  $region1: #{transformer_block.1} parent=0
    #allocation2 [shape = 'u8[131072]{0}', space=vmem, size = 0x20000, scoped, tag = 'input window, operand 0']
    #allocation3 [shape = 's32[2]{0}', space=sflag, size = 0x8, scoped, tag = 'scoped memory for transformer_block.1']
    #allocation4 [shape = 's32[2]{0}', space=sflag, size = 0x8, scoped, tag = 'scoped memory for transformer_block.1']
    #allocation5 [shape = 'u8[512]{0}', space=vmem, size = 0x400, scoped, tag = 'input window, operand 1, single buffered']
    #allocation6 [shape = 's32[1]{0}', space=sflag, size = 0x4, scoped, tag = 'scoped memory for transformer_block.1']
    #allocation7 [shape = 'u8[98304]{0}', space=vmem, size = 0x18000, scoped, tag = 'input window, operand 2, single buffered']
    #allocation8 [shape = 'u8[32768]{0}', space=vmem, size = 0x8000, scoped, tag = 'input window, operand 3, single buffered']
    #allocation9 [shape = 's32[1]{0}', space=sflag, size = 0x4, scoped, tag = 'scoped memory for transformer_block.1']
    #allocation10 [shape = 'u8[512]{0}', space=vmem, size = 0x400, scoped, tag = 'input window, operand 4, single buffered']
    #allocation11 [shape = 'u8[512]{0}', space=vmem, size = 0x400, scoped, tag = 'input window, operand 5, single buffered']
    #allocation12 [shape = 's32[1]{0}', space=sflag, size = 0x4, scoped, tag = 'scoped memory for transformer_block.1']
    #allocation13 [shape = 'u8[65536]{0}', space=vmem, size = 0x10000, scoped, tag = 'input window, operand 6, single buffered']
    #allocation14 [shape = 'u8[65536]{0}', space=vmem, size = 0x10000, scoped, tag = 'input window, operand 7, single buffered']
    #allocation15 [shape = 's32[1]{0}', space=sflag, size = 0x4, scoped, tag = 'scoped memory for transformer_block.1']
    #allocation16 [shape = 'u8[512]{0}', space=vmem, size = 0x400, scoped, tag = 'input window, operand 8, single buffered']
    #allocation17 [shape = 'u8[131072]{0}', space=vmem, size = 0x20000, scoped, tag = 'input window, operand 9, single buffered']
    #allocation18 [shape = 's32[1]{0}', space=sflag, size = 0x4, scoped, tag = 'scoped memory for transformer_block.1']
    #allocation19 [shape = 'u8[65536]{0}', space=vmem, size = 0x10000, scoped, tag = 'input window, operand 10, single buffered']
    #allocation20 [shape = 'u8[131072]{0}', space=vmem, size = 0x20000, scoped, tag = 'output window, operand 0']
    %16 = vsyncpa [#allocation3], 0
    %s17 = scalar_lea.sflag [#allocation3], 1
    %18 = vsyncpa %s17, 0
    %19 = vsyncpa [#allocation6], 0
    %20 = vsyncpa [#allocation9], 0
    %21 = vsyncpa [#allocation12], 0
    %22 = vsyncpa [#allocation15], 0
    %23 = vsyncpa [#allocation18], 0
    %24 = vsyncpa [#allocation4], 0
    %s25 = scalar_lea.sflag [#allocation4], 1
    %26 = vsyncpa %s25, 0
    loop: start=0, step=1, limit=4
    $region2: #{transformer_block.1} parent=1 // loop_pre_header
      _
    $region3: #{transformer_block.1} parent=1 // loop_header
      %s28 = sphi 0, %s32
      %p29 = scmp.ge.s32.totalorder %s28, 4
      %s38 = sphi 0, %s40
      %s41 = sphi 0, %s38
      %s42 = sphi 0, %s41
      %s58 = sphi 0, %s42
      %s62 = sphi 0, %s62
      %s64 = sphi 0, %s62
      %s65 = sphi 0, %s64
      %s79 = sphi 0, %s65
      %s83 = sphi 0, %s83
      %s85 = sphi 0, %s83
      %s86 = sphi 0, %s85
      %s100 = sphi 0, %s86
      %s104 = sphi 0, %s104
      %s106 = sphi 0, %s104
      %s107 = sphi 0, %s106
      %s121 = sphi 0, %s107
      %s125 = sphi 0, %s125
      %s127 = sphi 0, %s125
      %s128 = sphi 0, %s127
      %s142 = sphi 0, %s128
      %s146 = sphi 0, %s146
      %s148 = sphi 0, %s146
      %s149 = sphi 0, %s148
      %s163 = sphi 0, %s149
      %s167 = sphi 0, %s167
      %s169 = sphi 0, %s167
      %s170 = sphi 0, %s169
      %s184 = sphi 0, %s170
      %s188 = sphi 0, %s188
      %s190 = sphi 0, %s188
      %s191 = sphi 0, %s190
      %s205 = sphi 0, %s191
      %s209 = sphi 0, %s209
      %s211 = sphi 0, %s209
      %s212 = sphi 0, %s211
      %s226 = sphi 0, %s212
      %s230 = sphi 0, %s230
      %s232 = sphi 0, %s230
      %s233 = sphi 0, %s232
      %s247 = sphi 0, %s233
      %s251 = sphi 0, %s251
      %s253 = sphi 0, %s251
      %s254 = sphi 0, %s253
      %s268 = sphi 0, %s254
      %s274 = sphi 0, %s276
      %s277 = sphi 0, %s274
      %s278 = sphi 0, %s277
      %s294 = sphi 0, %s278
    $region4: #{transformer_block.1} parent=1 // loop_header_branch
      %31 = sbr.rel (%p29) target = $region8
    $region5: #{transformer_block.1} parent=1 // loop_body
      %s33 = ssub.s32 %s28, 1
      %s34 = ssub.s32 %s28, 2
      %s35 = sadd.s32 %s28, 1
      %s36 = ssub.s32 %s28, %s35
      %p37 = scmp.eq.s32.totalorder %s36, 0
      %s39 = sadd.s32 %s38, 1
      %s40 = scalar_select %p37, %s38, %s39
      %p43 = pneg %p37
      %p44 = scmp.eq.s32.totalorder %s28, 1
      %p45 = por %p43, %p44
      %p46 = scmp.ne.s32.totalorder %s38, %s41
      %p47 = scmp.eq.s32.totalorder %s28, 0
      %p48 = por %p46, %p47
      %p49 = scmp.ne.s32.totalorder %s38, %s41
      %p50 = scmp.eq.s32.totalorder %s33, 1
      %p51 = por %p49, %p50
      %p52 = scmp.ne.s32.totalorder %s41, %s42
      %p53 = scmp.eq.s32.totalorder %s33, 0
      %p54 = por %p52, %p53
      %p55 = scmp.ne.s32.totalorder %s41, %s42
      %p56 = scmp.eq.s32.totalorder %s34, 1
      %p57 = por %p55, %p56
      %p59 = scmp.ne.s32.totalorder %s42, %s58
      %p60 = scmp.eq.s32.totalorder %s34, 0
      %p61 = por %p59, %p60
      %s63 = sadd.s32 %s62, 1
      %p66 = scmp.eq.s32.totalorder %s28, 1
      %p67 = scmp.ne.s32.totalorder %s62, %s64
      %p68 = scmp.eq.s32.totalorder %s28, 0
      %p69 = por %p67, %p68
      %p70 = scmp.ne.s32.totalorder %s62, %s64
      %p71 = scmp.eq.s32.totalorder %s33, 1
      %p72 = por %p70, %p71
      %p73 = scmp.ne.s32.totalorder %s64, %s65
      %p74 = scmp.eq.s32.totalorder %s33, 0
      %p75 = por %p73, %p74
      %p76 = scmp.ne.s32.totalorder %s64, %s65
      %p77 = scmp.eq.s32.totalorder %s34, 1
      %p78 = por %p76, %p77
      %p80 = scmp.ne.s32.totalorder %s65, %s79
      %p81 = scmp.eq.s32.totalorder %s34, 0
      %p82 = por %p80, %p81
      %s84 = sadd.s32 %s83, 1
      %p87 = scmp.eq.s32.totalorder %s28, 1
      %p88 = scmp.ne.s32.totalorder %s83, %s85
      %p89 = scmp.eq.s32.totalorder %s28, 0
      %p90 = por %p88, %p89
      %p91 = scmp.ne.s32.totalorder %s83, %s85
      %p92 = scmp.eq.s32.totalorder %s33, 1
      %p93 = por %p91, %p92
      %p94 = scmp.ne.s32.totalorder %s85, %s86
      %p95 = scmp.eq.s32.totalorder %s33, 0
      %p96 = por %p94, %p95
      %p97 = scmp.ne.s32.totalorder %s85, %s86
      %p98 = scmp.eq.s32.totalorder %s34, 1
      %p99 = por %p97, %p98
      %p101 = scmp.ne.s32.totalorder %s86, %s100
      %p102 = scmp.eq.s32.totalorder %s34, 0
      %p103 = por %p101, %p102
      %s105 = sadd.s32 %s104, 1
      %p108 = scmp.eq.s32.totalorder %s28, 1
      %p109 = scmp.ne.s32.totalorder %s104, %s106
      %p110 = scmp.eq.s32.totalorder %s28, 0
      %p111 = por %p109, %p110
      %p112 = scmp.ne.s32.totalorder %s104, %s106
      %p113 = scmp.eq.s32.totalorder %s33, 1
      %p114 = por %p112, %p113
      %p115 = scmp.ne.s32.totalorder %s106, %s107
      %p116 = scmp.eq.s32.totalorder %s33, 0
      %p117 = por %p115, %p116
      %p118 = scmp.ne.s32.totalorder %s106, %s107
      %p119 = scmp.eq.s32.totalorder %s34, 1
      %p120 = por %p118, %p119
      %p122 = scmp.ne.s32.totalorder %s107, %s121
      %p123 = scmp.eq.s32.totalorder %s34, 0
      %p124 = por %p122, %p123
      %s126 = sadd.s32 %s125, 1
      %p129 = scmp.eq.s32.totalorder %s28, 1
      %p130 = scmp.ne.s32.totalorder %s125, %s127
      %p131 = scmp.eq.s32.totalorder %s28, 0
      %p132 = por %p130, %p131
      %p133 = scmp.ne.s32.totalorder %s125, %s127
      %p134 = scmp.eq.s32.totalorder %s33, 1
      %p135 = por %p133, %p134
      %p136 = scmp.ne.s32.totalorder %s127, %s128
      %p137 = scmp.eq.s32.totalorder %s33, 0
      %p138 = por %p136, %p137
      %p139 = scmp.ne.s32.totalorder %s127, %s128
      %p140 = scmp.eq.s32.totalorder %s34, 1
      %p141 = por %p139, %p140
      %p143 = scmp.ne.s32.totalorder %s128, %s142
      %p144 = scmp.eq.s32.totalorder %s34, 0
      %p145 = por %p143, %p144
      %s147 = sadd.s32 %s146, 1
      %p150 = scmp.eq.s32.totalorder %s28, 1
      %p151 = scmp.ne.s32.totalorder %s146, %s148
      %p152 = scmp.eq.s32.totalorder %s28, 0
      %p153 = por %p151, %p152
      %p154 = scmp.ne.s32.totalorder %s146, %s148
      %p155 = scmp.eq.s32.totalorder %s33, 1
      %p156 = por %p154, %p155
      %p157 = scmp.ne.s32.totalorder %s148, %s149
      %p158 = scmp.eq.s32.totalorder %s33, 0
      %p159 = por %p157, %p158
      %p160 = scmp.ne.s32.totalorder %s148, %s149
      %p161 = scmp.eq.s32.totalorder %s34, 1
      %p162 = por %p160, %p161
      %p164 = scmp.ne.s32.totalorder %s149, %s163
      %p165 = scmp.eq.s32.totalorder %s34, 0
      %p166 = por %p164, %p165
      %s168 = sadd.s32 %s167, 1
      %p171 = scmp.eq.s32.totalorder %s28, 1
      %p172 = scmp.ne.s32.totalorder %s167, %s169
      %p173 = scmp.eq.s32.totalorder %s28, 0
      %p174 = por %p172, %p173
      %p175 = scmp.ne.s32.totalorder %s167, %s169
      %p176 = scmp.eq.s32.totalorder %s33, 1
      %p177 = por %p175, %p176
      %p178 = scmp.ne.s32.totalorder %s169, %s170
      %p179 = scmp.eq.s32.totalorder %s33, 0
      %p180 = por %p178, %p179
      %p181 = scmp.ne.s32.totalorder %s169, %s170
      %p182 = scmp.eq.s32.totalorder %s34, 1
      %p183 = por %p181, %p182
      %p185 = scmp.ne.s32.totalorder %s170, %s184
      %p186 = scmp.eq.s32.totalorder %s34, 0
      %p187 = por %p185, %p186
      %s189 = sadd.s32 %s188, 1
      %p192 = scmp.eq.s32.totalorder %s28, 1
      %p193 = scmp.ne.s32.totalorder %s188, %s190
      %p194 = scmp.eq.s32.totalorder %s28, 0
      %p195 = por %p193, %p194
      %p196 = scmp.ne.s32.totalorder %s188, %s190
      %p197 = scmp.eq.s32.totalorder %s33, 1
      %p198 = por %p196, %p197
      %p199 = scmp.ne.s32.totalorder %s190, %s191
      %p200 = scmp.eq.s32.totalorder %s33, 0
      %p201 = por %p199, %p200
      %p202 = scmp.ne.s32.totalorder %s190, %s191
      %p203 = scmp.eq.s32.totalorder %s34, 1
      %p204 = por %p202, %p203
      %p206 = scmp.ne.s32.totalorder %s191, %s205
      %p207 = scmp.eq.s32.totalorder %s34, 0
      %p208 = por %p206, %p207
      %s210 = sadd.s32 %s209, 1
      %p213 = scmp.eq.s32.totalorder %s28, 1
      %p214 = scmp.ne.s32.totalorder %s209, %s211
      %p215 = scmp.eq.s32.totalorder %s28, 0
      %p216 = por %p214, %p215
      %p217 = scmp.ne.s32.totalorder %s209, %s211
      %p218 = scmp.eq.s32.totalorder %s33, 1
      %p219 = por %p217, %p218
      %p220 = scmp.ne.s32.totalorder %s211, %s212
      %p221 = scmp.eq.s32.totalorder %s33, 0
      %p222 = por %p220, %p221
      %p223 = scmp.ne.s32.totalorder %s211, %s212
      %p224 = scmp.eq.s32.totalorder %s34, 1
      %p225 = por %p223, %p224
      %p227 = scmp.ne.s32.totalorder %s212, %s226
      %p228 = scmp.eq.s32.totalorder %s34, 0
      %p229 = por %p227, %p228
      %s231 = sadd.s32 %s230, 1
      %p234 = scmp.eq.s32.totalorder %s28, 1
      %p235 = scmp.ne.s32.totalorder %s230, %s232
      %p236 = scmp.eq.s32.totalorder %s28, 0
      %p237 = por %p235, %p236
      %p238 = scmp.ne.s32.totalorder %s230, %s232
      %p239 = scmp.eq.s32.totalorder %s33, 1
      %p240 = por %p238, %p239
      %p241 = scmp.ne.s32.totalorder %s232, %s233
      %p242 = scmp.eq.s32.totalorder %s33, 0
      %p243 = por %p241, %p242
      %p244 = scmp.ne.s32.totalorder %s232, %s233
      %p245 = scmp.eq.s32.totalorder %s34, 1
      %p246 = por %p244, %p245
      %p248 = scmp.ne.s32.totalorder %s233, %s247
      %p249 = scmp.eq.s32.totalorder %s34, 0
      %p250 = por %p248, %p249
      %s252 = sadd.s32 %s251, 1
      %p255 = scmp.eq.s32.totalorder %s28, 1
      %p256 = scmp.ne.s32.totalorder %s251, %s253
      %p257 = scmp.eq.s32.totalorder %s28, 0
      %p258 = por %p256, %p257
      %p259 = scmp.ne.s32.totalorder %s251, %s253
      %p260 = scmp.eq.s32.totalorder %s33, 1
      %p261 = por %p259, %p260
      %p262 = scmp.ne.s32.totalorder %s253, %s254
      %p263 = scmp.eq.s32.totalorder %s33, 0
      %p264 = por %p262, %p263
      %p265 = scmp.ne.s32.totalorder %s253, %s254
      %p266 = scmp.eq.s32.totalorder %s34, 1
      %p267 = por %p265, %p266
      %p269 = scmp.ne.s32.totalorder %s254, %s268
      %p270 = scmp.eq.s32.totalorder %s34, 0
      %p271 = por %p269, %p270
      %s272 = ssub.s32 %s28, %s35
      %p273 = scmp.eq.s32.totalorder %s272, 0
      %s275 = sadd.s32 %s274, 1
      %s276 = scalar_select %p273, %s274, %s275
      %p279 = pneg %p273
      %p280 = scmp.eq.s32.totalorder %s28, 1
      %p281 = por %p279, %p280
      %p282 = scmp.ne.s32.totalorder %s274, %s277
      %p283 = scmp.eq.s32.totalorder %s28, 0
      %p284 = por %p282, %p283
      %p285 = scmp.ne.s32.totalorder %s274, %s277
      %p286 = scmp.eq.s32.totalorder %s33, 1
      %p287 = por %p285, %p286
      %p288 = scmp.ne.s32.totalorder %s277, %s278
      %p289 = scmp.eq.s32.totalorder %s33, 0
      %p290 = por %p288, %p289
      %p291 = scmp.ne.s32.totalorder %s277, %s278
      %p292 = scmp.eq.s32.totalorder %s34, 1
      %p293 = por %p291, %p292
      %p295 = scmp.ne.s32.totalorder %s278, %s294
      %p296 = scmp.eq.s32.totalorder %s34, 0
      %p297 = por %p295, %p296
      %p298 = scmp.le.s32.totalorder 1, %s28
      %p299 = scmp.lt.s32.totalorder %s28, 3
      %p300 = pnand %p298, %p299
      %p301 = pneg %p300
      // Predicated region
      $region9: #{transformer_block.1} parent=5 // pred_check
        _
      $region10: #{transformer_block.1} parent=5 // pred_check_branch
        %303 = sbr.rel (%p300) target = $region12
      $region11: #{transformer_block.1} parent=5 // pred_region
        %s304 = ssub.s32 %s28, 1
        // Predicated region
        $region13: #{transformer_block.1} parent=11 // pred_check
          %p305 = pneg %p75
        $region14: #{transformer_block.1} parent=11 // pred_check_branch
          %307 = sbr.rel (%p305) target = $region16
        $region15: #{transformer_block.1} parent=11 // pred_region
          %s309 = ssub.s32 16, 16
          %310 = vsyncadd [#allocation6], %s309
          %s312 = sshll.u32 [#allocation5], 4
          %s313 = int_to_ptr.vmem [resolvable:$true] %s312
          %315 = dma.hbm_to_vmem [thread:$0]  %s1, 16, %s313, [#allocation6]
        $region16: #{transformer_block.1} parent=11 // pred_fallthru
          _
        // Predicated region
        $region17: #{transformer_block.1} parent=11 // pred_check
          %p316 = pneg %p96
        $region18: #{transformer_block.1} parent=11 // pred_check_branch
          %318 = sbr.rel (%p316) target = $region20
        $region19: #{transformer_block.1} parent=11 // pred_region
          %s320 = ssub.s32 3072, 3072
          %321 = vsyncadd [#allocation6], %s320
          %s322 = sshll.u32 [#allocation7], 4
          %s323 = int_to_ptr.vmem [resolvable:$true] %s322
          %328 = dma.hbm_to_vmem [thread:$0]  %s2, 3072, %s323, [#allocation6], 192, 192, 12
        $region20: #{transformer_block.1} parent=11 // pred_fallthru
          _
        // Predicated region
        $region21: #{transformer_block.1} parent=11 // pred_check
          %p329 = pneg %p117
        $region22: #{transformer_block.1} parent=11 // pred_check_branch
          %331 = sbr.rel (%p329) target = $region24
        $region23: #{transformer_block.1} parent=11 // pred_region
          %s333 = ssub.s32 1024, 1024
          %334 = vsyncadd [#allocation9], %s333
          %s335 = sshll.u32 [#allocation8], 4
          %s336 = int_to_ptr.vmem [resolvable:$true] %s335
          %341 = dma.hbm_to_vmem [thread:$0]  %s3, 1024, %s336, [#allocation9], 64, 64, 4
        $region24: #{transformer_block.1} parent=11 // pred_fallthru
          _
        // Predicated region
        $region25: #{transformer_block.1} parent=11 // pred_check
          %p342 = pneg %p138
        $region26: #{transformer_block.1} parent=11 // pred_check_branch
          %344 = sbr.rel (%p342) target = $region28
        $region27: #{transformer_block.1} parent=11 // pred_region
          %s346 = ssub.s32 16, 16
          %347 = vsyncadd [#allocation9], %s346
          %s349 = sshll.u32 [#allocation10], 4
          %s350 = int_to_ptr.vmem [resolvable:$true] %s349
          %352 = dma.hbm_to_vmem [thread:$0]  %s4, 16, %s350, [#allocation9]
        $region28: #{transformer_block.1} parent=11 // pred_fallthru
          _
        // Predicated region
        $region29: #{transformer_block.1} parent=11 // pred_check
          %p353 = pneg %p159
        $region30: #{transformer_block.1} parent=11 // pred_check_branch
          %355 = sbr.rel (%p353) target = $region32
        $region31: #{transformer_block.1} parent=11 // pred_region
          %s357 = ssub.s32 16, 16
          %358 = vsyncadd [#allocation12], %s357
          %s360 = sshll.u32 [#allocation11], 4
          %s361 = int_to_ptr.vmem [resolvable:$true] %s360
          %363 = dma.hbm_to_vmem [thread:$0]  %s5, 16, %s361, [#allocation12]
        $region32: #{transformer_block.1} parent=11 // pred_fallthru
          _
        // Predicated region
        $region33: #{transformer_block.1} parent=11 // pred_check
          %p364 = pneg %p180
        $region34: #{transformer_block.1} parent=11 // pred_check_branch
          %366 = sbr.rel (%p364) target = $region36
        $region35: #{transformer_block.1} parent=11 // pred_region
          %s368 = ssub.s32 2048, 2048
          %369 = vsyncadd [#allocation12], %s368
          %s370 = sshll.u32 [#allocation13], 4
          %s371 = int_to_ptr.vmem [resolvable:$true] %s370
          %376 = dma.hbm_to_vmem [thread:$0]  %s6, 2048, %s371, [#allocation12], 128, 128, 8
        $region36: #{transformer_block.1} parent=11 // pred_fallthru
          _
        // Predicated region
        $region37: #{transformer_block.1} parent=11 // pred_check
          %p377 = pneg %p201
        $region38: #{transformer_block.1} parent=11 // pred_check_branch
          %379 = sbr.rel (%p377) target = $region40
        $region39: #{transformer_block.1} parent=11 // pred_region
          %s381 = ssub.s32 2048, 2048
          %382 = vsyncadd [#allocation15], %s381
          %s383 = sshll.u32 [#allocation14], 4
          %s384 = int_to_ptr.vmem [resolvable:$true] %s383
          %389 = dma.hbm_to_vmem [thread:$0]  %s7, 2048, %s384, [#allocation15], 128, 128, 8
        $region40: #{transformer_block.1} parent=11 // pred_fallthru
          _
        // Predicated region
        $region41: #{transformer_block.1} parent=11 // pred_check
          %p390 = pneg %p222
        $region42: #{transformer_block.1} parent=11 // pred_check_branch
          %392 = sbr.rel (%p390) target = $region44
        $region43: #{transformer_block.1} parent=11 // pred_region
          %s394 = ssub.s32 16, 16
          %395 = vsyncadd [#allocation15], %s394
          %s397 = sshll.u32 [#allocation16], 4
          %s398 = int_to_ptr.vmem [resolvable:$true] %s397
          %400 = dma.hbm_to_vmem [thread:$0]  %s8, 16, %s398, [#allocation15]
        $region44: #{transformer_block.1} parent=11 // pred_fallthru
          _
        // Predicated region
        $region45: #{transformer_block.1} parent=11 // pred_check
          %p401 = pneg %p243
        $region46: #{transformer_block.1} parent=11 // pred_check_branch
          %403 = sbr.rel (%p401) target = $region48
        $region47: #{transformer_block.1} parent=11 // pred_region
          %s405 = ssub.s32 4096, 4096
          %406 = vsyncadd [#allocation18], %s405
          %s407 = sshll.u32 [#allocation17], 4
          %s408 = int_to_ptr.vmem [resolvable:$true] %s407
          %413 = dma.hbm_to_vmem [thread:$0]  %s9, 4096, %s408, [#allocation18], 256, 256, 16
        $region48: #{transformer_block.1} parent=11 // pred_fallthru
          _
        // Predicated region
        $region49: #{transformer_block.1} parent=11 // pred_check
          %p414 = pneg %p264
        $region50: #{transformer_block.1} parent=11 // pred_check_branch
          %416 = sbr.rel (%p414) target = $region52
        $region51: #{transformer_block.1} parent=11 // pred_region
          %s418 = ssub.s32 2048, 2048
          %419 = vsyncadd [#allocation18], %s418
          %s420 = sshll.u32 [#allocation19], 4
          %s421 = int_to_ptr.vmem [resolvable:$true] %s420
          %426 = dma.hbm_to_vmem [thread:$0]  %s10, 2048, %s421, [#allocation18], 64, 64, 4
        $region52: #{transformer_block.1} parent=11 // pred_fallthru
          _
      $region12: #{transformer_block.1} parent=5 // pred_fallthru
        _
      %p427 = scmp.lt.s32.totalorder %s28, 2
      // Predicated region
      $region53: #{transformer_block.1} parent=5 // pred_check
        %p428 = pneg %p427
      $region54: #{transformer_block.1} parent=5 // pred_check_branch
        %430 = sbr.rel (%p428) target = $region56
      $region55: #{transformer_block.1} parent=5 // pred_region
        // Predicated region
        $region57: #{transformer_block.1} parent=55 // pred_check
          %p431 = pneg %p48
        $region58: #{transformer_block.1} parent=55 // pred_check_branch
          %433 = sbr.rel (%p431) target = $region60
        $region59: #{transformer_block.1} parent=55 // pred_region
          %s434 = sand.u32 %s38, 1
          %s435 = scalar_lea.sflag [#allocation3], %s434
          %s436 = sand.u32 %s38, 1
          %s437 = smul.addr %s436, 128
          %s438 = scalar_lea.vmem [#allocation2], %s437
          %s440 = ssub.s32 2048, 2048
          %441 = vsyncadd %s435, %s440
          %s442 = smul.addr %s28, 16
          %s443 = smul.addr %s442, 128
          %s444 = scalar_lea.hbm %s0, %s443
          %s445 = sshll.u32 %s438, 4
          %s446 = int_to_ptr.vmem [resolvable:$true] %s445
          %451 = dma.hbm_to_vmem [thread:$0]  %s444, 2048, %s446, %s435, 128, 128, 8
        $region60: #{transformer_block.1} parent=55 // pred_fallthru
          _
      $region56: #{transformer_block.1} parent=5 // pred_fallthru
        _
      %p452 = scmp.le.s32.totalorder 1, %s28
      %p453 = scmp.lt.s32.totalorder %s28, 3
      %p454 = pnand %p452, %p453
      %p455 = pneg %p454
      // Predicated region
      $region61: #{transformer_block.1} parent=5 // pred_check
        _
      $region62: #{transformer_block.1} parent=5 // pred_check_branch
        %457 = sbr.rel (%p454) target = $region64
      $region63: #{transformer_block.1} parent=5 // pred_region
        %s458 = ssub.s32 %s28, 1
        %s459 = sand.u32 %s41, 1
        %s460 = scalar_lea.sflag [#allocation3], %s459
        %s461 = sand.u32 %s41, 1
        %s462 = smul.addr %s461, 128
        %s463 = scalar_lea.vmem [#allocation2], %s462
        // Predicated region
        $region65: #{transformer_block.1} parent=63 // pred_check
          %p464 = pneg %p54
        $region66: #{transformer_block.1} parent=63 // pred_check_branch
          %466 = sbr.rel (%p464) target = $region68
        $region67: #{transformer_block.1} parent=63 // pred_region
          %467 = dma.done %s460, 2048
        $region68: #{transformer_block.1} parent=63 // pred_fallthru
          _
        // Predicated region
        $region69: #{transformer_block.1} parent=63 // pred_check
          %p468 = pneg %p75
        $region70: #{transformer_block.1} parent=63 // pred_check_branch
          %470 = sbr.rel (%p468) target = $region72
        $region71: #{transformer_block.1} parent=63 // pred_region
          %471 = dma.done [#allocation6], 16
        $region72: #{transformer_block.1} parent=63 // pred_fallthru
          _
        // Predicated region
        $region73: #{transformer_block.1} parent=63 // pred_check
          %p472 = pneg %p96
        $region74: #{transformer_block.1} parent=63 // pred_check_branch
          %474 = sbr.rel (%p472) target = $region76
        $region75: #{transformer_block.1} parent=63 // pred_region
          %475 = dma.done [#allocation6], 3072
        $region76: #{transformer_block.1} parent=63 // pred_fallthru
          _
        // Predicated region
        $region77: #{transformer_block.1} parent=63 // pred_check
          %p476 = pneg %p117
        $region78: #{transformer_block.1} parent=63 // pred_check_branch
          %478 = sbr.rel (%p476) target = $region80
        $region79: #{transformer_block.1} parent=63 // pred_region
          %479 = dma.done [#allocation9], 1024
        $region80: #{transformer_block.1} parent=63 // pred_fallthru
          _
        // Predicated region
        $region81: #{transformer_block.1} parent=63 // pred_check
          %p480 = pneg %p138
        $region82: #{transformer_block.1} parent=63 // pred_check_branch
          %482 = sbr.rel (%p480) target = $region84
        $region83: #{transformer_block.1} parent=63 // pred_region
          %483 = dma.done [#allocation9], 16
        $region84: #{transformer_block.1} parent=63 // pred_fallthru
          _
        // Predicated region
        $region85: #{transformer_block.1} parent=63 // pred_check
          %p484 = pneg %p159
        $region86: #{transformer_block.1} parent=63 // pred_check_branch
          %486 = sbr.rel (%p484) target = $region88
        $region87: #{transformer_block.1} parent=63 // pred_region
          %487 = dma.done [#allocation12], 16
        $region88: #{transformer_block.1} parent=63 // pred_fallthru
          _
        // Predicated region
        $region89: #{transformer_block.1} parent=63 // pred_check
          %p488 = pneg %p180
        $region90: #{transformer_block.1} parent=63 // pred_check_branch
          %490 = sbr.rel (%p488) target = $region92
        $region91: #{transformer_block.1} parent=63 // pred_region
          %491 = dma.done [#allocation12], 2048
        $region92: #{transformer_block.1} parent=63 // pred_fallthru
          _
        // Predicated region
        $region93: #{transformer_block.1} parent=63 // pred_check
          %p492 = pneg %p201
        $region94: #{transformer_block.1} parent=63 // pred_check_branch
          %494 = sbr.rel (%p492) target = $region96
        $region95: #{transformer_block.1} parent=63 // pred_region
          %495 = dma.done [#allocation15], 2048
        $region96: #{transformer_block.1} parent=63 // pred_fallthru
          _
        // Predicated region
        $region97: #{transformer_block.1} parent=63 // pred_check
          %p496 = pneg %p222
        $region98: #{transformer_block.1} parent=63 // pred_check_branch
          %498 = sbr.rel (%p496) target = $region100
        $region99: #{transformer_block.1} parent=63 // pred_region
          %499 = dma.done [#allocation15], 16
        $region100: #{transformer_block.1} parent=63 // pred_fallthru
          _
        // Predicated region
        $region101: #{transformer_block.1} parent=63 // pred_check
          %p500 = pneg %p243
        $region102: #{transformer_block.1} parent=63 // pred_check_branch
          %502 = sbr.rel (%p500) target = $region104
        $region103: #{transformer_block.1} parent=63 // pred_region
          %503 = dma.done [#allocation18], 4096
        $region104: #{transformer_block.1} parent=63 // pred_fallthru
          _
        // Predicated region
        $region105: #{transformer_block.1} parent=63 // pred_check
          %p504 = pneg %p264
        $region106: #{transformer_block.1} parent=63 // pred_check_branch
          %506 = sbr.rel (%p504) target = $region108
        $region107: #{transformer_block.1} parent=63 // pred_region
          %507 = dma.done [#allocation18], 2048
        $region108: #{transformer_block.1} parent=63 // pred_fallthru
          _
        %s508 = sand.u32 %s41, 1
        %s509 = scalar_lea.sflag [#allocation3], %s508
        %s510 = sand.u32 %s41, 1
        %s511 = smul.addr %s510, 128
        %s512 = scalar_lea.vmem [#allocation2], %s511
        %p513 = pneg %p54
        %p514 = pneg %p51
        %p515 = pneg %p75
        %p516 = pneg %p72
        %p517 = pneg %p96
        %p518 = pneg %p93
        %p519 = pneg %p117
        %p520 = pneg %p114
        %p521 = pneg %p138
        %p522 = pneg %p135
        %p523 = pneg %p159
        %p524 = pneg %p156
        %p525 = pneg %p180
        %p526 = pneg %p177
        %p527 = pneg %p201
        %p528 = pneg %p198
        %p529 = pneg %p222
        %p530 = pneg %p219
        %p531 = pneg %p243
        %p532 = pneg %p240
        %p533 = pneg %p264
        %p534 = pneg %p261
        %p535 = pneg %p290
        %p536 = pneg %p287
        %s537 = sand.u32 %s277, 1
        %s538 = scalar_lea.sflag [#allocation4], %s537
        %s539 = sand.u32 %s277, 1
        %s540 = smul.addr %s539, 128
        %s541 = scalar_lea.vmem [#allocation20], %s540
        %v543 = vld [vmem:[%s463] sm:$0xff]
        %v544 = vld [vmem:[%s463 + $0x8] sm:$0xff]
        %v545 = vld [vmem:[%s463 + $0x10] sm:$0xff]
        %v546 = vld [vmem:[%s463 + $0x18] sm:$0xff]
        %v547 = vld [vmem:[%s463 + $0x20] sm:$0xff]
        %v548 = vld [vmem:[%s463 + $0x28] sm:$0xff]
        %v549 = vld [vmem:[%s463 + $0x30] sm:$0xff]
        %v550 = vld [vmem:[%s463 + $0x38] sm:$0xff]
        %v551 = vld [vmem:[%s463 + $0x40] sm:$0xff]
        %v552 = vld [vmem:[%s463 + $0x48] sm:$0xff]
        %v553 = vld [vmem:[%s463 + $0x50] sm:$0xff]
        %v554 = vld [vmem:[%s463 + $0x58] sm:$0xff]
        %v555 = vld [vmem:[%s463 + $0x60] sm:$0xff]
        %v556 = vld [vmem:[%s463 + $0x68] sm:$0xff]
        %v557 = vld [vmem:[%s463 + $0x70] sm:$0xff]
        %v558 = vld [vmem:[%s463 + $0x78] sm:$0xff]
        %v559 = vld [vmem:[#allocation5] sm:$0x1]
        %v560 = vmul.f32 %v543, %v543
        %v561 = vmul.f32 %v544, %v544
        %v562 = vmul.f32 %v545, %v545
        %v563 = vmul.f32 %v546, %v546
        %v564 = vmul.f32 %v547, %v547
        %v565 = vmul.f32 %v548, %v548
        %v566 = vmul.f32 %v549, %v549
        %v567 = vmul.f32 %v550, %v550
        %v568 = vmul.f32 %v551, %v551
        %v569 = vmul.f32 %v552, %v552
        %v570 = vmul.f32 %v553, %v553
        %v571 = vmul.f32 %v554, %v554
        %v572 = vmul.f32 %v555, %v555
        %v573 = vmul.f32 %v556, %v556
        %v574 = vmul.f32 %v557, %v557
        %v575 = vmul.f32 %v558, %v558
        %576 = vadd.xlane.f32.xlu0 %v560
        %v577 = vpop.xlane.xlu0 %576
        %578 = vadd.xlane.f32.xlu0 %v561
        %v579 = vpop.xlane.xlu0 %578
        %580 = vadd.xlane.f32.xlu0 %v562
        %v581 = vpop.xlane.xlu0 %580
        %582 = vadd.xlane.f32.xlu0 %v563
        %v583 = vpop.xlane.xlu0 %582
        %584 = vadd.xlane.f32.xlu0 %v564
        %v585 = vpop.xlane.xlu0 %584
        %586 = vadd.xlane.f32.xlu0 %v565
        %v587 = vpop.xlane.xlu0 %586
        %588 = vadd.xlane.f32.xlu0 %v566
        %v589 = vpop.xlane.xlu0 %588
        %590 = vadd.xlane.f32.xlu0 %v567
        %v591 = vpop.xlane.xlu0 %590
        %592 = vadd.xlane.f32.xlu0 %v568
        %v593 = vpop.xlane.xlu0 %592
        %594 = vadd.xlane.f32.xlu0 %v569
        %v595 = vpop.xlane.xlu0 %594
        %596 = vadd.xlane.f32.xlu0 %v570
        %v597 = vpop.xlane.xlu0 %596
        %598 = vadd.xlane.f32.xlu0 %v571
        %v599 = vpop.xlane.xlu0 %598
        %600 = vadd.xlane.f32.xlu0 %v572
        %v601 = vpop.xlane.xlu0 %600
        %602 = vadd.xlane.f32.xlu0 %v573
        %v603 = vpop.xlane.xlu0 %602
        %604 = vadd.xlane.f32.xlu0 %v574
        %v605 = vpop.xlane.xlu0 %604
        %606 = vadd.xlane.f32.xlu0 %v575
        %v607 = vpop.xlane.xlu0 %606
        %v608 = vrcp.pop 128.0
        %v609 = vmul.f32 %v577, %v608
        %v610 = vmul.f32 %v579, %v608
        %v611 = vmul.f32 %v581, %v608
        %v612 = vmul.f32 %v583, %v608
        %v613 = vmul.f32 %v585, %v608
        %v614 = vmul.f32 %v587, %v608
        %v615 = vmul.f32 %v589, %v608
        %v616 = vmul.f32 %v591, %v608
        %v617 = vmul.f32 %v593, %v608
        %v618 = vmul.f32 %v595, %v608
        %v619 = vmul.f32 %v597, %v608
        %v620 = vmul.f32 %v599, %v608
        %v621 = vmul.f32 %v601, %v608
        %v622 = vmul.f32 %v603, %v608
        %v623 = vmul.f32 %v605, %v608
        %v624 = vmul.f32 %v607, %v608
        %v625 = vadd.f32 %v609, 1e-06
        %v626 = vadd.f32 %v610, 1e-06
        %v627 = vadd.f32 %v611, 1e-06
        %v628 = vadd.f32 %v612, 1e-06
        %v629 = vadd.f32 %v613, 1e-06
        %v630 = vadd.f32 %v614, 1e-06
        %v631 = vadd.f32 %v615, 1e-06
        %v632 = vadd.f32 %v616, 1e-06
        %v633 = vadd.f32 %v617, 1e-06
        %v634 = vadd.f32 %v618, 1e-06
        %v635 = vadd.f32 %v619, 1e-06
        %v636 = vadd.f32 %v620, 1e-06
        %v637 = vadd.f32 %v621, 1e-06
        %v638 = vadd.f32 %v622, 1e-06
        %v639 = vadd.f32 %v623, 1e-06
        %v640 = vadd.f32 %v624, 1e-06
        %v641 = vrsqrt.pop %v625
        %v642 = vrsqrt.pop %v626
        %v643 = vrsqrt.pop %v627
        %v644 = vrsqrt.pop %v628
        %v645 = vrsqrt.pop %v629
        %v646 = vrsqrt.pop %v630
        %v647 = vrsqrt.pop %v631
        %v648 = vrsqrt.pop %v632
        %v649 = vrsqrt.pop %v633
        %v650 = vrsqrt.pop %v634
        %v651 = vrsqrt.pop %v635
        %v652 = vrsqrt.pop %v636
        %v653 = vrsqrt.pop %v637
        %v654 = vrsqrt.pop %v638
        %v655 = vrsqrt.pop %v639
        %v656 = vrsqrt.pop %v640
        %v657 = vmul.f32 %v543, %v641
        %v658 = vmul.f32 %v544, %v642
        %v659 = vmul.f32 %v545, %v643
        %v660 = vmul.f32 %v546, %v644
        %v661 = vmul.f32 %v547, %v645
        %v662 = vmul.f32 %v548, %v646
        %v663 = vmul.f32 %v549, %v647
        %v664 = vmul.f32 %v550, %v648
        %v665 = vmul.f32 %v551, %v649
        %v666 = vmul.f32 %v552, %v650
        %v667 = vmul.f32 %v553, %v651
        %v668 = vmul.f32 %v554, %v652
        %v669 = vmul.f32 %v555, %v653
        %v670 = vmul.f32 %v556, %v654
        %v671 = vmul.f32 %v557, %v655
        %v672 = vmul.f32 %v558, %v656
        %v674 = vlaneseq
        %v675 = vshrl.u32 %v674, 7
        %v676 = vsub.s32 0, %v675
        %v677 = vrot.slane %v559, %v676
        %v679 = vmul.f32 %v657, %v677
        %v680 = vmul.f32 %v658, %v677
        %v681 = vmul.f32 %v659, %v677
        %v682 = vmul.f32 %v660, %v677
        %v683 = vmul.f32 %v661, %v677
        %v684 = vmul.f32 %v662, %v677
        %v685 = vmul.f32 %v663, %v677
        %v686 = vmul.f32 %v664, %v677
        %v687 = vmul.f32 %v665, %v677
        %v688 = vmul.f32 %v666, %v677
        %v689 = vmul.f32 %v667, %v677
        %v690 = vmul.f32 %v668, %v677
        %v691 = vmul.f32 %v669, %v677
        %v692 = vmul.f32 %v670, %v677
        %v693 = vmul.f32 %v671, %v677
        %v694 = vmul.f32 %v672, %v677
        %v695 = vpack.c.bf16 %v680, %v679
        %v696 = vpack.c.bf16 %v682, %v681
        %v697 = vpack.c.bf16 %v684, %v683
        %v698 = vpack.c.bf16 %v686, %v685
        %v699 = vpack.c.bf16 %v688, %v687
        %v700 = vpack.c.bf16 %v690, %v689
        %v701 = vpack.c.bf16 %v692, %v691
        %v702 = vpack.c.bf16 %v694, %v693
        %v703 = vld [vmem:[#allocation7] sm:$0xff]
        %v704 = vld [vmem:[#allocation7 + $0x8] sm:$0xf]
        %v705 = vld [vmem:[#allocation7 + $0xc] sm:$0xff]
        %v706 = vld [vmem:[#allocation7 + $0x14] sm:$0xf]
        %v707 = vld [vmem:[#allocation7 + $0x18] sm:$0xff]
        %v708 = vld [vmem:[#allocation7 + $0x20] sm:$0xf]
        %v709 = vld [vmem:[#allocation7 + $0x24] sm:$0xff]
        %v710 = vld [vmem:[#allocation7 + $0x2c] sm:$0xf]
        %v711 = vld [vmem:[#allocation7 + $0x30] sm:$0xff]
        %v712 = vld [vmem:[#allocation7 + $0x38] sm:$0xf]
        %v713 = vld [vmem:[#allocation7 + $0x3c] sm:$0xff]
        %v714 = vld [vmem:[#allocation7 + $0x44] sm:$0xf]
        %v715 = vld [vmem:[#allocation7 + $0x48] sm:$0xff]
        %v716 = vld [vmem:[#allocation7 + $0x50] sm:$0xf]
        %v717 = vld [vmem:[#allocation7 + $0x54] sm:$0xff]
        %v718 = vld [vmem:[#allocation7 + $0x5c] sm:$0xf]
        %v719 = vld [vmem:[#allocation7 + $0x60] sm:$0xff]
        %v720 = vld [vmem:[#allocation7 + $0x68] sm:$0xf]
        %v721 = vld [vmem:[#allocation7 + $0x6c] sm:$0xff]
        %v722 = vld [vmem:[#allocation7 + $0x74] sm:$0xf]
        %v723 = vld [vmem:[#allocation7 + $0x78] sm:$0xff]
        %v724 = vld [vmem:[#allocation7 + $0x80] sm:$0xf]
        %v725 = vld [vmem:[#allocation7 + $0x84] sm:$0xff]
        %v726 = vld [vmem:[#allocation7 + $0x8c] sm:$0xf]
        %v727 = vld [vmem:[#allocation7 + $0x90] sm:$0xff]
        %v728 = vld [vmem:[#allocation7 + $0x98] sm:$0xf]
        %v729 = vld [vmem:[#allocation7 + $0x9c] sm:$0xff]
        %v730 = vld [vmem:[#allocation7 + $0xa4] sm:$0xf]
        %v731 = vld [vmem:[#allocation7 + $0xa8] sm:$0xff]
        %v732 = vld [vmem:[#allocation7 + $0xb0] sm:$0xf]
        %v733 = vld [vmem:[#allocation7 + $0xb4] sm:$0xff]
        %v734 = vld [vmem:[#allocation7 + $0xbc] sm:$0xf]
        %v767 = vunpack.c.l.b16 %v703
        %v768 = vunpack.c.h.b16 %v703
        %v769 = vunpack.c.l.b16 %v704
        %v770 = vunpack.c.l.b16 %v705
        %v771 = vunpack.c.h.b16 %v705
        %v772 = vunpack.c.l.b16 %v706
        %v773 = vunpack.c.l.b16 %v707
        %v774 = vunpack.c.h.b16 %v707
        %v775 = vunpack.c.l.b16 %v708
        %v776 = vunpack.c.l.b16 %v709
        %v777 = vunpack.c.h.b16 %v709
        %v778 = vunpack.c.l.b16 %v710
        %v779 = vunpack.c.l.b16 %v711
        %v780 = vunpack.c.h.b16 %v711
        %v781 = vunpack.c.l.b16 %v712
        %v782 = vunpack.c.l.b16 %v713
        %v783 = vunpack.c.h.b16 %v713
        %v784 = vunpack.c.l.b16 %v714
        %v785 = vunpack.c.l.b16 %v715
        %v786 = vunpack.c.h.b16 %v715
        %v787 = vunpack.c.l.b16 %v716
        %v788 = vunpack.c.l.b16 %v717
        %v789 = vunpack.c.h.b16 %v717
        %v790 = vunpack.c.l.b16 %v718
        %v791 = vunpack.c.l.b16 %v719
        %v792 = vunpack.c.h.b16 %v719
        %v793 = vunpack.c.l.b16 %v720
        %v794 = vunpack.c.l.b16 %v721
        %v795 = vunpack.c.h.b16 %v721
        %v796 = vunpack.c.l.b16 %v722
        %v797 = vunpack.c.l.b16 %v723
        %v798 = vunpack.c.h.b16 %v723
        %v799 = vunpack.c.l.b16 %v724
        %v800 = vunpack.c.l.b16 %v725
        %v801 = vunpack.c.h.b16 %v725
        %v802 = vunpack.c.l.b16 %v726
        %v803 = vunpack.c.l.b16 %v727
        %v804 = vunpack.c.h.b16 %v727
        %v805 = vunpack.c.l.b16 %v728
        %v806 = vunpack.c.l.b16 %v729
        %v807 = vunpack.c.h.b16 %v729
        %v808 = vunpack.c.l.b16 %v730
        %v809 = vunpack.c.l.b16 %v731
        %v810 = vunpack.c.h.b16 %v731
        %v811 = vunpack.c.l.b16 %v732
        %v812 = vunpack.c.l.b16 %v733
        %v813 = vunpack.c.h.b16 %v733
        %v814 = vunpack.c.l.b16 %v734
        %v815 = vpack.c.b16 %v770, %v767
        %v816 = vpack.c.b16 %v771, %v768
        %v817 = vpack.c.b16 %v772, %v769
        %v818 = vpack.c.b16 %v776, %v773
        %v819 = vpack.c.b16 %v777, %v774
        %v820 = vpack.c.b16 %v778, %v775
        %v821 = vpack.c.b16 %v782, %v779
        %v822 = vpack.c.b16 %v783, %v780
        %v823 = vpack.c.b16 %v784, %v781
        %v824 = vpack.c.b16 %v788, %v785
        %v825 = vpack.c.b16 %v789, %v786
        %v826 = vpack.c.b16 %v790, %v787
        %v827 = vpack.c.b16 %v794, %v791
        %v828 = vpack.c.b16 %v795, %v792
        %v829 = vpack.c.b16 %v796, %v793
        %v830 = vpack.c.b16 %v800, %v797
        %v831 = vpack.c.b16 %v801, %v798
        %v832 = vpack.c.b16 %v802, %v799
        %v833 = vpack.c.b16 %v806, %v803
        %v834 = vpack.c.b16 %v807, %v804
        %v835 = vpack.c.b16 %v808, %v805
        %v836 = vpack.c.b16 %v812, %v809
        %v837 = vpack.c.b16 %v813, %v810
        %v838 = vpack.c.b16 %v814, %v811
        %863 = vmatprep.subr.bf16.mxu0 %v816
        %864 = vmatpush1.bf16.msra.mxu0 %v815
        %865 = vmatprep.subr.bf16.mxu0 %v819
        %866 = vmatpush1.bf16.msra.mxu0 %v818
        %867 = vmatprep.subr.bf16.mxu0 %v822
        %868 = vmatpush1.bf16.msra.mxu0 %v821
        %869 = vmatprep.subr.bf16.mxu0 %v825
        %870 = vmatpush1.bf16.msra.mxu0 %v824
        %871 = vmatprep.subr.bf16.mxu0 %v828
        %872 = vmatpush1.bf16.msra.mxu0 %v827
        %873 = vmatprep.subr.bf16.mxu0 %v831
        %874 = vmatpush1.bf16.msra.mxu0 %v830
        %875 = vmatprep.subr.bf16.mxu0 %v834
        %876 = vmatpush1.bf16.msra.mxu0 %v833
        %877 = vmatprep.subr.bf16.mxu0 %v837
        %878 = vmatpush1.bf16.msra.mxu0 %v836
        %879 = vmatprep.subr.bf16.mxu0 0
        %880 = vmatpush1.bf16.msra.mxu0 0
        %881 = vmatprep.subr.bf16.mxu0 0
        %882 = vmatpush1.bf16.msra.mxu0 0
        %883 = vmatprep.subr.bf16.mxu0 0
        %884 = vmatpush1.bf16.msra.mxu0 0
        %885 = vmatprep.subr.bf16.mxu0 0
        %886 = vmatpush1.bf16.msra.mxu0 0
        %887 = vmatprep.subr.bf16.mxu0 0
        %888 = vmatpush1.bf16.msra.mxu0 0
        %889 = vmatprep.subr.bf16.mxu0 0
        %890 = vmatpush1.bf16.msra.mxu0 0
        %891 = vmatprep.subr.bf16.mxu0 0
        %892 = vmatpush1.bf16.msra.mxu0 0
        %893 = vmatprep.subr.bf16.mxu0 0
        %894 = vmatpush1.bf16.msra.mxu0 0
        %895 = vmatprep.mubr.bf16.mxu0 0
        %896 = vmatmul.mubr.bf16.gmra.mrb[0].mxu0 %v695
        %v897 = vpop.f32.mrb[0].mxu0
        %v898 = vadd.f32 0.0, %v897
        %v899 = vpop.f32.mrb[0].mxu0
        %v900 = vadd.f32 0.0, %v899
        %v901 = vpop.f32.mrb[0].mxu0
        %v902 = vadd.f32 0.0, %v901
        %v903 = vpop.f32.mrb[0].mxu0
        %v904 = vadd.f32 0.0, %v903
        %905 = vmatprep.mubr.bf16.mxu0 0
        %906 = vmatmul.mubr.bf16.gmra.mrb[0].mxu0 %v696
        %v907 = vpop.f32.mrb[0].mxu0
        %v908 = vadd.f32 0.0, %v907
        %v909 = vpop.f32.mrb[0].mxu0
        %v910 = vadd.f32 0.0, %v909
        %v911 = vpop.f32.mrb[0].mxu0
        %v912 = vadd.f32 0.0, %v911
        %v913 = vpop.f32.mrb[0].mxu0
        %v914 = vadd.f32 0.0, %v913
        %915 = vmatprep.mubr.bf16.mxu0 0
        %916 = vmatmul.mubr.bf16.gmra.mrb[0].mxu0 %v697
        %v917 = vpop.f32.mrb[0].mxu0
        %v918 = vadd.f32 0.0, %v917
        %v919 = vpop.f32.mrb[0].mxu0
        %v920 = vadd.f32 0.0, %v919
        %v921 = vpop.f32.mrb[0].mxu0
        %v922 = vadd.f32 0.0, %v921
        %v923 = vpop.f32.mrb[0].mxu0
        %v924 = vadd.f32 0.0, %v923
        %925 = vmatprep.mubr.bf16.mxu0 0
        %926 = vmatmul.mubr.bf16.gmra.mrb[0].mxu0 %v698
        %v927 = vpop.f32.mrb[0].mxu0
        %v928 = vadd.f32 0.0, %v927
        %v929 = vpop.f32.mrb[0].mxu0
        %v930 = vadd.f32 0.0, %v929
        %v931 = vpop.f32.mrb[0].mxu0
        %v932 = vadd.f32 0.0, %v931
        %v933 = vpop.f32.mrb[0].mxu0
        %v934 = vadd.f32 0.0, %v933
        %935 = vmatprep.mubr.bf16.mxu0 0
        %936 = vmatmul.mubr.bf16.gmra.mrb[0].mxu0 %v699
        %v937 = vpop.f32.mrb[0].mxu0
        %v938 = vadd.f32 0.0, %v937
        %v939 = vpop.f32.mrb[0].mxu0
        %v940 = vadd.f32 0.0, %v939
        %v941 = vpop.f32.mrb[0].mxu0
        %v942 = vadd.f32 0.0, %v941
        %v943 = vpop.f32.mrb[0].mxu0
        %v944 = vadd.f32 0.0, %v943
        %945 = vmatprep.mubr.bf16.mxu0 0
        %946 = vmatmul.mubr.bf16.gmra.mrb[0].mxu0 %v700
        %v947 = vpop.f32.mrb[0].mxu0
        %v948 = vadd.f32 0.0, %v947
        %v949 = vpop.f32.mrb[0].mxu0
        %v950 = vadd.f32 0.0, %v949
        %v951 = vpop.f32.mrb[0].mxu0
        %v952 = vadd.f32 0.0, %v951
        %v953 = vpop.f32.mrb[0].mxu0
        %v954 = vadd.f32 0.0, %v953
        %955 = vmatprep.mubr.bf16.mxu0 0
        %956 = vmatmul.mubr.bf16.gmra.mrb[0].mxu0 %v701
        %v957 = vpop.f32.mrb[0].mxu0
        %v958 = vadd.f32 0.0, %v957
        %v959 = vpop.f32.mrb[0].mxu0
        %v960 = vadd.f32 0.0, %v959
        %v961 = vpop.f32.mrb[0].mxu0
        %v962 = vadd.f32 0.0, %v961
        %v963 = vpop.f32.mrb[0].mxu0
        %v964 = vadd.f32 0.0, %v963
        %965 = vmatprep.mubr.bf16.mxu0 0
        %966 = vmatmul.mubr.bf16.gmra.mrb[0].mxu0 %v702
        %v967 = vpop.f32.mrb[0].mxu0
        %v968 = vadd.f32 0.0, %v967
        %v969 = vpop.f32.mrb[0].mxu0
        %v970 = vadd.f32 0.0, %v969
        %v971 = vpop.f32.mrb[0].mxu0
        %v972 = vadd.f32 0.0, %v971
        %v973 = vpop.f32.mrb[0].mxu0
        %v974 = vadd.f32 0.0, %v973
        %975 = vdwg.mxu0
        %976 = vmatprep.subr.bf16.mxu0 0
        %977 = vmatpush1.bf16.msra.mxu0 %v817
        %978 = vmatprep.subr.bf16.mxu0 0
        %979 = vmatpush1.bf16.msra.mxu0 %v820
        %980 = vmatprep.subr.bf16.mxu0 0
        %981 = vmatpush1.bf16.msra.mxu0 %v823
        %982 = vmatprep.subr.bf16.mxu0 0
        %983 = vmatpush1.bf16.msra.mxu0 %v826
        %984 = vmatprep.subr.bf16.mxu0 0
        %985 = vmatpush1.bf16.msra.mxu0 %v829
        %986 = vmatprep.subr.bf16.mxu0 0
        %987 = vmatpush1.bf16.msra.mxu0 %v832
        %988 = vmatprep.subr.bf16.mxu0 0
        %989 = vmatpush1.bf16.msra.mxu0 %v835
        %990 = vmatprep.subr.bf16.mxu0 0
        %991 = vmatpush1.bf16.msra.mxu0 %v838
        %992 = vmatprep.subr.bf16.mxu0 0
        %993 = vmatpush1.bf16.msra.mxu0 0
        %994 = vmatprep.subr.bf16.mxu0 0
        %995 = vmatpush1.bf16.msra.mxu0 0
        %996 = vmatprep.subr.bf16.mxu0 0
        %997 = vmatpush1.bf16.msra.mxu0 0
        %998 = vmatprep.subr.bf16.mxu0 0
        %999 = vmatpush1.bf16.msra.mxu0 0
        %1000 = vmatprep.subr.bf16.mxu0 0
        %1001 = vmatpush1.bf16.msra.mxu0 0
        %1002 = vmatprep.subr.bf16.mxu0 0
        %1003 = vmatpush1.bf16.msra.mxu0 0
        %1004 = vmatprep.subr.bf16.mxu0 0
        %1005 = vmatpush1.bf16.msra.mxu0 0
        %1006 = vmatprep.subr.bf16.mxu0 0
        %1007 = vmatpush1.bf16.msra.mxu0 0
        %1008 = vmatprep.mubr.bf16.mxu0 0
        %1009 = vmatmul.mubr.bf16.gmra.mrb[0].mxu0 %v695
        %v1010 = vpop.f32.mrb[0].mxu0
        %v1011 = vadd.f32 0.0, %v1010
        %v1012 = vpop.f32.mrb[0].mxu0
        %v1013 = vpop.f32.mrb[0].mxu0
        %v1014 = vadd.f32 0.0, %v1013
        %v1015 = vpop.f32.mrb[0].mxu0
        %1016 = vmatprep.mubr.bf16.mxu0 0
        %1017 = vmatmul.mubr.bf16.gmra.mrb[0].mxu0 %v696
        %v1018 = vpop.f32.mrb[0].mxu0
        %v1019 = vadd.f32 0.0, %v1018
        %v1020 = vpop.f32.mrb[0].mxu0
        %v1021 = vpop.f32.mrb[0].mxu0
        %v1022 = vadd.f32 0.0, %v1021
        %v1023 = vpop.f32.mrb[0].mxu0
        %1024 = vmatprep.mubr.bf16.mxu0 0
        %1025 = vmatmul.mubr.bf16.gmra.mrb[0].mxu0 %v697
        %v1026 = vpop.f32.mrb[0].mxu0
        %v1027 = vadd.f32 0.0, %v1026
        %v1028 = vpop.f32.mrb[0].mxu0
        %v1029 = vpop.f32.mrb[0].mxu0
        %v1030 = vadd.f32 0.0, %v1029
        %v1031 = vpop.f32.mrb[0].mxu0
        %1032 = vmatprep.mubr.bf16.mxu0 0
        %1033 = vmatmul.mubr.bf16.gmra.mrb[0].mxu0 %v698
        %v1034 = vpop.f32.mrb[0].mxu0
        %v1035 = vadd.f32 0.0, %v1034
        %v1036 = vpop.f32.mrb[0].mxu0
        %v1037 = vpop.f32.mrb[0].mxu0
        %v1038 = vadd.f32 0.0, %v1037
        %v1039 = vpop.f32.mrb[0].mxu0
        %1040 = vmatprep.mubr.bf16.mxu0 0
        %1041 = vmatmul.mubr.bf16.gmra.mrb[0].mxu0 %v699
        %v1042 = vpop.f32.mrb[0].mxu0
        %v1043 = vadd.f32 0.0, %v1042
        %v1044 = vpop.f32.mrb[0].mxu0
        %v1045 = vpop.f32.mrb[0].mxu0
        %v1046 = vadd.f32 0.0, %v1045
        %v1047 = vpop.f32.mrb[0].mxu0
        %1048 = vmatprep.mubr.bf16.mxu0 0
        %1049 = vmatmul.mubr.bf16.gmra.mrb[0].mxu0 %v700
        %v1050 = vpop.f32.mrb[0].mxu0
        %v1051 = vadd.f32 0.0, %v1050
        %v1052 = vpop.f32.mrb[0].mxu0
        %v1053 = vpop.f32.mrb[0].mxu0
        %v1054 = vadd.f32 0.0, %v1053
        %v1055 = vpop.f32.mrb[0].mxu0
        %1056 = vmatprep.mubr.bf16.mxu0 0
        %1057 = vmatmul.mubr.bf16.gmra.mrb[0].mxu0 %v701
        %v1058 = vpop.f32.mrb[0].mxu0
        %v1059 = vadd.f32 0.0, %v1058
        %v1060 = vpop.f32.mrb[0].mxu0
        %v1061 = vpop.f32.mrb[0].mxu0
        %v1062 = vadd.f32 0.0, %v1061
        %v1063 = vpop.f32.mrb[0].mxu0
        %1064 = vmatprep.mubr.bf16.mxu0 0
        %1065 = vmatmul.mubr.bf16.gmra.mrb[0].mxu0 %v702
        %v1066 = vpop.f32.mrb[0].mxu0
        %v1067 = vadd.f32 0.0, %v1066
        %v1068 = vpop.f32.mrb[0].mxu0
        %v1069 = vpop.f32.mrb[0].mxu0
        %v1070 = vadd.f32 0.0, %v1069
        %v1071 = vpop.f32.mrb[0].mxu0
        %1072 = vdwg.mxu0
        %v1073 = vld [vmem:[#allocation10] sm:$0x1]
        %v1074 = vmul.f32 %v898, %v898
        %v1075 = vmul.f32 %v902, %v902
        %v1076 = vmul.f32 %v908, %v908
        %v1077 = vmul.f32 %v912, %v912
        %v1078 = vmul.f32 %v918, %v918
        %v1079 = vmul.f32 %v922, %v922
        %v1080 = vmul.f32 %v928, %v928
        %v1081 = vmul.f32 %v932, %v932
        %v1082 = vmul.f32 %v938, %v938
        %v1083 = vmul.f32 %v942, %v942
        %v1084 = vmul.f32 %v948, %v948
        %v1085 = vmul.f32 %v952, %v952
        %v1086 = vmul.f32 %v958, %v958
        %v1087 = vmul.f32 %v962, %v962
        %v1088 = vmul.f32 %v968, %v968
        %v1089 = vmul.f32 %v972, %v972
        %1090 = vadd.xlane.f32.xlu0 %v1074
        %v1091 = vpop.xlane.xlu0 %1090
        %1092 = vadd.xlane.f32.xlu0 %v1075
        %v1093 = vpop.xlane.xlu0 %1092
        %1094 = vadd.xlane.f32.xlu0 %v1076
        %v1095 = vpop.xlane.xlu0 %1094
        %1096 = vadd.xlane.f32.xlu0 %v1077
        %v1097 = vpop.xlane.xlu0 %1096
        %1098 = vadd.xlane.f32.xlu0 %v1078
        %v1099 = vpop.xlane.xlu0 %1098
        %1100 = vadd.xlane.f32.xlu0 %v1079
        %v1101 = vpop.xlane.xlu0 %1100
        %1102 = vadd.xlane.f32.xlu0 %v1080
        %v1103 = vpop.xlane.xlu0 %1102
        %1104 = vadd.xlane.f32.xlu0 %v1081
        %v1105 = vpop.xlane.xlu0 %1104
        %1106 = vadd.xlane.f32.xlu0 %v1082
        %v1107 = vpop.xlane.xlu0 %1106
        %1108 = vadd.xlane.f32.xlu0 %v1083
        %v1109 = vpop.xlane.xlu0 %1108
        %1110 = vadd.xlane.f32.xlu0 %v1084
        %v1111 = vpop.xlane.xlu0 %1110
        %1112 = vadd.xlane.f32.xlu0 %v1085
        %v1113 = vpop.xlane.xlu0 %1112
        %1114 = vadd.xlane.f32.xlu0 %v1086
        %v1115 = vpop.xlane.xlu0 %1114
        %1116 = vadd.xlane.f32.xlu0 %v1087
        %v1117 = vpop.xlane.xlu0 %1116
        %1118 = vadd.xlane.f32.xlu0 %v1088
        %v1119 = vpop.xlane.xlu0 %1118
        %1120 = vadd.xlane.f32.xlu0 %v1089
        %v1121 = vpop.xlane.xlu0 %1120
        %v1122 = vmul.f32 %v1091, %v608
        %v1123 = vmul.f32 %v1093, %v608
        %v1124 = vmul.f32 %v1095, %v608
        %v1125 = vmul.f32 %v1097, %v608
        %v1126 = vmul.f32 %v1099, %v608
        %v1127 = vmul.f32 %v1101, %v608
        %v1128 = vmul.f32 %v1103, %v608
        %v1129 = vmul.f32 %v1105, %v608
        %v1130 = vmul.f32 %v1107, %v608
        %v1131 = vmul.f32 %v1109, %v608
        %v1132 = vmul.f32 %v1111, %v608
        %v1133 = vmul.f32 %v1113, %v608
        %v1134 = vmul.f32 %v1115, %v608
        %v1135 = vmul.f32 %v1117, %v608
        %v1136 = vmul.f32 %v1119, %v608
        %v1137 = vmul.f32 %v1121, %v608
        %v1138 = vadd.f32 %v1122, 1e-06
        %v1139 = vadd.f32 %v1123, 1e-06
        %v1140 = vadd.f32 %v1124, 1e-06
        %v1141 = vadd.f32 %v1125, 1e-06
        %v1142 = vadd.f32 %v1126, 1e-06
        %v1143 = vadd.f32 %v1127, 1e-06
        %v1144 = vadd.f32 %v1128, 1e-06
        %v1145 = vadd.f32 %v1129, 1e-06
        %v1146 = vadd.f32 %v1130, 1e-06
        %v1147 = vadd.f32 %v1131, 1e-06
        %v1148 = vadd.f32 %v1132, 1e-06
        %v1149 = vadd.f32 %v1133, 1e-06
        %v1150 = vadd.f32 %v1134, 1e-06
        %v1151 = vadd.f32 %v1135, 1e-06
        %v1152 = vadd.f32 %v1136, 1e-06
        %v1153 = vadd.f32 %v1137, 1e-06
        %v1154 = vrsqrt.pop %v1138
        %v1155 = vrsqrt.pop %v1139
        %v1156 = vrsqrt.pop %v1140
        %v1157 = vrsqrt.pop %v1141
        %v1158 = vrsqrt.pop %v1142
        %v1159 = vrsqrt.pop %v1143
        %v1160 = vrsqrt.pop %v1144
        %v1161 = vrsqrt.pop %v1145
        %v1162 = vrsqrt.pop %v1146
        %v1163 = vrsqrt.pop %v1147
        %v1164 = vrsqrt.pop %v1148
        %v1165 = vrsqrt.pop %v1149
        %v1166 = vrsqrt.pop %v1150
        %v1167 = vrsqrt.pop %v1151
        %v1168 = vrsqrt.pop %v1152
        %v1169 = vrsqrt.pop %v1153
        %v1170 = vmul.f32 %v898, %v1154
        %v1171 = vmul.f32 %v902, %v1155
        %v1172 = vmul.f32 %v908, %v1156
        %v1173 = vmul.f32 %v912, %v1157
        %v1174 = vmul.f32 %v918, %v1158
        %v1175 = vmul.f32 %v922, %v1159
        %v1176 = vmul.f32 %v928, %v1160
        %v1177 = vmul.f32 %v932, %v1161
        %v1178 = vmul.f32 %v938, %v1162
        %v1179 = vmul.f32 %v942, %v1163
        %v1180 = vmul.f32 %v948, %v1164
        %v1181 = vmul.f32 %v952, %v1165
        %v1182 = vmul.f32 %v958, %v1166
        %v1183 = vmul.f32 %v962, %v1167
        %v1184 = vmul.f32 %v968, %v1168
        %v1185 = vmul.f32 %v972, %v1169
        %v1187 = vlaneseq
        %v1188 = vshrl.u32 %v1187, 7
        %v1189 = vsub.s32 0, %v1188
        %v1190 = vrot.slane %v1073, %v1189
        %v1192 = vmul.f32 %v1170, %v1190
        %v1193 = vmul.f32 %v1171, %v1190
        %v1194 = vmul.f32 %v1172, %v1190
        %v1195 = vmul.f32 %v1173, %v1190
        %v1196 = vmul.f32 %v1174, %v1190
        %v1197 = vmul.f32 %v1175, %v1190
        %v1198 = vmul.f32 %v1176, %v1190
        %v1199 = vmul.f32 %v1177, %v1190
        %v1200 = vmul.f32 %v1178, %v1190
        %v1201 = vmul.f32 %v1179, %v1190
        %v1202 = vmul.f32 %v1180, %v1190
        %v1203 = vmul.f32 %v1181, %v1190
        %v1204 = vmul.f32 %v1182, %v1190
        %v1205 = vmul.f32 %v1183, %v1190
        %v1206 = vmul.f32 %v1184, %v1190
        %v1207 = vmul.f32 %v1185, %v1190
        %v1208 = vld [vmem:[#allocation11] sm:$0x1]
        %v1209 = vmul.f32 %v900, %v900
        %v1210 = vmul.f32 %v904, %v904
        %v1211 = vmul.f32 %v910, %v910
        %v1212 = vmul.f32 %v914, %v914
        %v1213 = vmul.f32 %v920, %v920
        %v1214 = vmul.f32 %v924, %v924
        %v1215 = vmul.f32 %v930, %v930
        %v1216 = vmul.f32 %v934, %v934
        %v1217 = vmul.f32 %v940, %v940
        %v1218 = vmul.f32 %v944, %v944
        %v1219 = vmul.f32 %v950, %v950
        %v1220 = vmul.f32 %v954, %v954
        %v1221 = vmul.f32 %v960, %v960
        %v1222 = vmul.f32 %v964, %v964
        %v1223 = vmul.f32 %v970, %v970
        %v1224 = vmul.f32 %v974, %v974
        %1225 = vadd.xlane.f32.xlu0 %v1209
        %v1226 = vpop.xlane.xlu0 %1225
        %1227 = vadd.xlane.f32.xlu0 %v1210
        %v1228 = vpop.xlane.xlu0 %1227
        %1229 = vadd.xlane.f32.xlu0 %v1211
        %v1230 = vpop.xlane.xlu0 %1229
        %1231 = vadd.xlane.f32.xlu0 %v1212
        %v1232 = vpop.xlane.xlu0 %1231
        %1233 = vadd.xlane.f32.xlu0 %v1213
        %v1234 = vpop.xlane.xlu0 %1233
        %1235 = vadd.xlane.f32.xlu0 %v1214
        %v1236 = vpop.xlane.xlu0 %1235
        %1237 = vadd.xlane.f32.xlu0 %v1215
        %v1238 = vpop.xlane.xlu0 %1237
        %1239 = vadd.xlane.f32.xlu0 %v1216
        %v1240 = vpop.xlane.xlu0 %1239
        %1241 = vadd.xlane.f32.xlu0 %v1217
        %v1242 = vpop.xlane.xlu0 %1241
        %1243 = vadd.xlane.f32.xlu0 %v1218
        %v1244 = vpop.xlane.xlu0 %1243
        %1245 = vadd.xlane.f32.xlu0 %v1219
        %v1246 = vpop.xlane.xlu0 %1245
        %1247 = vadd.xlane.f32.xlu0 %v1220
        %v1248 = vpop.xlane.xlu0 %1247
        %1249 = vadd.xlane.f32.xlu0 %v1221
        %v1250 = vpop.xlane.xlu0 %1249
        %1251 = vadd.xlane.f32.xlu0 %v1222
        %v1252 = vpop.xlane.xlu0 %1251
        %1253 = vadd.xlane.f32.xlu0 %v1223
        %v1254 = vpop.xlane.xlu0 %1253
        %1255 = vadd.xlane.f32.xlu0 %v1224
        %v1256 = vpop.xlane.xlu0 %1255
        %v1257 = vmul.f32 %v1226, %v608
        %v1258 = vmul.f32 %v1228, %v608
        %v1259 = vmul.f32 %v1230, %v608
        %v1260 = vmul.f32 %v1232, %v608
        %v1261 = vmul.f32 %v1234, %v608
        %v1262 = vmul.f32 %v1236, %v608
        %v1263 = vmul.f32 %v1238, %v608
        %v1264 = vmul.f32 %v1240, %v608
        %v1265 = vmul.f32 %v1242, %v608
        %v1266 = vmul.f32 %v1244, %v608
        %v1267 = vmul.f32 %v1246, %v608
        %v1268 = vmul.f32 %v1248, %v608
        %v1269 = vmul.f32 %v1250, %v608
        %v1270 = vmul.f32 %v1252, %v608
        %v1271 = vmul.f32 %v1254, %v608
        %v1272 = vmul.f32 %v1256, %v608
        %v1273 = vadd.f32 %v1257, 1e-06
        %v1274 = vadd.f32 %v1258, 1e-06
        %v1275 = vadd.f32 %v1259, 1e-06
        %v1276 = vadd.f32 %v1260, 1e-06
        %v1277 = vadd.f32 %v1261, 1e-06
        %v1278 = vadd.f32 %v1262, 1e-06
        %v1279 = vadd.f32 %v1263, 1e-06
        %v1280 = vadd.f32 %v1264, 1e-06
        %v1281 = vadd.f32 %v1265, 1e-06
        %v1282 = vadd.f32 %v1266, 1e-06
        %v1283 = vadd.f32 %v1267, 1e-06
        %v1284 = vadd.f32 %v1268, 1e-06
        %v1285 = vadd.f32 %v1269, 1e-06
        %v1286 = vadd.f32 %v1270, 1e-06
        %v1287 = vadd.f32 %v1271, 1e-06
        %v1288 = vadd.f32 %v1272, 1e-06
        %v1289 = vrsqrt.pop %v1273
        %v1290 = vrsqrt.pop %v1274
        %v1291 = vrsqrt.pop %v1275
        %v1292 = vrsqrt.pop %v1276
        %v1293 = vrsqrt.pop %v1277
        %v1294 = vrsqrt.pop %v1278
        %v1295 = vrsqrt.pop %v1279
        %v1296 = vrsqrt.pop %v1280
        %v1297 = vrsqrt.pop %v1281
        %v1298 = vrsqrt.pop %v1282
        %v1299 = vrsqrt.pop %v1283
        %v1300 = vrsqrt.pop %v1284
        %v1301 = vrsqrt.pop %v1285
        %v1302 = vrsqrt.pop %v1286
        %v1303 = vrsqrt.pop %v1287
        %v1304 = vrsqrt.pop %v1288
        %v1305 = vmul.f32 %v900, %v1289
        %v1306 = vmul.f32 %v904, %v1290
        %v1307 = vmul.f32 %v910, %v1291
        %v1308 = vmul.f32 %v914, %v1292
        %v1309 = vmul.f32 %v920, %v1293
        %v1310 = vmul.f32 %v924, %v1294
        %v1311 = vmul.f32 %v930, %v1295
        %v1312 = vmul.f32 %v934, %v1296
        %v1313 = vmul.f32 %v940, %v1297
        %v1314 = vmul.f32 %v944, %v1298
        %v1315 = vmul.f32 %v950, %v1299
        %v1316 = vmul.f32 %v954, %v1300
        %v1317 = vmul.f32 %v960, %v1301
        %v1318 = vmul.f32 %v964, %v1302
        %v1319 = vmul.f32 %v970, %v1303
        %v1320 = vmul.f32 %v974, %v1304
        %v1322 = vlaneseq
        %v1323 = vshrl.u32 %v1322, 7
        %v1324 = vsub.s32 0, %v1323
        %v1325 = vrot.slane %v1208, %v1324
        %v1327 = vmul.f32 %v1305, %v1325
        %v1328 = vmul.f32 %v1306, %v1325
        %v1329 = vmul.f32 %v1307, %v1325
        %v1330 = vmul.f32 %v1308, %v1325
        %v1331 = vmul.f32 %v1309, %v1325
        %v1332 = vmul.f32 %v1310, %v1325
        %v1333 = vmul.f32 %v1311, %v1325
        %v1334 = vmul.f32 %v1312, %v1325
        %v1335 = vmul.f32 %v1313, %v1325
        %v1336 = vmul.f32 %v1314, %v1325
        %v1337 = vmul.f32 %v1315, %v1325
        %v1338 = vmul.f32 %v1316, %v1325
        %v1339 = vmul.f32 %v1317, %v1325
        %v1340 = vmul.f32 %v1318, %v1325
        %v1341 = vmul.f32 %v1319, %v1325
        %v1342 = vmul.f32 %v1320, %v1325
        %v1343 = vpack.c.bf16 %v1014, %v1011
        %v1344 = vpack.c.bf16 %v1022, %v1019
        %v1345 = vpack.c.bf16 %v1030, %v1027
        %v1346 = vpack.c.bf16 %v1038, %v1035
        %v1347 = vpack.c.bf16 %v1046, %v1043
        %v1348 = vpack.c.bf16 %v1054, %v1051
        %v1349 = vpack.c.bf16 %v1062, %v1059
        %v1350 = vpack.c.bf16 %v1070, %v1067
        %v1351 = vld [vmem:[#allocation13] sm:$0xff]
        %v1352 = vld [vmem:[#allocation13 + $0x8] sm:$0xff]
        %v1353 = vld [vmem:[#allocation13 + $0x10] sm:$0xff]
        %v1354 = vld [vmem:[#allocation13 + $0x18] sm:$0xff]
        %v1355 = vld [vmem:[#allocation13 + $0x20] sm:$0xff]
        %v1356 = vld [vmem:[#allocation13 + $0x28] sm:$0xff]
        %v1357 = vld [vmem:[#allocation13 + $0x30] sm:$0xff]
        %v1358 = vld [vmem:[#allocation13 + $0x38] sm:$0xff]
        %v1359 = vld [vmem:[#allocation13 + $0x40] sm:$0xff]
        %v1360 = vld [vmem:[#allocation13 + $0x48] sm:$0xff]
        %v1361 = vld [vmem:[#allocation13 + $0x50] sm:$0xff]
        %v1362 = vld [vmem:[#allocation13 + $0x58] sm:$0xff]
        %v1363 = vld [vmem:[#allocation13 + $0x60] sm:$0xff]
        %v1364 = vld [vmem:[#allocation13 + $0x68] sm:$0xff]
        %v1365 = vld [vmem:[#allocation13 + $0x70] sm:$0xff]
        %v1366 = vld [vmem:[#allocation13 + $0x78] sm:$0xff]
        %v1367 = vld [vmem:[#allocation14] sm:$0xff]
        %v1368 = vld [vmem:[#allocation14 + $0x8] sm:$0xff]
        %v1369 = vld [vmem:[#allocation14 + $0x10] sm:$0xff]
        %v1370 = vld [vmem:[#allocation14 + $0x18] sm:$0xff]
        %v1371 = vld [vmem:[#allocation14 + $0x20] sm:$0xff]
        %v1372 = vld [vmem:[#allocation14 + $0x28] sm:$0xff]
        %v1373 = vld [vmem:[#allocation14 + $0x30] sm:$0xff]
        %v1374 = vld [vmem:[#allocation14 + $0x38] sm:$0xff]
        %v1375 = vld [vmem:[#allocation14 + $0x40] sm:$0xff]
        %v1376 = vld [vmem:[#allocation14 + $0x48] sm:$0xff]
        %v1377 = vld [vmem:[#allocation14 + $0x50] sm:$0xff]
        %v1378 = vld [vmem:[#allocation14 + $0x58] sm:$0xff]
        %v1379 = vld [vmem:[#allocation14 + $0x60] sm:$0xff]
        %v1380 = vld [vmem:[#allocation14 + $0x68] sm:$0xff]
        %v1381 = vld [vmem:[#allocation14 + $0x70] sm:$0xff]
        %v1382 = vld [vmem:[#allocation14 + $0x78] sm:$0xff]
        %v1383 = vmul.f32 %v1192, %v1351
        %v1384 = vmul.f32 %v1193, %v1352
        %v1385 = vmul.f32 %v1194, %v1353
        %v1386 = vmul.f32 %v1195, %v1354
        %v1387 = vmul.f32 %v1196, %v1355
        %v1388 = vmul.f32 %v1197, %v1356
        %v1389 = vmul.f32 %v1198, %v1357
        %v1390 = vmul.f32 %v1199, %v1358
        %v1391 = vmul.f32 %v1200, %v1359
        %v1392 = vmul.f32 %v1201, %v1360
        %v1393 = vmul.f32 %v1202, %v1361
        %v1394 = vmul.f32 %v1203, %v1362
        %v1395 = vmul.f32 %v1204, %v1363
        %v1396 = vmul.f32 %v1205, %v1364
        %v1397 = vmul.f32 %v1206, %v1365
        %v1398 = vmul.f32 %v1207, %v1366
        %1399 = vrot.lane.b32.xlu0 %v1192, 64
        %v1400 = vpop.permute.xlu0 %1399
        %1401 = vrot.lane.b32.xlu0 %v1193, 64
        %v1402 = vpop.permute.xlu0 %1401
        %1403 = vrot.lane.b32.xlu0 %v1194, 64
        %v1404 = vpop.permute.xlu0 %1403
        %1405 = vrot.lane.b32.xlu0 %v1195, 64
        %v1406 = vpop.permute.xlu0 %1405
        %1407 = vrot.lane.b32.xlu0 %v1196, 64
        %v1408 = vpop.permute.xlu0 %1407
        %1409 = vrot.lane.b32.xlu0 %v1197, 64
        %v1410 = vpop.permute.xlu0 %1409
        %1411 = vrot.lane.b32.xlu0 %v1198, 64
        %v1412 = vpop.permute.xlu0 %1411
        %1413 = vrot.lane.b32.xlu0 %v1199, 64
        %v1414 = vpop.permute.xlu0 %1413
        %1415 = vrot.lane.b32.xlu0 %v1200, 64
        %v1416 = vpop.permute.xlu0 %1415
        %1417 = vrot.lane.b32.xlu0 %v1201, 64
        %v1418 = vpop.permute.xlu0 %1417
        %1419 = vrot.lane.b32.xlu0 %v1202, 64
        %v1420 = vpop.permute.xlu0 %1419
        %1421 = vrot.lane.b32.xlu0 %v1203, 64
        %v1422 = vpop.permute.xlu0 %1421
        %1423 = vrot.lane.b32.xlu0 %v1204, 64
        %v1424 = vpop.permute.xlu0 %1423
        %1425 = vrot.lane.b32.xlu0 %v1205, 64
        %v1426 = vpop.permute.xlu0 %1425
        %1427 = vrot.lane.b32.xlu0 %v1206, 64
        %v1428 = vpop.permute.xlu0 %1427
        %1429 = vrot.lane.b32.xlu0 %v1207, 64
        %v1430 = vpop.permute.xlu0 %1429
        %v1431 = vmul.f32 %v1400, %v1367
        %v1432 = vmul.f32 %v1402, %v1368
        %v1433 = vmul.f32 %v1404, %v1369
        %v1434 = vmul.f32 %v1406, %v1370
        %v1435 = vmul.f32 %v1408, %v1371
        %v1436 = vmul.f32 %v1410, %v1372
        %v1437 = vmul.f32 %v1412, %v1373
        %v1438 = vmul.f32 %v1414, %v1374
        %v1439 = vmul.f32 %v1416, %v1375
        %v1440 = vmul.f32 %v1418, %v1376
        %v1441 = vmul.f32 %v1420, %v1377
        %v1442 = vmul.f32 %v1422, %v1378
        %v1443 = vmul.f32 %v1424, %v1379
        %v1444 = vmul.f32 %v1426, %v1380
        %v1445 = vmul.f32 %v1428, %v1381
        %v1446 = vmul.f32 %v1430, %v1382
        %v1447 = vadd.f32 %v1383, %v1431
        %v1448 = vadd.f32 %v1384, %v1432
        %v1449 = vadd.f32 %v1385, %v1433
        %v1450 = vadd.f32 %v1386, %v1434
        %v1451 = vadd.f32 %v1387, %v1435
        %v1452 = vadd.f32 %v1388, %v1436
        %v1453 = vadd.f32 %v1389, %v1437
        %v1454 = vadd.f32 %v1390, %v1438
        %v1455 = vadd.f32 %v1391, %v1439
        %v1456 = vadd.f32 %v1392, %v1440
        %v1457 = vadd.f32 %v1393, %v1441
        %v1458 = vadd.f32 %v1394, %v1442
        %v1459 = vadd.f32 %v1395, %v1443
        %v1460 = vadd.f32 %v1396, %v1444
        %v1461 = vadd.f32 %v1397, %v1445
        %v1462 = vadd.f32 %v1398, %v1446
        %v1463 = vmul.f32 %v1327, %v1351
        %v1464 = vmul.f32 %v1328, %v1352
        %v1465 = vmul.f32 %v1329, %v1353
        %v1466 = vmul.f32 %v1330, %v1354
        %v1467 = vmul.f32 %v1331, %v1355
        %v1468 = vmul.f32 %v1332, %v1356
        %v1469 = vmul.f32 %v1333, %v1357
        %v1470 = vmul.f32 %v1334, %v1358
        %v1471 = vmul.f32 %v1335, %v1359
        %v1472 = vmul.f32 %v1336, %v1360
        %v1473 = vmul.f32 %v1337, %v1361
        %v1474 = vmul.f32 %v1338, %v1362
        %v1475 = vmul.f32 %v1339, %v1363
        %v1476 = vmul.f32 %v1340, %v1364
        %v1477 = vmul.f32 %v1341, %v1365
        %v1478 = vmul.f32 %v1342, %v1366
        %1479 = vrot.lane.b32.xlu0 %v1327, 64
        %v1480 = vpop.permute.xlu0 %1479
        %1481 = vrot.lane.b32.xlu0 %v1328, 64
        %v1482 = vpop.permute.xlu0 %1481
        %1483 = vrot.lane.b32.xlu0 %v1329, 64
        %v1484 = vpop.permute.xlu0 %1483
        %1485 = vrot.lane.b32.xlu0 %v1330, 64
        %v1486 = vpop.permute.xlu0 %1485
        %1487 = vrot.lane.b32.xlu0 %v1331, 64
        %v1488 = vpop.permute.xlu0 %1487
        %1489 = vrot.lane.b32.xlu0 %v1332, 64
        %v1490 = vpop.permute.xlu0 %1489
        %1491 = vrot.lane.b32.xlu0 %v1333, 64
        %v1492 = vpop.permute.xlu0 %1491
        %1493 = vrot.lane.b32.xlu0 %v1334, 64
        %v1494 = vpop.permute.xlu0 %1493
        %1495 = vrot.lane.b32.xlu0 %v1335, 64
        %v1496 = vpop.permute.xlu0 %1495
        %1497 = vrot.lane.b32.xlu0 %v1336, 64
        %v1498 = vpop.permute.xlu0 %1497
        %1499 = vrot.lane.b32.xlu0 %v1337, 64
        %v1500 = vpop.permute.xlu0 %1499
        %1501 = vrot.lane.b32.xlu0 %v1338, 64
        %v1502 = vpop.permute.xlu0 %1501
        %1503 = vrot.lane.b32.xlu0 %v1339, 64
        %v1504 = vpop.permute.xlu0 %1503
        %1505 = vrot.lane.b32.xlu0 %v1340, 64
        %v1506 = vpop.permute.xlu0 %1505
        %1507 = vrot.lane.b32.xlu0 %v1341, 64
        %v1508 = vpop.permute.xlu0 %1507
        %1509 = vrot.lane.b32.xlu0 %v1342, 64
        %v1510 = vpop.permute.xlu0 %1509
        %v1511 = vmul.f32 %v1480, %v1367
        %v1512 = vmul.f32 %v1482, %v1368
        %v1513 = vmul.f32 %v1484, %v1369
        %v1514 = vmul.f32 %v1486, %v1370
        %v1515 = vmul.f32 %v1488, %v1371
        %v1516 = vmul.f32 %v1490, %v1372
        %v1517 = vmul.f32 %v1492, %v1373
        %v1518 = vmul.f32 %v1494, %v1374
        %v1519 = vmul.f32 %v1496, %v1375
        %v1520 = vmul.f32 %v1498, %v1376
        %v1521 = vmul.f32 %v1500, %v1377
        %v1522 = vmul.f32 %v1502, %v1378
        %v1523 = vmul.f32 %v1504, %v1379
        %v1524 = vmul.f32 %v1506, %v1380
        %v1525 = vmul.f32 %v1508, %v1381
        %v1526 = vmul.f32 %v1510, %v1382
        %v1527 = vadd.f32 %v1463, %v1511
        %v1528 = vadd.f32 %v1464, %v1512
        %v1529 = vadd.f32 %v1465, %v1513
        %v1530 = vadd.f32 %v1466, %v1514
        %v1531 = vadd.f32 %v1467, %v1515
        %v1532 = vadd.f32 %v1468, %v1516
        %v1533 = vadd.f32 %v1469, %v1517
        %v1534 = vadd.f32 %v1470, %v1518
        %v1535 = vadd.f32 %v1471, %v1519
        %v1536 = vadd.f32 %v1472, %v1520
        %v1537 = vadd.f32 %v1473, %v1521
        %v1538 = vadd.f32 %v1474, %v1522
        %v1539 = vadd.f32 %v1475, %v1523
        %v1540 = vadd.f32 %v1476, %v1524
        %v1541 = vadd.f32 %v1477, %v1525
        %v1542 = vadd.f32 %v1478, %v1526
        %v1543 = vpack.c.bf16 %v1448, %v1447
        %v1544 = vpack.c.bf16 %v1450, %v1449
        %v1545 = vpack.c.bf16 %v1452, %v1451
        %v1546 = vpack.c.bf16 %v1454, %v1453
        %v1547 = vpack.c.bf16 %v1456, %v1455
        %v1548 = vpack.c.bf16 %v1458, %v1457
        %v1549 = vpack.c.bf16 %v1460, %v1459
        %v1550 = vpack.c.bf16 %v1462, %v1461
        %v1551 = vpack.c.bf16 %v1528, %v1527
        %v1552 = vpack.c.bf16 %v1530, %v1529
        %v1553 = vpack.c.bf16 %v1532, %v1531
        %v1554 = vpack.c.bf16 %v1534, %v1533
        %v1555 = vpack.c.bf16 %v1536, %v1535
        %v1556 = vpack.c.bf16 %v1538, %v1537
        %v1557 = vpack.c.bf16 %v1540, %v1539
        %v1558 = vpack.c.bf16 %v1542, %v1541
        %1559 = vmatprep.subr.bf16.mxu0 0
        %1560 = vmatpush1.bf16.xpose.msra.mxu0 %v1551
        %1561 = vmatprep.subr.bf16.mxu0 0
        %1562 = vmatpush1.bf16.xpose.msra.mxu0 %v1552
        %1563 = vmatprep.subr.bf16.mxu0 0
        %1564 = vmatpush1.bf16.xpose.msra.mxu0 %v1553
        %1565 = vmatprep.subr.bf16.mxu0 0
        %1566 = vmatpush1.bf16.xpose.msra.mxu0 %v1554
        %1567 = vmatprep.subr.bf16.mxu0 0
        %1568 = vmatpush1.bf16.xpose.msra.mxu0 %v1555
        %1569 = vmatprep.subr.bf16.mxu0 0
        %1570 = vmatpush1.bf16.xpose.msra.mxu0 %v1556
        %1571 = vmatprep.subr.bf16.mxu0 0
        %1572 = vmatpush1.bf16.xpose.msra.mxu0 %v1557
        %1573 = vmatprep.subr.bf16.mxu0 0
        %1574 = vmatpush1.bf16.xpose.msra.mxu0 %v1558
        %1575 = vmatprep.subr.bf16.mxu0 0
        %1576 = vmatpush1.bf16.xpose.msra.mxu0 0
        %1577 = vmatprep.subr.bf16.mxu0 0
        %1578 = vmatpush1.bf16.xpose.msra.mxu0 0
        %1579 = vmatprep.subr.bf16.mxu0 0
        %1580 = vmatpush1.bf16.xpose.msra.mxu0 0
        %1581 = vmatprep.subr.bf16.mxu0 0
        %1582 = vmatpush1.bf16.xpose.msra.mxu0 0
        %1583 = vmatprep.subr.bf16.mxu0 0
        %1584 = vmatpush1.bf16.xpose.msra.mxu0 0
        %1585 = vmatprep.subr.bf16.mxu0 0
        %1586 = vmatpush1.bf16.xpose.msra.mxu0 0
        %1587 = vmatprep.subr.bf16.mxu0 0
        %1588 = vmatpush1.bf16.xpose.msra.mxu0 0
        %1589 = vmatprep.subr.bf16.mxu0 0
        %1590 = vmatpush1.bf16.xpose.msra.mxu0 0
        %1591 = vmatprep.mubr.bf16.mxu0 0
        %1592 = vmatmul.mubr.bf16.gmra.mrb[0].mxu0 %v1543
        %v1593 = vpop.f32.mrb[0].mxu0
        %v1594 = vadd.f32 0.0, %v1593
        %v1595 = vpop.f32.mrb[0].mxu0
        %v1596 = vpop.f32.mrb[0].mxu0
        %v1597 = vadd.f32 0.0, %v1596
        %v1598 = vpop.f32.mrb[0].mxu0
        %1599 = vmatprep.mubr.bf16.mxu0 0
        %1600 = vmatmul.mubr.bf16.gmra.mrb[0].mxu0 %v1544
        %v1601 = vpop.f32.mrb[0].mxu0
        %v1602 = vadd.f32 0.0, %v1601
        %v1603 = vpop.f32.mrb[0].mxu0
        %v1604 = vpop.f32.mrb[0].mxu0
        %v1605 = vadd.f32 0.0, %v1604
        %v1606 = vpop.f32.mrb[0].mxu0
        %1607 = vmatprep.mubr.bf16.mxu0 0
        %1608 = vmatmul.mubr.bf16.gmra.mrb[0].mxu0 %v1545
        %v1609 = vpop.f32.mrb[0].mxu0
        %v1610 = vadd.f32 0.0, %v1609
        %v1611 = vpop.f32.mrb[0].mxu0
        %v1612 = vpop.f32.mrb[0].mxu0
        %v1613 = vadd.f32 0.0, %v1612
        %v1614 = vpop.f32.mrb[0].mxu0
        %1615 = vmatprep.mubr.bf16.mxu0 0
        %1616 = vmatmul.mubr.bf16.gmra.mrb[0].mxu0 %v1546
        %v1617 = vpop.f32.mrb[0].mxu0
        %v1618 = vadd.f32 0.0, %v1617
        %v1619 = vpop.f32.mrb[0].mxu0
        %v1620 = vpop.f32.mrb[0].mxu0
        %v1621 = vadd.f32 0.0, %v1620
        %v1622 = vpop.f32.mrb[0].mxu0
        %1623 = vmatprep.mubr.bf16.mxu0 0
        %1624 = vmatmul.mubr.bf16.gmra.mrb[0].mxu0 %v1547
        %v1625 = vpop.f32.mrb[0].mxu0
        %v1626 = vadd.f32 0.0, %v1625
        %v1627 = vpop.f32.mrb[0].mxu0
        %v1628 = vpop.f32.mrb[0].mxu0
        %v1629 = vadd.f32 0.0, %v1628
        %v1630 = vpop.f32.mrb[0].mxu0
        %1631 = vmatprep.mubr.bf16.mxu0 0
        %1632 = vmatmul.mubr.bf16.gmra.mrb[0].mxu0 %v1548
        %v1633 = vpop.f32.mrb[0].mxu0
        %v1634 = vadd.f32 0.0, %v1633
        %v1635 = vpop.f32.mrb[0].mxu0
        %v1636 = vpop.f32.mrb[0].mxu0
        %v1637 = vadd.f32 0.0, %v1636
        %v1638 = vpop.f32.mrb[0].mxu0
        %1639 = vmatprep.mubr.bf16.mxu0 0
        %1640 = vmatmul.mubr.bf16.gmra.mrb[0].mxu0 %v1549
        %v1641 = vpop.f32.mrb[0].mxu0
        %v1642 = vadd.f32 0.0, %v1641
        %v1643 = vpop.f32.mrb[0].mxu0
        %v1644 = vpop.f32.mrb[0].mxu0
        %v1645 = vadd.f32 0.0, %v1644
        %v1646 = vpop.f32.mrb[0].mxu0
        %1647 = vmatprep.mubr.bf16.mxu0 0
        %1648 = vmatmul.mubr.bf16.gmra.mrb[0].mxu0 %v1550
        %v1649 = vpop.f32.mrb[0].mxu0
        %v1650 = vadd.f32 0.0, %v1649
        %v1651 = vpop.f32.mrb[0].mxu0
        %v1652 = vpop.f32.mrb[0].mxu0
        %v1653 = vadd.f32 0.0, %v1652
        %v1654 = vpop.f32.mrb[0].mxu0
        %1655 = vdwg.mxu0
        %v1656 = vmul.f32 %v1594, 0.088388346
        %v1657 = vmul.f32 %v1597, 0.088388346
        %v1658 = vmul.f32 %v1602, 0.088388346
        %v1659 = vmul.f32 %v1605, 0.088388346
        %v1660 = vmul.f32 %v1610, 0.088388346
        %v1661 = vmul.f32 %v1613, 0.088388346
        %v1662 = vmul.f32 %v1618, 0.088388346
        %v1663 = vmul.f32 %v1621, 0.088388346
        %v1664 = vmul.f32 %v1626, 0.088388346
        %v1665 = vmul.f32 %v1629, 0.088388346
        %v1666 = vmul.f32 %v1634, 0.088388346
        %v1667 = vmul.f32 %v1637, 0.088388346
        %v1668 = vmul.f32 %v1642, 0.088388346
        %v1669 = vmul.f32 %v1645, 0.088388346
        %v1670 = vmul.f32 %v1650, 0.088388346
        %v1671 = vmul.f32 %v1653, 0.088388346
        %v1672 = vlaneseq
        %v1673 = vshrl.u32 %v1672, 7
        %v1674 = vadd.s32 %v1673, 8
        %v1675 = vadd.s32 %v1673, 16
        %v1676 = vadd.s32 %v1673, 24
        %v1677 = vadd.s32 %v1673, 32
        %v1678 = vadd.s32 %v1673, 40
        %v1679 = vadd.s32 %v1673, 48
        %v1680 = vadd.s32 %v1673, 56
        %v1681 = vadd.s32 %v1673, 64
        %v1682 = vadd.s32 %v1673, 72
        %v1683 = vadd.s32 %v1673, 80
        %v1684 = vadd.s32 %v1673, 88
        %v1685 = vadd.s32 %v1673, 96
        %v1686 = vadd.s32 %v1673, 104
        %v1687 = vadd.s32 %v1673, 112
        %v1688 = vadd.s32 %v1673, 120
        %v1689 = vlaneseq
        %v1690 = vand.u32 %v1689, 127
        %vm1691 = vcmp.le.s32.totalorder %v1690, %v1673
        %vm1692 = vcmp.le.s32.totalorder %v1690, %v1674
        %vm1693 = vcmp.le.s32.totalorder %v1690, %v1675
        %vm1694 = vcmp.le.s32.totalorder %v1690, %v1676
        %vm1695 = vcmp.le.s32.totalorder %v1690, %v1677
        %vm1696 = vcmp.le.s32.totalorder %v1690, %v1678
        %vm1697 = vcmp.le.s32.totalorder %v1690, %v1679
        %vm1698 = vcmp.le.s32.totalorder %v1690, %v1680
        %vm1699 = vcmp.le.s32.totalorder %v1690, %v1681
        %vm1700 = vcmp.le.s32.totalorder %v1690, %v1682
        %vm1701 = vcmp.le.s32.totalorder %v1690, %v1683
        %vm1702 = vcmp.le.s32.totalorder %v1690, %v1684
        %vm1703 = vcmp.le.s32.totalorder %v1690, %v1685
        %vm1704 = vcmp.le.s32.totalorder %v1690, %v1686
        %vm1705 = vcmp.le.s32.totalorder %v1690, %v1687
        %vm1706 = vcmp.le.s32.totalorder %v1690, %v1688
        %v1707 = vsel %vm1691, %v1656, -1e+30
        %v1708 = vsel %vm1692, %v1657, -1e+30
        %v1709 = vsel %vm1693, %v1658, -1e+30
        %v1710 = vsel %vm1694, %v1659, -1e+30
        %v1711 = vsel %vm1695, %v1660, -1e+30
        %v1712 = vsel %vm1696, %v1661, -1e+30
        %v1713 = vsel %vm1697, %v1662, -1e+30
        %v1714 = vsel %vm1698, %v1663, -1e+30
        %v1715 = vsel %vm1699, %v1664, -1e+30
        %v1716 = vsel %vm1700, %v1665, -1e+30
        %v1717 = vsel %vm1701, %v1666, -1e+30
        %v1718 = vsel %vm1702, %v1667, -1e+30
        %v1719 = vsel %vm1703, %v1668, -1e+30
        %v1720 = vsel %vm1704, %v1669, -1e+30
        %v1721 = vsel %vm1705, %v1670, -1e+30
        %v1722 = vsel %vm1706, %v1671, -1e+30
        %1723 = vmax.xlane.f32.xlu0 %v1707
        %v1724 = vpop.xlane.xlu0 %1723
        %1725 = vmax.xlane.f32.xlu0 %v1708
        %v1726 = vpop.xlane.xlu0 %1725
        %1727 = vmax.xlane.f32.xlu0 %v1709
        %v1728 = vpop.xlane.xlu0 %1727
        %1729 = vmax.xlane.f32.xlu0 %v1710
        %v1730 = vpop.xlane.xlu0 %1729
        %1731 = vmax.xlane.f32.xlu0 %v1711
        %v1732 = vpop.xlane.xlu0 %1731
        %1733 = vmax.xlane.f32.xlu0 %v1712
        %v1734 = vpop.xlane.xlu0 %1733
        %1735 = vmax.xlane.f32.xlu0 %v1713
        %v1736 = vpop.xlane.xlu0 %1735
        %1737 = vmax.xlane.f32.xlu0 %v1714
        %v1738 = vpop.xlane.xlu0 %1737
        %1739 = vmax.xlane.f32.xlu0 %v1715
        %v1740 = vpop.xlane.xlu0 %1739
        %1741 = vmax.xlane.f32.xlu0 %v1716
        %v1742 = vpop.xlane.xlu0 %1741
        %1743 = vmax.xlane.f32.xlu0 %v1717
        %v1744 = vpop.xlane.xlu0 %1743
        %1745 = vmax.xlane.f32.xlu0 %v1718
        %v1746 = vpop.xlane.xlu0 %1745
        %1747 = vmax.xlane.f32.xlu0 %v1719
        %v1748 = vpop.xlane.xlu0 %1747
        %1749 = vmax.xlane.f32.xlu0 %v1720
        %v1750 = vpop.xlane.xlu0 %1749
        %1751 = vmax.xlane.f32.xlu0 %v1721
        %v1752 = vpop.xlane.xlu0 %1751
        %1753 = vmax.xlane.f32.xlu0 %v1722
        %v1754 = vpop.xlane.xlu0 %1753
        %v1755 = vsub.f32 %v1707, %v1724
        %v1756 = vsub.f32 %v1708, %v1726
        %v1757 = vsub.f32 %v1709, %v1728
        %v1758 = vsub.f32 %v1710, %v1730
        %v1759 = vsub.f32 %v1711, %v1732
        %v1760 = vsub.f32 %v1712, %v1734
        %v1761 = vsub.f32 %v1713, %v1736
        %v1762 = vsub.f32 %v1714, %v1738
        %v1763 = vsub.f32 %v1715, %v1740
        %v1764 = vsub.f32 %v1716, %v1742
        %v1765 = vsub.f32 %v1717, %v1744
        %v1766 = vsub.f32 %v1718, %v1746
        %v1767 = vsub.f32 %v1719, %v1748
        %v1768 = vsub.f32 %v1720, %v1750
        %v1769 = vsub.f32 %v1721, %v1752
        %v1770 = vsub.f32 %v1722, %v1754
        %v1771 = vmul.f32 %v1755, 1.442695
        %v1772 = vpow.pop %v1771
        %v1773 = vmul.f32 %v1756, 1.442695
        %v1774 = vpow.pop %v1773
        %v1775 = vmul.f32 %v1757, 1.442695
        %v1776 = vpow.pop %v1775
        %v1777 = vmul.f32 %v1758, 1.442695
        %v1778 = vpow.pop %v1777
        %v1779 = vmul.f32 %v1759, 1.442695
        %v1780 = vpow.pop %v1779
        %v1781 = vmul.f32 %v1760, 1.442695
        %v1782 = vpow.pop %v1781
        %v1783 = vmul.f32 %v1761, 1.442695
        %v1784 = vpow.pop %v1783
        %v1785 = vmul.f32 %v1762, 1.442695
        %v1786 = vpow.pop %v1785
        %v1787 = vmul.f32 %v1763, 1.442695
        %v1788 = vpow.pop %v1787
        %v1789 = vmul.f32 %v1764, 1.442695
        %v1790 = vpow.pop %v1789
        %v1791 = vmul.f32 %v1765, 1.442695
        %v1792 = vpow.pop %v1791
        %v1793 = vmul.f32 %v1766, 1.442695
        %v1794 = vpow.pop %v1793
        %v1795 = vmul.f32 %v1767, 1.442695
        %v1796 = vpow.pop %v1795
        %v1797 = vmul.f32 %v1768, 1.442695
        %v1798 = vpow.pop %v1797
        %v1799 = vmul.f32 %v1769, 1.442695
        %v1800 = vpow.pop %v1799
        %v1801 = vmul.f32 %v1770, 1.442695
        %v1802 = vpow.pop %v1801
        %1803 = vadd.xlane.f32.xlu0 %v1772
        %v1804 = vpop.xlane.xlu0 %1803
        %1805 = vadd.xlane.f32.xlu0 %v1774
        %v1806 = vpop.xlane.xlu0 %1805
        %1807 = vadd.xlane.f32.xlu0 %v1776
        %v1808 = vpop.xlane.xlu0 %1807
        %1809 = vadd.xlane.f32.xlu0 %v1778
        %v1810 = vpop.xlane.xlu0 %1809
        %1811 = vadd.xlane.f32.xlu0 %v1780
        %v1812 = vpop.xlane.xlu0 %1811
        %1813 = vadd.xlane.f32.xlu0 %v1782
        %v1814 = vpop.xlane.xlu0 %1813
        %1815 = vadd.xlane.f32.xlu0 %v1784
        %v1816 = vpop.xlane.xlu0 %1815
        %1817 = vadd.xlane.f32.xlu0 %v1786
        %v1818 = vpop.xlane.xlu0 %1817
        %1819 = vadd.xlane.f32.xlu0 %v1788
        %v1820 = vpop.xlane.xlu0 %1819
        %1821 = vadd.xlane.f32.xlu0 %v1790
        %v1822 = vpop.xlane.xlu0 %1821
        %1823 = vadd.xlane.f32.xlu0 %v1792
        %v1824 = vpop.xlane.xlu0 %1823
        %1825 = vadd.xlane.f32.xlu0 %v1794
        %v1826 = vpop.xlane.xlu0 %1825
        %1827 = vadd.xlane.f32.xlu0 %v1796
        %v1828 = vpop.xlane.xlu0 %1827
        %1829 = vadd.xlane.f32.xlu0 %v1798
        %v1830 = vpop.xlane.xlu0 %1829
        %1831 = vadd.xlane.f32.xlu0 %v1800
        %v1832 = vpop.xlane.xlu0 %1831
        %1833 = vadd.xlane.f32.xlu0 %v1802
        %v1834 = vpop.xlane.xlu0 %1833
        %v1835 = vrcp.pop %v1804
        %v1836 = vrcp.pop %v1806
        %v1837 = vrcp.pop %v1808
        %v1838 = vrcp.pop %v1810
        %v1839 = vrcp.pop %v1812
        %v1840 = vrcp.pop %v1814
        %v1841 = vrcp.pop %v1816
        %v1842 = vrcp.pop %v1818
        %v1843 = vrcp.pop %v1820
        %v1844 = vrcp.pop %v1822
        %v1845 = vrcp.pop %v1824
        %v1846 = vrcp.pop %v1826
        %v1847 = vrcp.pop %v1828
        %v1848 = vrcp.pop %v1830
        %v1849 = vrcp.pop %v1832
        %v1850 = vrcp.pop %v1834
        %v1851 = vmul.f32 %v1772, %v1835
        %v1852 = vmul.f32 %v1774, %v1836
        %v1853 = vmul.f32 %v1776, %v1837
        %v1854 = vmul.f32 %v1778, %v1838
        %v1855 = vmul.f32 %v1780, %v1839
        %v1856 = vmul.f32 %v1782, %v1840
        %v1857 = vmul.f32 %v1784, %v1841
        %v1858 = vmul.f32 %v1786, %v1842
        %v1859 = vmul.f32 %v1788, %v1843
        %v1860 = vmul.f32 %v1790, %v1844
        %v1861 = vmul.f32 %v1792, %v1845
        %v1862 = vmul.f32 %v1794, %v1846
        %v1863 = vmul.f32 %v1796, %v1847
        %v1864 = vmul.f32 %v1798, %v1848
        %v1865 = vmul.f32 %v1800, %v1849
        %v1866 = vmul.f32 %v1802, %v1850
        %v1867 = vpack.c.bf16 %v1852, %v1851
        %v1868 = vpack.c.bf16 %v1854, %v1853
        %v1869 = vpack.c.bf16 %v1856, %v1855
        %v1870 = vpack.c.bf16 %v1858, %v1857
        %v1871 = vpack.c.bf16 %v1860, %v1859
        %v1872 = vpack.c.bf16 %v1862, %v1861
        %v1873 = vpack.c.bf16 %v1864, %v1863
        %v1874 = vpack.c.bf16 %v1866, %v1865
        %1875 = vmatprep.subr.bf16.mxu0 0
        %1876 = vmatpush1.bf16.msra.mxu0 %v1343
        %1877 = vmatprep.subr.bf16.mxu0 0
        %1878 = vmatpush1.bf16.msra.mxu0 %v1344
        %1879 = vmatprep.subr.bf16.mxu0 0
        %1880 = vmatpush1.bf16.msra.mxu0 %v1345
        %1881 = vmatprep.subr.bf16.mxu0 0
        %1882 = vmatpush1.bf16.msra.mxu0 %v1346
        %1883 = vmatprep.subr.bf16.mxu0 0
        %1884 = vmatpush1.bf16.msra.mxu0 %v1347
        %1885 = vmatprep.subr.bf16.mxu0 0
        %1886 = vmatpush1.bf16.msra.mxu0 %v1348
        %1887 = vmatprep.subr.bf16.mxu0 0
        %1888 = vmatpush1.bf16.msra.mxu0 %v1349
        %1889 = vmatprep.subr.bf16.mxu0 0
        %1890 = vmatpush1.bf16.msra.mxu0 %v1350
        %1891 = vmatprep.subr.bf16.mxu0 0
        %1892 = vmatpush1.bf16.msra.mxu0 0
        %1893 = vmatprep.subr.bf16.mxu0 0
        %1894 = vmatpush1.bf16.msra.mxu0 0
        %1895 = vmatprep.subr.bf16.mxu0 0
        %1896 = vmatpush1.bf16.msra.mxu0 0
        %1897 = vmatprep.subr.bf16.mxu0 0
        %1898 = vmatpush1.bf16.msra.mxu0 0
        %1899 = vmatprep.subr.bf16.mxu0 0
        %1900 = vmatpush1.bf16.msra.mxu0 0
        %1901 = vmatprep.subr.bf16.mxu0 0
        %1902 = vmatpush1.bf16.msra.mxu0 0
        %1903 = vmatprep.subr.bf16.mxu0 0
        %1904 = vmatpush1.bf16.msra.mxu0 0
        %1905 = vmatprep.subr.bf16.mxu0 0
        %1906 = vmatpush1.bf16.msra.mxu0 0
        %1907 = vmatprep.mubr.bf16.mxu0 0
        %1908 = vmatmul.mubr.bf16.gmra.mrb[0].mxu0 %v1867
        %v1909 = vpop.f32.mrb[0].mxu0
        %v1910 = vadd.f32 0.0, %v1909
        %v1911 = vpop.f32.mrb[0].mxu0
        %v1912 = vpop.f32.mrb[0].mxu0
        %v1913 = vadd.f32 0.0, %v1912
        %v1914 = vpop.f32.mrb[0].mxu0
        %1915 = vmatprep.mubr.bf16.mxu0 0
        %1916 = vmatmul.mubr.bf16.gmra.mrb[0].mxu0 %v1868
        %v1917 = vpop.f32.mrb[0].mxu0
        %v1918 = vadd.f32 0.0, %v1917
        %v1919 = vpop.f32.mrb[0].mxu0
        %v1920 = vpop.f32.mrb[0].mxu0
        %v1921 = vadd.f32 0.0, %v1920
        %v1922 = vpop.f32.mrb[0].mxu0
        %1923 = vmatprep.mubr.bf16.mxu0 0
        %1924 = vmatmul.mubr.bf16.gmra.mrb[0].mxu0 %v1869
        %v1925 = vpop.f32.mrb[0].mxu0
        %v1926 = vadd.f32 0.0, %v1925
        %v1927 = vpop.f32.mrb[0].mxu0
        %v1928 = vpop.f32.mrb[0].mxu0
        %v1929 = vadd.f32 0.0, %v1928
        %v1930 = vpop.f32.mrb[0].mxu0
        %1931 = vmatprep.mubr.bf16.mxu0 0
        %1932 = vmatmul.mubr.bf16.gmra.mrb[0].mxu0 %v1870
        %v1933 = vpop.f32.mrb[0].mxu0
        %v1934 = vadd.f32 0.0, %v1933
        %v1935 = vpop.f32.mrb[0].mxu0
        %v1936 = vpop.f32.mrb[0].mxu0
        %v1937 = vadd.f32 0.0, %v1936
        %v1938 = vpop.f32.mrb[0].mxu0
        %1939 = vmatprep.mubr.bf16.mxu0 0
        %1940 = vmatmul.mubr.bf16.gmra.mrb[0].mxu0 %v1871
        %v1941 = vpop.f32.mrb[0].mxu0
        %v1942 = vadd.f32 0.0, %v1941
        %v1943 = vpop.f32.mrb[0].mxu0
        %v1944 = vpop.f32.mrb[0].mxu0
        %v1945 = vadd.f32 0.0, %v1944
        %v1946 = vpop.f32.mrb[0].mxu0
        %1947 = vmatprep.mubr.bf16.mxu0 0
        %1948 = vmatmul.mubr.bf16.gmra.mrb[0].mxu0 %v1872
        %v1949 = vpop.f32.mrb[0].mxu0
        %v1950 = vadd.f32 0.0, %v1949
        %v1951 = vpop.f32.mrb[0].mxu0
        %v1952 = vpop.f32.mrb[0].mxu0
        %v1953 = vadd.f32 0.0, %v1952
        %v1954 = vpop.f32.mrb[0].mxu0
        %1955 = vmatprep.mubr.bf16.mxu0 0
        %1956 = vmatmul.mubr.bf16.gmra.mrb[0].mxu0 %v1873
        %v1957 = vpop.f32.mrb[0].mxu0
        %v1958 = vadd.f32 0.0, %v1957
        %v1959 = vpop.f32.mrb[0].mxu0
        %v1960 = vpop.f32.mrb[0].mxu0
        %v1961 = vadd.f32 0.0, %v1960
        %v1962 = vpop.f32.mrb[0].mxu0
        %1963 = vmatprep.mubr.bf16.mxu0 0
        %1964 = vmatmul.mubr.bf16.gmra.mrb[0].mxu0 %v1874
        %v1965 = vpop.f32.mrb[0].mxu0
        %v1966 = vadd.f32 0.0, %v1965
        %v1967 = vpop.f32.mrb[0].mxu0
        %v1968 = vpop.f32.mrb[0].mxu0
        %v1969 = vadd.f32 0.0, %v1968
        %v1970 = vpop.f32.mrb[0].mxu0
        %1971 = vdwg.mxu0
        %v1972 = vpack.c.bf16 %v1913, %v1910
        %v1973 = vpack.c.bf16 %v1921, %v1918
        %v1974 = vpack.c.bf16 %v1929, %v1926
        %v1975 = vpack.c.bf16 %v1937, %v1934
        %v1976 = vpack.c.bf16 %v1945, %v1942
        %v1977 = vpack.c.bf16 %v1953, %v1950
        %v1978 = vpack.c.bf16 %v1961, %v1958
        %v1979 = vpack.c.bf16 %v1969, %v1966
        %v1980 = vld [vmem:[#allocation8] sm:$0xf]
        %v1981 = vld [vmem:[#allocation8 + $0x4] sm:$0xf]
        %v1982 = vld [vmem:[#allocation8 + $0x8] sm:$0xf]
        %v1983 = vld [vmem:[#allocation8 + $0xc] sm:$0xf]
        %v1984 = vld [vmem:[#allocation8 + $0x10] sm:$0xf]
        %v1985 = vld [vmem:[#allocation8 + $0x14] sm:$0xf]
        %v1986 = vld [vmem:[#allocation8 + $0x18] sm:$0xf]
        %v1987 = vld [vmem:[#allocation8 + $0x1c] sm:$0xf]
        %v1988 = vld [vmem:[#allocation8 + $0x20] sm:$0xf]
        %v1989 = vld [vmem:[#allocation8 + $0x24] sm:$0xf]
        %v1990 = vld [vmem:[#allocation8 + $0x28] sm:$0xf]
        %v1991 = vld [vmem:[#allocation8 + $0x2c] sm:$0xf]
        %v1992 = vld [vmem:[#allocation8 + $0x30] sm:$0xf]
        %v1993 = vld [vmem:[#allocation8 + $0x34] sm:$0xf]
        %v1994 = vld [vmem:[#allocation8 + $0x38] sm:$0xf]
        %v1995 = vld [vmem:[#allocation8 + $0x3c] sm:$0xf]
        %v2012 = vunpack.c.l.b16 %v1980
        %v2013 = vunpack.c.l.b16 %v1981
        %v2014 = vunpack.c.l.b16 %v1982
        %v2015 = vunpack.c.l.b16 %v1983
        %v2016 = vunpack.c.l.b16 %v1984
        %v2017 = vunpack.c.l.b16 %v1985
        %v2018 = vunpack.c.l.b16 %v1986
        %v2019 = vunpack.c.l.b16 %v1987
        %v2020 = vunpack.c.l.b16 %v1988
        %v2021 = vunpack.c.l.b16 %v1989
        %v2022 = vunpack.c.l.b16 %v1990
        %v2023 = vunpack.c.l.b16 %v1991
        %v2024 = vunpack.c.l.b16 %v1992
        %v2025 = vunpack.c.l.b16 %v1993
        %v2026 = vunpack.c.l.b16 %v1994
        %v2027 = vunpack.c.l.b16 %v1995
        %v2028 = vpack.c.b16 %v2013, %v2012
        %v2029 = vpack.c.b16 %v2015, %v2014
        %v2030 = vpack.c.b16 %v2017, %v2016
        %v2031 = vpack.c.b16 %v2019, %v2018
        %v2032 = vpack.c.b16 %v2021, %v2020
        %v2033 = vpack.c.b16 %v2023, %v2022
        %v2034 = vpack.c.b16 %v2025, %v2024
        %v2035 = vpack.c.b16 %v2027, %v2026
        %2044 = vmatprep.subr.bf16.mxu0 0
        %2045 = vmatpush1.bf16.msra.mxu0 %v2028
        %2046 = vmatprep.subr.bf16.mxu0 0
        %2047 = vmatpush1.bf16.msra.mxu0 %v2029
        %2048 = vmatprep.subr.bf16.mxu0 0
        %2049 = vmatpush1.bf16.msra.mxu0 %v2030
        %2050 = vmatprep.subr.bf16.mxu0 0
        %2051 = vmatpush1.bf16.msra.mxu0 %v2031
        %2052 = vmatprep.subr.bf16.mxu0 0
        %2053 = vmatpush1.bf16.msra.mxu0 %v2032
        %2054 = vmatprep.subr.bf16.mxu0 0
        %2055 = vmatpush1.bf16.msra.mxu0 %v2033
        %2056 = vmatprep.subr.bf16.mxu0 0
        %2057 = vmatpush1.bf16.msra.mxu0 %v2034
        %2058 = vmatprep.subr.bf16.mxu0 0
        %2059 = vmatpush1.bf16.msra.mxu0 %v2035
        %2060 = vmatprep.subr.bf16.mxu0 0
        %2061 = vmatpush1.bf16.msra.mxu0 0
        %2062 = vmatprep.subr.bf16.mxu0 0
        %2063 = vmatpush1.bf16.msra.mxu0 0
        %2064 = vmatprep.subr.bf16.mxu0 0
        %2065 = vmatpush1.bf16.msra.mxu0 0
        %2066 = vmatprep.subr.bf16.mxu0 0
        %2067 = vmatpush1.bf16.msra.mxu0 0
        %2068 = vmatprep.subr.bf16.mxu0 0
        %2069 = vmatpush1.bf16.msra.mxu0 0
        %2070 = vmatprep.subr.bf16.mxu0 0
        %2071 = vmatpush1.bf16.msra.mxu0 0
        %2072 = vmatprep.subr.bf16.mxu0 0
        %2073 = vmatpush1.bf16.msra.mxu0 0
        %2074 = vmatprep.subr.bf16.mxu0 0
        %2075 = vmatpush1.bf16.msra.mxu0 0
        %2076 = vmatprep.mubr.bf16.mxu0 0
        %2077 = vmatmul.mubr.bf16.gmra.mrb[0].mxu0 %v1972
        %v2078 = vpop.f32.mrb[0].mxu0
        %v2079 = vadd.f32 0.0, %v2078
        %v2080 = vpop.f32.mrb[0].mxu0
        %v2081 = vpop.f32.mrb[0].mxu0
        %v2082 = vadd.f32 0.0, %v2081
        %v2083 = vpop.f32.mrb[0].mxu0
        %2084 = vmatprep.mubr.bf16.mxu0 0
        %2085 = vmatmul.mubr.bf16.gmra.mrb[0].mxu0 %v1973
        %v2086 = vpop.f32.mrb[0].mxu0
        %v2087 = vadd.f32 0.0, %v2086
        %v2088 = vpop.f32.mrb[0].mxu0
        %v2089 = vpop.f32.mrb[0].mxu0
        %v2090 = vadd.f32 0.0, %v2089
        %v2091 = vpop.f32.mrb[0].mxu0
        %2092 = vmatprep.mubr.bf16.mxu0 0
        %2093 = vmatmul.mubr.bf16.gmra.mrb[0].mxu0 %v1974
        %v2094 = vpop.f32.mrb[0].mxu0
        %v2095 = vadd.f32 0.0, %v2094
        %v2096 = vpop.f32.mrb[0].mxu0
        %v2097 = vpop.f32.mrb[0].mxu0
        %v2098 = vadd.f32 0.0, %v2097
        %v2099 = vpop.f32.mrb[0].mxu0
        %2100 = vmatprep.mubr.bf16.mxu0 0
        %2101 = vmatmul.mubr.bf16.gmra.mrb[0].mxu0 %v1975
        %v2102 = vpop.f32.mrb[0].mxu0
        %v2103 = vadd.f32 0.0, %v2102
        %v2104 = vpop.f32.mrb[0].mxu0
        %v2105 = vpop.f32.mrb[0].mxu0
        %v2106 = vadd.f32 0.0, %v2105
        %v2107 = vpop.f32.mrb[0].mxu0
        %2108 = vmatprep.mubr.bf16.mxu0 0
        %2109 = vmatmul.mubr.bf16.gmra.mrb[0].mxu0 %v1976
        %v2110 = vpop.f32.mrb[0].mxu0
        %v2111 = vadd.f32 0.0, %v2110
        %v2112 = vpop.f32.mrb[0].mxu0
        %v2113 = vpop.f32.mrb[0].mxu0
        %v2114 = vadd.f32 0.0, %v2113
        %v2115 = vpop.f32.mrb[0].mxu0
        %2116 = vmatprep.mubr.bf16.mxu0 0
        %2117 = vmatmul.mubr.bf16.gmra.mrb[0].mxu0 %v1977
        %v2118 = vpop.f32.mrb[0].mxu0
        %v2119 = vadd.f32 0.0, %v2118
        %v2120 = vpop.f32.mrb[0].mxu0
        %v2121 = vpop.f32.mrb[0].mxu0
        %v2122 = vadd.f32 0.0, %v2121
        %v2123 = vpop.f32.mrb[0].mxu0
        %2124 = vmatprep.mubr.bf16.mxu0 0
        %2125 = vmatmul.mubr.bf16.gmra.mrb[0].mxu0 %v1978
        %v2126 = vpop.f32.mrb[0].mxu0
        %v2127 = vadd.f32 0.0, %v2126
        %v2128 = vpop.f32.mrb[0].mxu0
        %v2129 = vpop.f32.mrb[0].mxu0
        %v2130 = vadd.f32 0.0, %v2129
        %v2131 = vpop.f32.mrb[0].mxu0
        %2132 = vmatprep.mubr.bf16.mxu0 0
        %2133 = vmatmul.mubr.bf16.gmra.mrb[0].mxu0 %v1979
        %v2134 = vpop.f32.mrb[0].mxu0
        %v2135 = vadd.f32 0.0, %v2134
        %v2136 = vpop.f32.mrb[0].mxu0
        %v2137 = vpop.f32.mrb[0].mxu0
        %v2138 = vadd.f32 0.0, %v2137
        %v2139 = vpop.f32.mrb[0].mxu0
        %2140 = vdwg.mxu0
        %v2141 = vadd.f32 %v543, %v2079
        %v2142 = vadd.f32 %v544, %v2082
        %v2143 = vadd.f32 %v545, %v2087
        %v2144 = vadd.f32 %v546, %v2090
        %v2145 = vadd.f32 %v547, %v2095
        %v2146 = vadd.f32 %v548, %v2098
        %v2147 = vadd.f32 %v549, %v2103
        %v2148 = vadd.f32 %v550, %v2106
        %v2149 = vadd.f32 %v551, %v2111
        %v2150 = vadd.f32 %v552, %v2114
        %v2151 = vadd.f32 %v553, %v2119
        %v2152 = vadd.f32 %v554, %v2122
        %v2153 = vadd.f32 %v555, %v2127
        %v2154 = vadd.f32 %v556, %v2130
        %v2155 = vadd.f32 %v557, %v2135
        %v2156 = vadd.f32 %v558, %v2138
        %v2157 = vld [vmem:[#allocation16] sm:$0x1]
        %v2158 = vmul.f32 %v2141, %v2141
        %v2159 = vmul.f32 %v2142, %v2142
        %v2160 = vmul.f32 %v2143, %v2143
        %v2161 = vmul.f32 %v2144, %v2144
        %v2162 = vmul.f32 %v2145, %v2145
        %v2163 = vmul.f32 %v2146, %v2146
        %v2164 = vmul.f32 %v2147, %v2147
        %v2165 = vmul.f32 %v2148, %v2148
        %v2166 = vmul.f32 %v2149, %v2149
        %v2167 = vmul.f32 %v2150, %v2150
        %v2168 = vmul.f32 %v2151, %v2151
        %v2169 = vmul.f32 %v2152, %v2152
        %v2170 = vmul.f32 %v2153, %v2153
        %v2171 = vmul.f32 %v2154, %v2154
        %v2172 = vmul.f32 %v2155, %v2155
        %v2173 = vmul.f32 %v2156, %v2156
        %2174 = vadd.xlane.f32.xlu0 %v2158
        %v2175 = vpop.xlane.xlu0 %2174
        %2176 = vadd.xlane.f32.xlu0 %v2159
        %v2177 = vpop.xlane.xlu0 %2176
        %2178 = vadd.xlane.f32.xlu0 %v2160
        %v2179 = vpop.xlane.xlu0 %2178
        %2180 = vadd.xlane.f32.xlu0 %v2161
        %v2181 = vpop.xlane.xlu0 %2180
        %2182 = vadd.xlane.f32.xlu0 %v2162
        %v2183 = vpop.xlane.xlu0 %2182
        %2184 = vadd.xlane.f32.xlu0 %v2163
        %v2185 = vpop.xlane.xlu0 %2184
        %2186 = vadd.xlane.f32.xlu0 %v2164
        %v2187 = vpop.xlane.xlu0 %2186
        %2188 = vadd.xlane.f32.xlu0 %v2165
        %v2189 = vpop.xlane.xlu0 %2188
        %2190 = vadd.xlane.f32.xlu0 %v2166
        %v2191 = vpop.xlane.xlu0 %2190
        %2192 = vadd.xlane.f32.xlu0 %v2167
        %v2193 = vpop.xlane.xlu0 %2192
        %2194 = vadd.xlane.f32.xlu0 %v2168
        %v2195 = vpop.xlane.xlu0 %2194
        %2196 = vadd.xlane.f32.xlu0 %v2169
        %v2197 = vpop.xlane.xlu0 %2196
        %2198 = vadd.xlane.f32.xlu0 %v2170
        %v2199 = vpop.xlane.xlu0 %2198
        %2200 = vadd.xlane.f32.xlu0 %v2171
        %v2201 = vpop.xlane.xlu0 %2200
        %2202 = vadd.xlane.f32.xlu0 %v2172
        %v2203 = vpop.xlane.xlu0 %2202
        %2204 = vadd.xlane.f32.xlu0 %v2173
        %v2205 = vpop.xlane.xlu0 %2204
        %v2206 = vmul.f32 %v2175, %v608
        %v2207 = vmul.f32 %v2177, %v608
        %v2208 = vmul.f32 %v2179, %v608
        %v2209 = vmul.f32 %v2181, %v608
        %v2210 = vmul.f32 %v2183, %v608
        %v2211 = vmul.f32 %v2185, %v608
        %v2212 = vmul.f32 %v2187, %v608
        %v2213 = vmul.f32 %v2189, %v608
        %v2214 = vmul.f32 %v2191, %v608
        %v2215 = vmul.f32 %v2193, %v608
        %v2216 = vmul.f32 %v2195, %v608
        %v2217 = vmul.f32 %v2197, %v608
        %v2218 = vmul.f32 %v2199, %v608
        %v2219 = vmul.f32 %v2201, %v608
        %v2220 = vmul.f32 %v2203, %v608
        %v2221 = vmul.f32 %v2205, %v608
        %v2222 = vadd.f32 %v2206, 1e-06
        %v2223 = vadd.f32 %v2207, 1e-06
        %v2224 = vadd.f32 %v2208, 1e-06
        %v2225 = vadd.f32 %v2209, 1e-06
        %v2226 = vadd.f32 %v2210, 1e-06
        %v2227 = vadd.f32 %v2211, 1e-06
        %v2228 = vadd.f32 %v2212, 1e-06
        %v2229 = vadd.f32 %v2213, 1e-06
        %v2230 = vadd.f32 %v2214, 1e-06
        %v2231 = vadd.f32 %v2215, 1e-06
        %v2232 = vadd.f32 %v2216, 1e-06
        %v2233 = vadd.f32 %v2217, 1e-06
        %v2234 = vadd.f32 %v2218, 1e-06
        %v2235 = vadd.f32 %v2219, 1e-06
        %v2236 = vadd.f32 %v2220, 1e-06
        %v2237 = vadd.f32 %v2221, 1e-06
        %v2238 = vrsqrt.pop %v2222
        %v2239 = vrsqrt.pop %v2223
        %v2240 = vrsqrt.pop %v2224
        %v2241 = vrsqrt.pop %v2225
        %v2242 = vrsqrt.pop %v2226
        %v2243 = vrsqrt.pop %v2227
        %v2244 = vrsqrt.pop %v2228
        %v2245 = vrsqrt.pop %v2229
        %v2246 = vrsqrt.pop %v2230
        %v2247 = vrsqrt.pop %v2231
        %v2248 = vrsqrt.pop %v2232
        %v2249 = vrsqrt.pop %v2233
        %v2250 = vrsqrt.pop %v2234
        %v2251 = vrsqrt.pop %v2235
        %v2252 = vrsqrt.pop %v2236
        %v2253 = vrsqrt.pop %v2237
        %v2254 = vmul.f32 %v2141, %v2238
        %v2255 = vmul.f32 %v2142, %v2239
        %v2256 = vmul.f32 %v2143, %v2240
        %v2257 = vmul.f32 %v2144, %v2241
        %v2258 = vmul.f32 %v2145, %v2242
        %v2259 = vmul.f32 %v2146, %v2243
        %v2260 = vmul.f32 %v2147, %v2244
        %v2261 = vmul.f32 %v2148, %v2245
        %v2262 = vmul.f32 %v2149, %v2246
        %v2263 = vmul.f32 %v2150, %v2247
        %v2264 = vmul.f32 %v2151, %v2248
        %v2265 = vmul.f32 %v2152, %v2249
        %v2266 = vmul.f32 %v2153, %v2250
        %v2267 = vmul.f32 %v2154, %v2251
        %v2268 = vmul.f32 %v2155, %v2252
        %v2269 = vmul.f32 %v2156, %v2253
        %v2271 = vlaneseq
        %v2272 = vshrl.u32 %v2271, 7
        %v2273 = vsub.s32 0, %v2272
        %v2274 = vrot.slane %v2157, %v2273
        %v2276 = vmul.f32 %v2254, %v2274
        %v2277 = vmul.f32 %v2255, %v2274
        %v2278 = vmul.f32 %v2256, %v2274
        %v2279 = vmul.f32 %v2257, %v2274
        %v2280 = vmul.f32 %v2258, %v2274
        %v2281 = vmul.f32 %v2259, %v2274
        %v2282 = vmul.f32 %v2260, %v2274
        %v2283 = vmul.f32 %v2261, %v2274
        %v2284 = vmul.f32 %v2262, %v2274
        %v2285 = vmul.f32 %v2263, %v2274
        %v2286 = vmul.f32 %v2264, %v2274
        %v2287 = vmul.f32 %v2265, %v2274
        %v2288 = vmul.f32 %v2266, %v2274
        %v2289 = vmul.f32 %v2267, %v2274
        %v2290 = vmul.f32 %v2268, %v2274
        %v2291 = vmul.f32 %v2269, %v2274
        %v2292 = vpack.c.bf16 %v2277, %v2276
        %v2293 = vpack.c.bf16 %v2279, %v2278
        %v2294 = vpack.c.bf16 %v2281, %v2280
        %v2295 = vpack.c.bf16 %v2283, %v2282
        %v2296 = vpack.c.bf16 %v2285, %v2284
        %v2297 = vpack.c.bf16 %v2287, %v2286
        %v2298 = vpack.c.bf16 %v2289, %v2288
        %v2299 = vpack.c.bf16 %v2291, %v2290
        %v2300 = vld [vmem:[#allocation17] sm:$0xff]
        %v2301 = vld [vmem:[#allocation17 + $0x8] sm:$0xff]
        %v2302 = vld [vmem:[#allocation17 + $0x10] sm:$0xff]
        %v2303 = vld [vmem:[#allocation17 + $0x18] sm:$0xff]
        %v2304 = vld [vmem:[#allocation17 + $0x20] sm:$0xff]
        %v2305 = vld [vmem:[#allocation17 + $0x28] sm:$0xff]
        %v2306 = vld [vmem:[#allocation17 + $0x30] sm:$0xff]
        %v2307 = vld [vmem:[#allocation17 + $0x38] sm:$0xff]
        %v2308 = vld [vmem:[#allocation17 + $0x40] sm:$0xff]
        %v2309 = vld [vmem:[#allocation17 + $0x48] sm:$0xff]
        %v2310 = vld [vmem:[#allocation17 + $0x50] sm:$0xff]
        %v2311 = vld [vmem:[#allocation17 + $0x58] sm:$0xff]
        %v2312 = vld [vmem:[#allocation17 + $0x60] sm:$0xff]
        %v2313 = vld [vmem:[#allocation17 + $0x68] sm:$0xff]
        %v2314 = vld [vmem:[#allocation17 + $0x70] sm:$0xff]
        %v2315 = vld [vmem:[#allocation17 + $0x78] sm:$0xff]
        %v2316 = vld [vmem:[#allocation17 + $0x80] sm:$0xff]
        %v2317 = vld [vmem:[#allocation17 + $0x88] sm:$0xff]
        %v2318 = vld [vmem:[#allocation17 + $0x90] sm:$0xff]
        %v2319 = vld [vmem:[#allocation17 + $0x98] sm:$0xff]
        %v2320 = vld [vmem:[#allocation17 + $0xa0] sm:$0xff]
        %v2321 = vld [vmem:[#allocation17 + $0xa8] sm:$0xff]
        %v2322 = vld [vmem:[#allocation17 + $0xb0] sm:$0xff]
        %v2323 = vld [vmem:[#allocation17 + $0xb8] sm:$0xff]
        %v2324 = vld [vmem:[#allocation17 + $0xc0] sm:$0xff]
        %v2325 = vld [vmem:[#allocation17 + $0xc8] sm:$0xff]
        %v2326 = vld [vmem:[#allocation17 + $0xd0] sm:$0xff]
        %v2327 = vld [vmem:[#allocation17 + $0xd8] sm:$0xff]
        %v2328 = vld [vmem:[#allocation17 + $0xe0] sm:$0xff]
        %v2329 = vld [vmem:[#allocation17 + $0xe8] sm:$0xff]
        %v2330 = vld [vmem:[#allocation17 + $0xf0] sm:$0xff]
        %v2331 = vld [vmem:[#allocation17 + $0xf8] sm:$0xff]
        %v2364 = vunpack.c.l.b16 %v2300
        %v2365 = vunpack.c.h.b16 %v2300
        %v2366 = vunpack.c.l.b16 %v2301
        %v2367 = vunpack.c.h.b16 %v2301
        %v2368 = vunpack.c.l.b16 %v2302
        %v2369 = vunpack.c.h.b16 %v2302
        %v2370 = vunpack.c.l.b16 %v2303
        %v2371 = vunpack.c.h.b16 %v2303
        %v2372 = vunpack.c.l.b16 %v2304
        %v2373 = vunpack.c.h.b16 %v2304
        %v2374 = vunpack.c.l.b16 %v2305
        %v2375 = vunpack.c.h.b16 %v2305
        %v2376 = vunpack.c.l.b16 %v2306
        %v2377 = vunpack.c.h.b16 %v2306
        %v2378 = vunpack.c.l.b16 %v2307
        %v2379 = vunpack.c.h.b16 %v2307
        %v2380 = vunpack.c.l.b16 %v2308
        %v2381 = vunpack.c.h.b16 %v2308
        %v2382 = vunpack.c.l.b16 %v2309
        %v2383 = vunpack.c.h.b16 %v2309
        %v2384 = vunpack.c.l.b16 %v2310
        %v2385 = vunpack.c.h.b16 %v2310
        %v2386 = vunpack.c.l.b16 %v2311
        %v2387 = vunpack.c.h.b16 %v2311
        %v2388 = vunpack.c.l.b16 %v2312
        %v2389 = vunpack.c.h.b16 %v2312
        %v2390 = vunpack.c.l.b16 %v2313
        %v2391 = vunpack.c.h.b16 %v2313
        %v2392 = vunpack.c.l.b16 %v2314
        %v2393 = vunpack.c.h.b16 %v2314
        %v2394 = vunpack.c.l.b16 %v2315
        %v2395 = vunpack.c.h.b16 %v2315
        %v2396 = vunpack.c.l.b16 %v2316
        %v2397 = vunpack.c.h.b16 %v2316
        %v2398 = vunpack.c.l.b16 %v2317
        %v2399 = vunpack.c.h.b16 %v2317
        %v2400 = vunpack.c.l.b16 %v2318
        %v2401 = vunpack.c.h.b16 %v2318
        %v2402 = vunpack.c.l.b16 %v2319
        %v2403 = vunpack.c.h.b16 %v2319
        %v2404 = vunpack.c.l.b16 %v2320
        %v2405 = vunpack.c.h.b16 %v2320
        %v2406 = vunpack.c.l.b16 %v2321
        %v2407 = vunpack.c.h.b16 %v2321
        %v2408 = vunpack.c.l.b16 %v2322
        %v2409 = vunpack.c.h.b16 %v2322
        %v2410 = vunpack.c.l.b16 %v2323
        %v2411 = vunpack.c.h.b16 %v2323
        %v2412 = vunpack.c.l.b16 %v2324
        %v2413 = vunpack.c.h.b16 %v2324
        %v2414 = vunpack.c.l.b16 %v2325
        %v2415 = vunpack.c.h.b16 %v2325
        %v2416 = vunpack.c.l.b16 %v2326
        %v2417 = vunpack.c.h.b16 %v2326
        %v2418 = vunpack.c.l.b16 %v2327
        %v2419 = vunpack.c.h.b16 %v2327
        %v2420 = vunpack.c.l.b16 %v2328
        %v2421 = vunpack.c.h.b16 %v2328
        %v2422 = vunpack.c.l.b16 %v2329
        %v2423 = vunpack.c.h.b16 %v2329
        %v2424 = vunpack.c.l.b16 %v2330
        %v2425 = vunpack.c.h.b16 %v2330
        %v2426 = vunpack.c.l.b16 %v2331
        %v2427 = vunpack.c.h.b16 %v2331
        %v2428 = vpack.c.b16 %v2368, %v2364
        %v2429 = vpack.c.b16 %v2369, %v2365
        %v2430 = vpack.c.b16 %v2370, %v2366
        %v2431 = vpack.c.b16 %v2371, %v2367
        %v2432 = vpack.c.b16 %v2376, %v2372
        %v2433 = vpack.c.b16 %v2377, %v2373
        %v2434 = vpack.c.b16 %v2378, %v2374
        %v2435 = vpack.c.b16 %v2379, %v2375
        %v2436 = vpack.c.b16 %v2384, %v2380
        %v2437 = vpack.c.b16 %v2385, %v2381
        %v2438 = vpack.c.b16 %v2386, %v2382
        %v2439 = vpack.c.b16 %v2387, %v2383
        %v2440 = vpack.c.b16 %v2392, %v2388
        %v2441 = vpack.c.b16 %v2393, %v2389
        %v2442 = vpack.c.b16 %v2394, %v2390
        %v2443 = vpack.c.b16 %v2395, %v2391
        %v2444 = vpack.c.b16 %v2400, %v2396
        %v2445 = vpack.c.b16 %v2401, %v2397
        %v2446 = vpack.c.b16 %v2402, %v2398
        %v2447 = vpack.c.b16 %v2403, %v2399
        %v2448 = vpack.c.b16 %v2408, %v2404
        %v2449 = vpack.c.b16 %v2409, %v2405
        %v2450 = vpack.c.b16 %v2410, %v2406
        %v2451 = vpack.c.b16 %v2411, %v2407
        %v2452 = vpack.c.b16 %v2416, %v2412
        %v2453 = vpack.c.b16 %v2417, %v2413
        %v2454 = vpack.c.b16 %v2418, %v2414
        %v2455 = vpack.c.b16 %v2419, %v2415
        %v2456 = vpack.c.b16 %v2424, %v2420
        %v2457 = vpack.c.b16 %v2425, %v2421
        %v2458 = vpack.c.b16 %v2426, %v2422
        %v2459 = vpack.c.b16 %v2427, %v2423
        %2492 = vmatprep.subr.bf16.mxu0 %v2429
        %2493 = vmatpush1.bf16.msra.mxu0 %v2428
        %2494 = vmatprep.subr.bf16.mxu0 %v2433
        %2495 = vmatpush1.bf16.msra.mxu0 %v2432
        %2496 = vmatprep.subr.bf16.mxu0 %v2437
        %2497 = vmatpush1.bf16.msra.mxu0 %v2436
        %2498 = vmatprep.subr.bf16.mxu0 %v2441
        %2499 = vmatpush1.bf16.msra.mxu0 %v2440
        %2500 = vmatprep.subr.bf16.mxu0 %v2445
        %2501 = vmatpush1.bf16.msra.mxu0 %v2444
        %2502 = vmatprep.subr.bf16.mxu0 %v2449
        %2503 = vmatpush1.bf16.msra.mxu0 %v2448
        %2504 = vmatprep.subr.bf16.mxu0 %v2453
        %2505 = vmatpush1.bf16.msra.mxu0 %v2452
        %2506 = vmatprep.subr.bf16.mxu0 %v2457
        %2507 = vmatpush1.bf16.msra.mxu0 %v2456
        %2508 = vmatprep.subr.bf16.mxu0 0
        %2509 = vmatpush1.bf16.msra.mxu0 0
        %2510 = vmatprep.subr.bf16.mxu0 0
        %2511 = vmatpush1.bf16.msra.mxu0 0
        %2512 = vmatprep.subr.bf16.mxu0 0
        %2513 = vmatpush1.bf16.msra.mxu0 0
        %2514 = vmatprep.subr.bf16.mxu0 0
        %2515 = vmatpush1.bf16.msra.mxu0 0
        %2516 = vmatprep.subr.bf16.mxu0 0
        %2517 = vmatpush1.bf16.msra.mxu0 0
        %2518 = vmatprep.subr.bf16.mxu0 0
        %2519 = vmatpush1.bf16.msra.mxu0 0
        %2520 = vmatprep.subr.bf16.mxu0 0
        %2521 = vmatpush1.bf16.msra.mxu0 0
        %2522 = vmatprep.subr.bf16.mxu0 0
        %2523 = vmatpush1.bf16.msra.mxu0 0
        %2524 = vmatprep.mubr.bf16.mxu0 0
        %2525 = vmatmul.mubr.bf16.gmra.mrb[0].mxu0 %v2292
        %v2526 = vpop.f32.mrb[0].mxu0
        %v2527 = vadd.f32 0.0, %v2526
        %v2528 = vpop.f32.mrb[0].mxu0
        %v2529 = vadd.f32 0.0, %v2528
        %v2530 = vpop.f32.mrb[0].mxu0
        %v2531 = vadd.f32 0.0, %v2530
        %v2532 = vpop.f32.mrb[0].mxu0
        %v2533 = vadd.f32 0.0, %v2532
        %2534 = vmatprep.mubr.bf16.mxu0 0
        %2535 = vmatmul.mubr.bf16.gmra.mrb[0].mxu0 %v2293
        %v2536 = vpop.f32.mrb[0].mxu0
        %v2537 = vadd.f32 0.0, %v2536
        %v2538 = vpop.f32.mrb[0].mxu0
        %v2539 = vadd.f32 0.0, %v2538
        %v2540 = vpop.f32.mrb[0].mxu0
        %v2541 = vadd.f32 0.0, %v2540
        %v2542 = vpop.f32.mrb[0].mxu0
        %v2543 = vadd.f32 0.0, %v2542
        %2544 = vmatprep.mubr.bf16.mxu0 0
        %2545 = vmatmul.mubr.bf16.gmra.mrb[0].mxu0 %v2294
        %v2546 = vpop.f32.mrb[0].mxu0
        %v2547 = vadd.f32 0.0, %v2546
        %v2548 = vpop.f32.mrb[0].mxu0
        %v2549 = vadd.f32 0.0, %v2548
        %v2550 = vpop.f32.mrb[0].mxu0
        %v2551 = vadd.f32 0.0, %v2550
        %v2552 = vpop.f32.mrb[0].mxu0
        %v2553 = vadd.f32 0.0, %v2552
        %2554 = vmatprep.mubr.bf16.mxu0 0
        %2555 = vmatmul.mubr.bf16.gmra.mrb[0].mxu0 %v2295
        %v2556 = vpop.f32.mrb[0].mxu0
        %v2557 = vadd.f32 0.0, %v2556
        %v2558 = vpop.f32.mrb[0].mxu0
        %v2559 = vadd.f32 0.0, %v2558
        %v2560 = vpop.f32.mrb[0].mxu0
        %v2561 = vadd.f32 0.0, %v2560
        %v2562 = vpop.f32.mrb[0].mxu0
        %v2563 = vadd.f32 0.0, %v2562
        %2564 = vmatprep.mubr.bf16.mxu0 0
        %2565 = vmatmul.mubr.bf16.gmra.mrb[0].mxu0 %v2296
        %v2566 = vpop.f32.mrb[0].mxu0
        %v2567 = vadd.f32 0.0, %v2566
        %v2568 = vpop.f32.mrb[0].mxu0
        %v2569 = vadd.f32 0.0, %v2568
        %v2570 = vpop.f32.mrb[0].mxu0
        %v2571 = vadd.f32 0.0, %v2570
        %v2572 = vpop.f32.mrb[0].mxu0
        %v2573 = vadd.f32 0.0, %v2572
        %2574 = vmatprep.mubr.bf16.mxu0 0
        %2575 = vmatmul.mubr.bf16.gmra.mrb[0].mxu0 %v2297
        %v2576 = vpop.f32.mrb[0].mxu0
        %v2577 = vadd.f32 0.0, %v2576
        %v2578 = vpop.f32.mrb[0].mxu0
        %v2579 = vadd.f32 0.0, %v2578
        %v2580 = vpop.f32.mrb[0].mxu0
        %v2581 = vadd.f32 0.0, %v2580
        %v2582 = vpop.f32.mrb[0].mxu0
        %v2583 = vadd.f32 0.0, %v2582
        %2584 = vmatprep.mubr.bf16.mxu0 0
        %2585 = vmatmul.mubr.bf16.gmra.mrb[0].mxu0 %v2298
        %v2586 = vpop.f32.mrb[0].mxu0
        %v2587 = vadd.f32 0.0, %v2586
        %v2588 = vpop.f32.mrb[0].mxu0
        %v2589 = vadd.f32 0.0, %v2588
        %v2590 = vpop.f32.mrb[0].mxu0
        %v2591 = vadd.f32 0.0, %v2590
        %v2592 = vpop.f32.mrb[0].mxu0
        %v2593 = vadd.f32 0.0, %v2592
        %2594 = vmatprep.mubr.bf16.mxu0 0
        %2595 = vmatmul.mubr.bf16.gmra.mrb[0].mxu0 %v2299
        %v2596 = vpop.f32.mrb[0].mxu0
        %v2597 = vadd.f32 0.0, %v2596
        %v2598 = vpop.f32.mrb[0].mxu0
        %v2599 = vadd.f32 0.0, %v2598
        %v2600 = vpop.f32.mrb[0].mxu0
        %v2601 = vadd.f32 0.0, %v2600
        %v2602 = vpop.f32.mrb[0].mxu0
        %v2603 = vadd.f32 0.0, %v2602
        %2604 = vdwg.mxu0
        %2605 = vmatprep.subr.bf16.mxu0 %v2431
        %2606 = vmatpush1.bf16.msra.mxu0 %v2430
        %2607 = vmatprep.subr.bf16.mxu0 %v2435
        %2608 = vmatpush1.bf16.msra.mxu0 %v2434
        %2609 = vmatprep.subr.bf16.mxu0 %v2439
        %2610 = vmatpush1.bf16.msra.mxu0 %v2438
        %2611 = vmatprep.subr.bf16.mxu0 %v2443
        %2612 = vmatpush1.bf16.msra.mxu0 %v2442
        %2613 = vmatprep.subr.bf16.mxu0 %v2447
        %2614 = vmatpush1.bf16.msra.mxu0 %v2446
        %2615 = vmatprep.subr.bf16.mxu0 %v2451
        %2616 = vmatpush1.bf16.msra.mxu0 %v2450
        %2617 = vmatprep.subr.bf16.mxu0 %v2455
        %2618 = vmatpush1.bf16.msra.mxu0 %v2454
        %2619 = vmatprep.subr.bf16.mxu0 %v2459
        %2620 = vmatpush1.bf16.msra.mxu0 %v2458
        %2621 = vmatprep.subr.bf16.mxu0 0
        %2622 = vmatpush1.bf16.msra.mxu0 0
        %2623 = vmatprep.subr.bf16.mxu0 0
        %2624 = vmatpush1.bf16.msra.mxu0 0
        %2625 = vmatprep.subr.bf16.mxu0 0
        %2626 = vmatpush1.bf16.msra.mxu0 0
        %2627 = vmatprep.subr.bf16.mxu0 0
        %2628 = vmatpush1.bf16.msra.mxu0 0
        %2629 = vmatprep.subr.bf16.mxu0 0
        %2630 = vmatpush1.bf16.msra.mxu0 0
        %2631 = vmatprep.subr.bf16.mxu0 0
        %2632 = vmatpush1.bf16.msra.mxu0 0
        %2633 = vmatprep.subr.bf16.mxu0 0
        %2634 = vmatpush1.bf16.msra.mxu0 0
        %2635 = vmatprep.subr.bf16.mxu0 0
        %2636 = vmatpush1.bf16.msra.mxu0 0
        %2637 = vmatprep.mubr.bf16.mxu0 0
        %2638 = vmatmul.mubr.bf16.gmra.mrb[0].mxu0 %v2292
        %v2639 = vpop.f32.mrb[0].mxu0
        %v2640 = vadd.f32 0.0, %v2639
        %v2641 = vpop.f32.mrb[0].mxu0
        %v2642 = vadd.f32 0.0, %v2641
        %v2643 = vpop.f32.mrb[0].mxu0
        %v2644 = vadd.f32 0.0, %v2643
        %v2645 = vpop.f32.mrb[0].mxu0
        %v2646 = vadd.f32 0.0, %v2645
        %2647 = vmatprep.mubr.bf16.mxu0 0
        %2648 = vmatmul.mubr.bf16.gmra.mrb[0].mxu0 %v2293
        %v2649 = vpop.f32.mrb[0].mxu0
        %v2650 = vadd.f32 0.0, %v2649
        %v2651 = vpop.f32.mrb[0].mxu0
        %v2652 = vadd.f32 0.0, %v2651
        %v2653 = vpop.f32.mrb[0].mxu0
        %v2654 = vadd.f32 0.0, %v2653
        %v2655 = vpop.f32.mrb[0].mxu0
        %v2656 = vadd.f32 0.0, %v2655
        %2657 = vmatprep.mubr.bf16.mxu0 0
        %2658 = vmatmul.mubr.bf16.gmra.mrb[0].mxu0 %v2294
        %v2659 = vpop.f32.mrb[0].mxu0
        %v2660 = vadd.f32 0.0, %v2659
        %v2661 = vpop.f32.mrb[0].mxu0
        %v2662 = vadd.f32 0.0, %v2661
        %v2663 = vpop.f32.mrb[0].mxu0
        %v2664 = vadd.f32 0.0, %v2663
        %v2665 = vpop.f32.mrb[0].mxu0
        %v2666 = vadd.f32 0.0, %v2665
        %2667 = vmatprep.mubr.bf16.mxu0 0
        %2668 = vmatmul.mubr.bf16.gmra.mrb[0].mxu0 %v2295
        %v2669 = vpop.f32.mrb[0].mxu0
        %v2670 = vadd.f32 0.0, %v2669
        %v2671 = vpop.f32.mrb[0].mxu0
        %v2672 = vadd.f32 0.0, %v2671
        %v2673 = vpop.f32.mrb[0].mxu0
        %v2674 = vadd.f32 0.0, %v2673
        %v2675 = vpop.f32.mrb[0].mxu0
        %v2676 = vadd.f32 0.0, %v2675
        %2677 = vmatprep.mubr.bf16.mxu0 0
        %2678 = vmatmul.mubr.bf16.gmra.mrb[0].mxu0 %v2296
        %v2679 = vpop.f32.mrb[0].mxu0
        %v2680 = vadd.f32 0.0, %v2679
        %v2681 = vpop.f32.mrb[0].mxu0
        %v2682 = vadd.f32 0.0, %v2681
        %v2683 = vpop.f32.mrb[0].mxu0
        %v2684 = vadd.f32 0.0, %v2683
        %v2685 = vpop.f32.mrb[0].mxu0
        %v2686 = vadd.f32 0.0, %v2685
        %2687 = vmatprep.mubr.bf16.mxu0 0
        %2688 = vmatmul.mubr.bf16.gmra.mrb[0].mxu0 %v2297
        %v2689 = vpop.f32.mrb[0].mxu0
        %v2690 = vadd.f32 0.0, %v2689
        %v2691 = vpop.f32.mrb[0].mxu0
        %v2692 = vadd.f32 0.0, %v2691
        %v2693 = vpop.f32.mrb[0].mxu0
        %v2694 = vadd.f32 0.0, %v2693
        %v2695 = vpop.f32.mrb[0].mxu0
        %v2696 = vadd.f32 0.0, %v2695
        %2697 = vmatprep.mubr.bf16.mxu0 0
        %2698 = vmatmul.mubr.bf16.gmra.mrb[0].mxu0 %v2298
        %v2699 = vpop.f32.mrb[0].mxu0
        %v2700 = vadd.f32 0.0, %v2699
        %v2701 = vpop.f32.mrb[0].mxu0
        %v2702 = vadd.f32 0.0, %v2701
        %v2703 = vpop.f32.mrb[0].mxu0
        %v2704 = vadd.f32 0.0, %v2703
        %v2705 = vpop.f32.mrb[0].mxu0
        %v2706 = vadd.f32 0.0, %v2705
        %2707 = vmatprep.mubr.bf16.mxu0 0
        %2708 = vmatmul.mubr.bf16.gmra.mrb[0].mxu0 %v2299
        %v2709 = vpop.f32.mrb[0].mxu0
        %v2710 = vadd.f32 0.0, %v2709
        %v2711 = vpop.f32.mrb[0].mxu0
        %v2712 = vadd.f32 0.0, %v2711
        %v2713 = vpop.f32.mrb[0].mxu0
        %v2714 = vadd.f32 0.0, %v2713
        %v2715 = vpop.f32.mrb[0].mxu0
        %v2716 = vadd.f32 0.0, %v2715
        %2717 = vdwg.mxu0
        %v2718 = vxor.u32 %v2527, 2147483648
        %v2719 = vxor.u32 %v2529, 2147483648
        %v2720 = vxor.u32 %v2531, 2147483648
        %v2721 = vxor.u32 %v2533, 2147483648
        %v2722 = vxor.u32 %v2537, 2147483648
        %v2723 = vxor.u32 %v2539, 2147483648
        %v2724 = vxor.u32 %v2541, 2147483648
        %v2725 = vxor.u32 %v2543, 2147483648
        %v2726 = vxor.u32 %v2547, 2147483648
        %v2727 = vxor.u32 %v2549, 2147483648
        %v2728 = vxor.u32 %v2551, 2147483648
        %v2729 = vxor.u32 %v2553, 2147483648
        %v2730 = vxor.u32 %v2557, 2147483648
        %v2731 = vxor.u32 %v2559, 2147483648
        %v2732 = vxor.u32 %v2561, 2147483648
        %v2733 = vxor.u32 %v2563, 2147483648
        %v2734 = vxor.u32 %v2567, 2147483648
        %v2735 = vxor.u32 %v2569, 2147483648
        %v2736 = vxor.u32 %v2571, 2147483648
        %v2737 = vxor.u32 %v2573, 2147483648
        %v2738 = vxor.u32 %v2577, 2147483648
        %v2739 = vxor.u32 %v2579, 2147483648
        %v2740 = vxor.u32 %v2581, 2147483648
        %v2741 = vxor.u32 %v2583, 2147483648
        %v2742 = vxor.u32 %v2587, 2147483648
        %v2743 = vxor.u32 %v2589, 2147483648
        %v2744 = vxor.u32 %v2591, 2147483648
        %v2745 = vxor.u32 %v2593, 2147483648
        %v2746 = vxor.u32 %v2597, 2147483648
        %v2747 = vxor.u32 %v2599, 2147483648
        %v2748 = vxor.u32 %v2601, 2147483648
        %v2749 = vxor.u32 %v2603, 2147483648
        %v2750 = vmul.f32 %v2718, 1.442695
        %v2751 = vpow.pop %v2750
        %v2752 = vmul.f32 %v2719, 1.442695
        %v2753 = vpow.pop %v2752
        %v2754 = vmul.f32 %v2720, 1.442695
        %v2755 = vpow.pop %v2754
        %v2756 = vmul.f32 %v2721, 1.442695
        %v2757 = vpow.pop %v2756
        %v2758 = vmul.f32 %v2722, 1.442695
        %v2759 = vpow.pop %v2758
        %v2760 = vmul.f32 %v2723, 1.442695
        %v2761 = vpow.pop %v2760
        %v2762 = vmul.f32 %v2724, 1.442695
        %v2763 = vpow.pop %v2762
        %v2764 = vmul.f32 %v2725, 1.442695
        %v2765 = vpow.pop %v2764
        %v2766 = vmul.f32 %v2726, 1.442695
        %v2767 = vpow.pop %v2766
        %v2768 = vmul.f32 %v2727, 1.442695
        %v2769 = vpow.pop %v2768
        %v2770 = vmul.f32 %v2728, 1.442695
        %v2771 = vpow.pop %v2770
        %v2772 = vmul.f32 %v2729, 1.442695
        %v2773 = vpow.pop %v2772
        %v2774 = vmul.f32 %v2730, 1.442695
        %v2775 = vpow.pop %v2774
        %v2776 = vmul.f32 %v2731, 1.442695
        %v2777 = vpow.pop %v2776
        %v2778 = vmul.f32 %v2732, 1.442695
        %v2779 = vpow.pop %v2778
        %v2780 = vmul.f32 %v2733, 1.442695
        %v2781 = vpow.pop %v2780
        %v2782 = vmul.f32 %v2734, 1.442695
        %v2783 = vpow.pop %v2782
        %v2784 = vmul.f32 %v2735, 1.442695
        %v2785 = vpow.pop %v2784
        %v2786 = vmul.f32 %v2736, 1.442695
        %v2787 = vpow.pop %v2786
        %v2788 = vmul.f32 %v2737, 1.442695
        %v2789 = vpow.pop %v2788
        %v2790 = vmul.f32 %v2738, 1.442695
        %v2791 = vpow.pop %v2790
        %v2792 = vmul.f32 %v2739, 1.442695
        %v2793 = vpow.pop %v2792
        %v2794 = vmul.f32 %v2740, 1.442695
        %v2795 = vpow.pop %v2794
        %v2796 = vmul.f32 %v2741, 1.442695
        %v2797 = vpow.pop %v2796
        %v2798 = vmul.f32 %v2742, 1.442695
        %v2799 = vpow.pop %v2798
        %v2800 = vmul.f32 %v2743, 1.442695
        %v2801 = vpow.pop %v2800
        %v2802 = vmul.f32 %v2744, 1.442695
        %v2803 = vpow.pop %v2802
        %v2804 = vmul.f32 %v2745, 1.442695
        %v2805 = vpow.pop %v2804
        %v2806 = vmul.f32 %v2746, 1.442695
        %v2807 = vpow.pop %v2806
        %v2808 = vmul.f32 %v2747, 1.442695
        %v2809 = vpow.pop %v2808
        %v2810 = vmul.f32 %v2748, 1.442695
        %v2811 = vpow.pop %v2810
        %v2812 = vmul.f32 %v2749, 1.442695
        %v2813 = vpow.pop %v2812
        %v2814 = vadd.f32 %v2751, 1.0
        %v2815 = vadd.f32 %v2753, 1.0
        %v2816 = vadd.f32 %v2755, 1.0
        %v2817 = vadd.f32 %v2757, 1.0
        %v2818 = vadd.f32 %v2759, 1.0
        %v2819 = vadd.f32 %v2761, 1.0
        %v2820 = vadd.f32 %v2763, 1.0
        %v2821 = vadd.f32 %v2765, 1.0
        %v2822 = vadd.f32 %v2767, 1.0
        %v2823 = vadd.f32 %v2769, 1.0
        %v2824 = vadd.f32 %v2771, 1.0
        %v2825 = vadd.f32 %v2773, 1.0
        %v2826 = vadd.f32 %v2775, 1.0
        %v2827 = vadd.f32 %v2777, 1.0
        %v2828 = vadd.f32 %v2779, 1.0
        %v2829 = vadd.f32 %v2781, 1.0
        %v2830 = vadd.f32 %v2783, 1.0
        %v2831 = vadd.f32 %v2785, 1.0
        %v2832 = vadd.f32 %v2787, 1.0
        %v2833 = vadd.f32 %v2789, 1.0
        %v2834 = vadd.f32 %v2791, 1.0
        %v2835 = vadd.f32 %v2793, 1.0
        %v2836 = vadd.f32 %v2795, 1.0
        %v2837 = vadd.f32 %v2797, 1.0
        %v2838 = vadd.f32 %v2799, 1.0
        %v2839 = vadd.f32 %v2801, 1.0
        %v2840 = vadd.f32 %v2803, 1.0
        %v2841 = vadd.f32 %v2805, 1.0
        %v2842 = vadd.f32 %v2807, 1.0
        %v2843 = vadd.f32 %v2809, 1.0
        %v2844 = vadd.f32 %v2811, 1.0
        %v2845 = vadd.f32 %v2813, 1.0
        %v2846 = vrcp.pop %v2814
        %v2847 = vmul.f32 1.0, %v2846
        %v2848 = vrcp.pop %v2815
        %v2849 = vmul.f32 1.0, %v2848
        %v2850 = vrcp.pop %v2816
        %v2851 = vmul.f32 1.0, %v2850
        %v2852 = vrcp.pop %v2817
        %v2853 = vmul.f32 1.0, %v2852
        %v2854 = vrcp.pop %v2818
        %v2855 = vmul.f32 1.0, %v2854
        %v2856 = vrcp.pop %v2819
        %v2857 = vmul.f32 1.0, %v2856
        %v2858 = vrcp.pop %v2820
        %v2859 = vmul.f32 1.0, %v2858
        %v2860 = vrcp.pop %v2821
        %v2861 = vmul.f32 1.0, %v2860
        %v2862 = vrcp.pop %v2822
        %v2863 = vmul.f32 1.0, %v2862
        %v2864 = vrcp.pop %v2823
        %v2865 = vmul.f32 1.0, %v2864
        %v2866 = vrcp.pop %v2824
        %v2867 = vmul.f32 1.0, %v2866
        %v2868 = vrcp.pop %v2825
        %v2869 = vmul.f32 1.0, %v2868
        %v2870 = vrcp.pop %v2826
        %v2871 = vmul.f32 1.0, %v2870
        %v2872 = vrcp.pop %v2827
        %v2873 = vmul.f32 1.0, %v2872
        %v2874 = vrcp.pop %v2828
        %v2875 = vmul.f32 1.0, %v2874
        %v2876 = vrcp.pop %v2829
        %v2877 = vmul.f32 1.0, %v2876
        %v2878 = vrcp.pop %v2830
        %v2879 = vmul.f32 1.0, %v2878
        %v2880 = vrcp.pop %v2831
        %v2881 = vmul.f32 1.0, %v2880
        %v2882 = vrcp.pop %v2832
        %v2883 = vmul.f32 1.0, %v2882
        %v2884 = vrcp.pop %v2833
        %v2885 = vmul.f32 1.0, %v2884
        %v2886 = vrcp.pop %v2834
        %v2887 = vmul.f32 1.0, %v2886
        %v2888 = vrcp.pop %v2835
        %v2889 = vmul.f32 1.0, %v2888
        %v2890 = vrcp.pop %v2836
        %v2891 = vmul.f32 1.0, %v2890
        %v2892 = vrcp.pop %v2837
        %v2893 = vmul.f32 1.0, %v2892
        %v2894 = vrcp.pop %v2838
        %v2895 = vmul.f32 1.0, %v2894
        %v2896 = vrcp.pop %v2839
        %v2897 = vmul.f32 1.0, %v2896
        %v2898 = vrcp.pop %v2840
        %v2899 = vmul.f32 1.0, %v2898
        %v2900 = vrcp.pop %v2841
        %v2901 = vmul.f32 1.0, %v2900
        %v2902 = vrcp.pop %v2842
        %v2903 = vmul.f32 1.0, %v2902
        %v2904 = vrcp.pop %v2843
        %v2905 = vmul.f32 1.0, %v2904
        %v2906 = vrcp.pop %v2844
        %v2907 = vmul.f32 1.0, %v2906
        %v2908 = vrcp.pop %v2845
        %v2909 = vmul.f32 1.0, %v2908
        %v2910 = vmul.f32 %v2527, %v2847
        %v2911 = vmul.f32 %v2529, %v2849
        %v2912 = vmul.f32 %v2531, %v2851
        %v2913 = vmul.f32 %v2533, %v2853
        %v2914 = vmul.f32 %v2537, %v2855
        %v2915 = vmul.f32 %v2539, %v2857
        %v2916 = vmul.f32 %v2541, %v2859
        %v2917 = vmul.f32 %v2543, %v2861
        %v2918 = vmul.f32 %v2547, %v2863
        %v2919 = vmul.f32 %v2549, %v2865
        %v2920 = vmul.f32 %v2551, %v2867
        %v2921 = vmul.f32 %v2553, %v2869
        %v2922 = vmul.f32 %v2557, %v2871
        %v2923 = vmul.f32 %v2559, %v2873
        %v2924 = vmul.f32 %v2561, %v2875
        %v2925 = vmul.f32 %v2563, %v2877
        %v2926 = vmul.f32 %v2567, %v2879
        %v2927 = vmul.f32 %v2569, %v2881
        %v2928 = vmul.f32 %v2571, %v2883
        %v2929 = vmul.f32 %v2573, %v2885
        %v2930 = vmul.f32 %v2577, %v2887
        %v2931 = vmul.f32 %v2579, %v2889
        %v2932 = vmul.f32 %v2581, %v2891
        %v2933 = vmul.f32 %v2583, %v2893
        %v2934 = vmul.f32 %v2587, %v2895
        %v2935 = vmul.f32 %v2589, %v2897
        %v2936 = vmul.f32 %v2591, %v2899
        %v2937 = vmul.f32 %v2593, %v2901
        %v2938 = vmul.f32 %v2597, %v2903
        %v2939 = vmul.f32 %v2599, %v2905
        %v2940 = vmul.f32 %v2601, %v2907
        %v2941 = vmul.f32 %v2603, %v2909
        %v2942 = vmul.f32 %v2910, %v2640
        %v2943 = vmul.f32 %v2911, %v2642
        %v2944 = vmul.f32 %v2912, %v2644
        %v2945 = vmul.f32 %v2913, %v2646
        %v2946 = vmul.f32 %v2914, %v2650
        %v2947 = vmul.f32 %v2915, %v2652
        %v2948 = vmul.f32 %v2916, %v2654
        %v2949 = vmul.f32 %v2917, %v2656
        %v2950 = vmul.f32 %v2918, %v2660
        %v2951 = vmul.f32 %v2919, %v2662
        %v2952 = vmul.f32 %v2920, %v2664
        %v2953 = vmul.f32 %v2921, %v2666
        %v2954 = vmul.f32 %v2922, %v2670
        %v2955 = vmul.f32 %v2923, %v2672
        %v2956 = vmul.f32 %v2924, %v2674
        %v2957 = vmul.f32 %v2925, %v2676
        %v2958 = vmul.f32 %v2926, %v2680
        %v2959 = vmul.f32 %v2927, %v2682
        %v2960 = vmul.f32 %v2928, %v2684
        %v2961 = vmul.f32 %v2929, %v2686
        %v2962 = vmul.f32 %v2930, %v2690
        %v2963 = vmul.f32 %v2931, %v2692
        %v2964 = vmul.f32 %v2932, %v2694
        %v2965 = vmul.f32 %v2933, %v2696
        %v2966 = vmul.f32 %v2934, %v2700
        %v2967 = vmul.f32 %v2935, %v2702
        %v2968 = vmul.f32 %v2936, %v2704
        %v2969 = vmul.f32 %v2937, %v2706
        %v2970 = vmul.f32 %v2938, %v2710
        %v2971 = vmul.f32 %v2939, %v2712
        %v2972 = vmul.f32 %v2940, %v2714
        %v2973 = vmul.f32 %v2941, %v2716
        %v2974 = vpack.c.bf16 %v2944, %v2942
        %v2975 = vpack.c.bf16 %v2945, %v2943
        %v2976 = vpack.c.bf16 %v2948, %v2946
        %v2977 = vpack.c.bf16 %v2949, %v2947
        %v2978 = vpack.c.bf16 %v2952, %v2950
        %v2979 = vpack.c.bf16 %v2953, %v2951
        %v2980 = vpack.c.bf16 %v2956, %v2954
        %v2981 = vpack.c.bf16 %v2957, %v2955
        %v2982 = vpack.c.bf16 %v2960, %v2958
        %v2983 = vpack.c.bf16 %v2961, %v2959
        %v2984 = vpack.c.bf16 %v2964, %v2962
        %v2985 = vpack.c.bf16 %v2965, %v2963
        %v2986 = vpack.c.bf16 %v2968, %v2966
        %v2987 = vpack.c.bf16 %v2969, %v2967
        %v2988 = vpack.c.bf16 %v2972, %v2970
        %v2989 = vpack.c.bf16 %v2973, %v2971
        %v2990 = vld [vmem:[#allocation19] sm:$0xf]
        %v2991 = vld [vmem:[#allocation19 + $0x4] sm:$0xf]
        %v2992 = vld [vmem:[#allocation19 + $0x8] sm:$0xf]
        %v2993 = vld [vmem:[#allocation19 + $0xc] sm:$0xf]
        %v2994 = vld [vmem:[#allocation19 + $0x10] sm:$0xf]
        %v2995 = vld [vmem:[#allocation19 + $0x14] sm:$0xf]
        %v2996 = vld [vmem:[#allocation19 + $0x18] sm:$0xf]
        %v2997 = vld [vmem:[#allocation19 + $0x1c] sm:$0xf]
        %v2998 = vld [vmem:[#allocation19 + $0x20] sm:$0xf]
        %v2999 = vld [vmem:[#allocation19 + $0x24] sm:$0xf]
        %v3000 = vld [vmem:[#allocation19 + $0x28] sm:$0xf]
        %v3001 = vld [vmem:[#allocation19 + $0x2c] sm:$0xf]
        %v3002 = vld [vmem:[#allocation19 + $0x30] sm:$0xf]
        %v3003 = vld [vmem:[#allocation19 + $0x34] sm:$0xf]
        %v3004 = vld [vmem:[#allocation19 + $0x38] sm:$0xf]
        %v3005 = vld [vmem:[#allocation19 + $0x3c] sm:$0xf]
        %v3006 = vld [vmem:[#allocation19 + $0x40] sm:$0xf]
        %v3007 = vld [vmem:[#allocation19 + $0x44] sm:$0xf]
        %v3008 = vld [vmem:[#allocation19 + $0x48] sm:$0xf]
        %v3009 = vld [vmem:[#allocation19 + $0x4c] sm:$0xf]
        %v3010 = vld [vmem:[#allocation19 + $0x50] sm:$0xf]
        %v3011 = vld [vmem:[#allocation19 + $0x54] sm:$0xf]
        %v3012 = vld [vmem:[#allocation19 + $0x58] sm:$0xf]
        %v3013 = vld [vmem:[#allocation19 + $0x5c] sm:$0xf]
        %v3014 = vld [vmem:[#allocation19 + $0x60] sm:$0xf]
        %v3015 = vld [vmem:[#allocation19 + $0x64] sm:$0xf]
        %v3016 = vld [vmem:[#allocation19 + $0x68] sm:$0xf]
        %v3017 = vld [vmem:[#allocation19 + $0x6c] sm:$0xf]
        %v3018 = vld [vmem:[#allocation19 + $0x70] sm:$0xf]
        %v3019 = vld [vmem:[#allocation19 + $0x74] sm:$0xf]
        %v3020 = vld [vmem:[#allocation19 + $0x78] sm:$0xf]
        %v3021 = vld [vmem:[#allocation19 + $0x7c] sm:$0xf]
        %v3054 = vunpack.c.l.b16 %v2990
        %v3055 = vunpack.c.l.b16 %v2991
        %v3056 = vunpack.c.l.b16 %v2992
        %v3057 = vunpack.c.l.b16 %v2993
        %v3058 = vunpack.c.l.b16 %v2994
        %v3059 = vunpack.c.l.b16 %v2995
        %v3060 = vunpack.c.l.b16 %v2996
        %v3061 = vunpack.c.l.b16 %v2997
        %v3062 = vunpack.c.l.b16 %v2998
        %v3063 = vunpack.c.l.b16 %v2999
        %v3064 = vunpack.c.l.b16 %v3000
        %v3065 = vunpack.c.l.b16 %v3001
        %v3066 = vunpack.c.l.b16 %v3002
        %v3067 = vunpack.c.l.b16 %v3003
        %v3068 = vunpack.c.l.b16 %v3004
        %v3069 = vunpack.c.l.b16 %v3005
        %v3070 = vunpack.c.l.b16 %v3006
        %v3071 = vunpack.c.l.b16 %v3007
        %v3072 = vunpack.c.l.b16 %v3008
        %v3073 = vunpack.c.l.b16 %v3009
        %v3074 = vunpack.c.l.b16 %v3010
        %v3075 = vunpack.c.l.b16 %v3011
        %v3076 = vunpack.c.l.b16 %v3012
        %v3077 = vunpack.c.l.b16 %v3013
        %v3078 = vunpack.c.l.b16 %v3014
        %v3079 = vunpack.c.l.b16 %v3015
        %v3080 = vunpack.c.l.b16 %v3016
        %v3081 = vunpack.c.l.b16 %v3017
        %v3082 = vunpack.c.l.b16 %v3018
        %v3083 = vunpack.c.l.b16 %v3019
        %v3084 = vunpack.c.l.b16 %v3020
        %v3085 = vunpack.c.l.b16 %v3021
        %v3086 = vpack.c.b16 %v3055, %v3054
        %v3087 = vpack.c.b16 %v3057, %v3056
        %v3088 = vpack.c.b16 %v3059, %v3058
        %v3089 = vpack.c.b16 %v3061, %v3060
        %v3090 = vpack.c.b16 %v3063, %v3062
        %v3091 = vpack.c.b16 %v3065, %v3064
        %v3092 = vpack.c.b16 %v3067, %v3066
        %v3093 = vpack.c.b16 %v3069, %v3068
        %v3094 = vpack.c.b16 %v3071, %v3070
        %v3095 = vpack.c.b16 %v3073, %v3072
        %v3096 = vpack.c.b16 %v3075, %v3074
        %v3097 = vpack.c.b16 %v3077, %v3076
        %v3098 = vpack.c.b16 %v3079, %v3078
        %v3099 = vpack.c.b16 %v3081, %v3080
        %v3100 = vpack.c.b16 %v3083, %v3082
        %v3101 = vpack.c.b16 %v3085, %v3084
        %3118 = vmatprep.subr.bf16.mxu0 0
        %3119 = vmatpush1.bf16.msra.mxu0 %v3086
        %3120 = vmatprep.subr.bf16.mxu0 0
        %3121 = vmatpush1.bf16.msra.mxu0 %v3087
        %3122 = vmatprep.subr.bf16.mxu0 0
        %3123 = vmatpush1.bf16.msra.mxu0 %v3088
        %3124 = vmatprep.subr.bf16.mxu0 0
        %3125 = vmatpush1.bf16.msra.mxu0 %v3089
        %3126 = vmatprep.subr.bf16.mxu0 0
        %3127 = vmatpush1.bf16.msra.mxu0 %v3090
        %3128 = vmatprep.subr.bf16.mxu0 0
        %3129 = vmatpush1.bf16.msra.mxu0 %v3091
        %3130 = vmatprep.subr.bf16.mxu0 0
        %3131 = vmatpush1.bf16.msra.mxu0 %v3092
        %3132 = vmatprep.subr.bf16.mxu0 0
        %3133 = vmatpush1.bf16.msra.mxu0 %v3093
        %3134 = vmatprep.subr.bf16.mxu0 0
        %3135 = vmatpush1.bf16.msra.mxu0 %v3094
        %3136 = vmatprep.subr.bf16.mxu0 0
        %3137 = vmatpush1.bf16.msra.mxu0 %v3095
        %3138 = vmatprep.subr.bf16.mxu0 0
        %3139 = vmatpush1.bf16.msra.mxu0 %v3096
        %3140 = vmatprep.subr.bf16.mxu0 0
        %3141 = vmatpush1.bf16.msra.mxu0 %v3097
        %3142 = vmatprep.subr.bf16.mxu0 0
        %3143 = vmatpush1.bf16.msra.mxu0 %v3098
        %3144 = vmatprep.subr.bf16.mxu0 0
        %3145 = vmatpush1.bf16.msra.mxu0 %v3099
        %3146 = vmatprep.subr.bf16.mxu0 0
        %3147 = vmatpush1.bf16.msra.mxu0 %v3100
        %3148 = vmatprep.subr.bf16.mxu0 0
        %3149 = vmatpush1.bf16.msra.mxu0 %v3101
        %3150 = vmatprep.mubr.bf16.mxu0 %v2975
        %3151 = vmatmul.mubr.bf16.gmra.mrb[0].mxu0 %v2974
        %v3152 = vpop.f32.mrb[0].mxu0
        %v3153 = vadd.f32 0.0, %v3152
        %v3154 = vpop.f32.mrb[0].mxu0
        %v3155 = vpop.f32.mrb[0].mxu0
        %v3156 = vadd.f32 0.0, %v3155
        %v3157 = vpop.f32.mrb[0].mxu0
        %3158 = vmatprep.mubr.bf16.mxu0 %v2977
        %3159 = vmatmul.mubr.bf16.gmra.mrb[0].mxu0 %v2976
        %v3160 = vpop.f32.mrb[0].mxu0
        %v3161 = vadd.f32 0.0, %v3160
        %v3162 = vpop.f32.mrb[0].mxu0
        %v3163 = vpop.f32.mrb[0].mxu0
        %v3164 = vadd.f32 0.0, %v3163
        %v3165 = vpop.f32.mrb[0].mxu0
        %3166 = vmatprep.mubr.bf16.mxu0 %v2979
        %3167 = vmatmul.mubr.bf16.gmra.mrb[0].mxu0 %v2978
        %v3168 = vpop.f32.mrb[0].mxu0
        %v3169 = vadd.f32 0.0, %v3168
        %v3170 = vpop.f32.mrb[0].mxu0
        %v3171 = vpop.f32.mrb[0].mxu0
        %v3172 = vadd.f32 0.0, %v3171
        %v3173 = vpop.f32.mrb[0].mxu0
        %3174 = vmatprep.mubr.bf16.mxu0 %v2981
        %3175 = vmatmul.mubr.bf16.gmra.mrb[0].mxu0 %v2980
        %v3176 = vpop.f32.mrb[0].mxu0
        %v3177 = vadd.f32 0.0, %v3176
        %v3178 = vpop.f32.mrb[0].mxu0
        %v3179 = vpop.f32.mrb[0].mxu0
        %v3180 = vadd.f32 0.0, %v3179
        %v3181 = vpop.f32.mrb[0].mxu0
        %3182 = vmatprep.mubr.bf16.mxu0 %v2983
        %3183 = vmatmul.mubr.bf16.gmra.mrb[0].mxu0 %v2982
        %v3184 = vpop.f32.mrb[0].mxu0
        %v3185 = vadd.f32 0.0, %v3184
        %v3186 = vpop.f32.mrb[0].mxu0
        %v3187 = vpop.f32.mrb[0].mxu0
        %v3188 = vadd.f32 0.0, %v3187
        %v3189 = vpop.f32.mrb[0].mxu0
        %3190 = vmatprep.mubr.bf16.mxu0 %v2985
        %3191 = vmatmul.mubr.bf16.gmra.mrb[0].mxu0 %v2984
        %v3192 = vpop.f32.mrb[0].mxu0
        %v3193 = vadd.f32 0.0, %v3192
        %v3194 = vpop.f32.mrb[0].mxu0
        %v3195 = vpop.f32.mrb[0].mxu0
        %v3196 = vadd.f32 0.0, %v3195
        %v3197 = vpop.f32.mrb[0].mxu0
        %3198 = vmatprep.mubr.bf16.mxu0 %v2987
        %3199 = vmatmul.mubr.bf16.gmra.mrb[0].mxu0 %v2986
        %v3200 = vpop.f32.mrb[0].mxu0
        %v3201 = vadd.f32 0.0, %v3200
        %v3202 = vpop.f32.mrb[0].mxu0
        %v3203 = vpop.f32.mrb[0].mxu0
        %v3204 = vadd.f32 0.0, %v3203
        %v3205 = vpop.f32.mrb[0].mxu0
        %3206 = vmatprep.mubr.bf16.mxu0 %v2989
        %3207 = vmatmul.mubr.bf16.gmra.mrb[0].mxu0 %v2988
        %v3208 = vpop.f32.mrb[0].mxu0
        %v3209 = vadd.f32 0.0, %v3208
        %v3210 = vpop.f32.mrb[0].mxu0
        %v3211 = vpop.f32.mrb[0].mxu0
        %v3212 = vadd.f32 0.0, %v3211
        %v3213 = vpop.f32.mrb[0].mxu0
        %3214 = vdwg.mxu0
        %v3215 = vadd.f32 %v2141, %v3153
        %v3216 = vadd.f32 %v2142, %v3156
        %v3217 = vadd.f32 %v2143, %v3161
        %v3218 = vadd.f32 %v2144, %v3164
        %v3219 = vadd.f32 %v2145, %v3169
        %v3220 = vadd.f32 %v2146, %v3172
        %v3221 = vadd.f32 %v2147, %v3177
        %v3222 = vadd.f32 %v2148, %v3180
        %v3223 = vadd.f32 %v2149, %v3185
        %v3224 = vadd.f32 %v2150, %v3188
        %v3225 = vadd.f32 %v2151, %v3193
        %v3226 = vadd.f32 %v2152, %v3196
        %v3227 = vadd.f32 %v2153, %v3201
        %v3228 = vadd.f32 %v2154, %v3204
        %v3229 = vadd.f32 %v2155, %v3209
        %v3230 = vadd.f32 %v2156, %v3212
        %3231 = vst [vmem:[%s541] sm:$0xff] %v3215
        %3232 = vst [vmem:[%s541 + $0x8] sm:$0xff] %v3216
        %3233 = vst [vmem:[%s541 + $0x10] sm:$0xff] %v3217
        %3234 = vst [vmem:[%s541 + $0x18] sm:$0xff] %v3218
        %3235 = vst [vmem:[%s541 + $0x20] sm:$0xff] %v3219
        %3236 = vst [vmem:[%s541 + $0x28] sm:$0xff] %v3220
        %3237 = vst [vmem:[%s541 + $0x30] sm:$0xff] %v3221
        %3238 = vst [vmem:[%s541 + $0x38] sm:$0xff] %v3222
        %3239 = vst [vmem:[%s541 + $0x40] sm:$0xff] %v3223
        %3240 = vst [vmem:[%s541 + $0x48] sm:$0xff] %v3224
        %3241 = vst [vmem:[%s541 + $0x50] sm:$0xff] %v3225
        %3242 = vst [vmem:[%s541 + $0x58] sm:$0xff] %v3226
        %3243 = vst [vmem:[%s541 + $0x60] sm:$0xff] %v3227
        %3244 = vst [vmem:[%s541 + $0x68] sm:$0xff] %v3228
        %3245 = vst [vmem:[%s541 + $0x70] sm:$0xff] %v3229
        %3246 = vst [vmem:[%s541 + $0x78] sm:$0xff] %v3230
        %s3247 = sand.u32 %s277, 1
        %s3248 = scalar_lea.sflag [#allocation4], %s3247
        %s3249 = sand.u32 %s277, 1
        %s3250 = smul.addr %s3249, 128
        %s3251 = scalar_lea.vmem [#allocation20], %s3250
        // Predicated region
        $region109: #{transformer_block.1} parent=63 // pred_check
          %p3252 = pneg %p287
        $region110: #{transformer_block.1} parent=63 // pred_check_branch
          %3254 = sbr.rel (%p3252) target = $region112
        $region111: #{transformer_block.1} parent=63 // pred_region
          %s3256 = ssub.s32 2048, 2048
          %3257 = vsyncadd %s3248, %s3256
          %s3258 = smul.addr %s33, 16
          %s3259 = smul.addr %s3258, 128
          %s3260 = scalar_lea.hbm %s11, %s3259
          %s3261 = sshll.u32 %s3251, 4
          %s3262 = int_to_ptr.vmem [resolvable:$true] %s3261
          %3267 = dma.vmem_to_hbm [thread:$0]  %s3262, 2048, %s3260, %s3248, 128, 128, 8
        $region112: #{transformer_block.1} parent=63 // pred_fallthru
          _
      $region64: #{transformer_block.1} parent=5 // pred_fallthru
        _
      %p3268 = scmp.le.s32.totalorder 2, %s28
      // Predicated region
      $region113: #{transformer_block.1} parent=5 // pred_check
        %p3269 = pneg %p3268
      $region114: #{transformer_block.1} parent=5 // pred_check_branch
        %3271 = sbr.rel (%p3269) target = $region116
      $region115: #{transformer_block.1} parent=5 // pred_region
        %s3272 = ssub.s32 %s28, 2
        // Predicated region
        $region117: #{transformer_block.1} parent=115 // pred_check
          %p3273 = pneg %p293
        $region118: #{transformer_block.1} parent=115 // pred_check_branch
          %3275 = sbr.rel (%p3273) target = $region120
        $region119: #{transformer_block.1} parent=115 // pred_region
          %s3276 = sand.u32 %s278, 1
          %s3277 = scalar_lea.sflag [#allocation4], %s3276
          %s3278 = sand.u32 %s278, 1
          %s3279 = smul.addr %s3278, 128
          %s3280 = scalar_lea.vmem [#allocation20], %s3279
          %3281 = dma.done %s3277, 2048
        $region120: #{transformer_block.1} parent=115 // pred_fallthru
          _
      $region116: #{transformer_block.1} parent=5 // pred_fallthru
        _
    $region6: #{transformer_block.1} parent=1 // loop_footer
      %s32 = sadd.s32 1, %s28
    $region7: #{transformer_block.1} parent=1 // loop_footer_branch
      %27 = sbr.rel target = $region3
    $region8: #{transformer_block.1} parent=1 // loop_exit
      _
    %3282 = vsyncpa [#allocation3], 1
    %s3283 = scalar_lea.sflag [#allocation3], 1
    %3284 = vsyncpa %s3283, 1
    %3285 = vsyncpa [#allocation6], 1
    %3286 = vsyncpa [#allocation9], 1
    %3287 = vsyncpa [#allocation12], 1
    %3288 = vsyncpa [#allocation15], 1
    %3289 = vsyncpa [#allocation18], 1
    %3290 = vsyncpa [#allocation4], 1
    %s3291 = scalar_lea.sflag [#allocation4], 1
    %3292 = vsyncpa %s3291, 1

</llo_original>
